<compile_context>
chip_gen: v5e
topology: v5e:2x2
jax: 0.10.0
libtpu: 0.0.40
codegen_flags: <defaults>
</compile_context>

<pallas_src>
import functools
import math

import numpy as np
import jax
import jax.numpy as jnp
from jax.experimental import pallas as pl
from jax.experimental.pallas import tpu as pltpu

LANE = 128            # TPU lane width (last dim)
SUB = 8               # TPU sublane width (second-to-last dim)


def _vmem_limit_bytes():
    """Derive the scoped-VMEM limit from the hardware (fallback: 48 MiB)."""
    cap = 64 * 1024 * 1024
    try:
        info = pltpu.get_tpu_info()
        cap = int(getattr(info, "vmem_capacity_bytes", cap))
    except Exception:
        pass
    return int(min(cap * 3 // 4, 100 * 1024 * 1024))


_VMEM_LIMIT = _vmem_limit_bytes()
# Bigger node tiles on 128 MiB parts (v5e/v6e), smaller on 64 MiB v7x.
NODE_TILE = 512 if _VMEM_LIMIT >= (64 << 20) else 256


def _ceil_to(n, m):
    return ((n + m - 1) // m) * m


def _pad2d(a, rows, cols, dtype=jnp.float32):
    a = jnp.asarray(a, dtype)
    out = jnp.zeros((rows, cols), dtype)
    return out.at[: a.shape[0], : a.shape[1]].set(a)


def _node_padding(num_nodes):
    """Padded node count and node tile size (np_ is a multiple of tm)."""
    np_ = _ceil_to(max(num_nodes, SUB), LANE)
    if np_ <= NODE_TILE:
        return np_, np_
    return _ceil_to(num_nodes, NODE_TILE), NODE_TILE


# ----------------------------------------------------------------------------
# Block-skip tables for the block-diagonal batched adjacency (host-side numpy)
# ----------------------------------------------------------------------------
def build_block_skip_tables(batch, num_nodes, tm, np_pad):
    """Per node-row tile, the contiguous range of adjacency K-tiles that can be
    nonzero (batch must be sorted / graphs contiguous, as in PyG batching).

    Returns (kidx_flat[nt*max_kt], kcnt[nt], max_kt):
      * kidx_flat[i*max_kt + kk] = K-tile index to fetch at grid step (i, kk)
        (clamped so repeats cost no extra DMA),
      * kcnt[i] = number of valid K-tiles for node-row tile i.
    """
    batch = np.asarray(batch)
    assert np.all(np.diff(batch) >= 0), "batch vector must be sorted"
    nt = np_pad // tm
    klo = np.zeros((nt,), np.int32)
    kcnt = np.zeros((nt,), np.int32)
    for i in range(nt):
        r0 = i * tm
        r1 = min((i + 1) * tm, num_nodes)
        if r0 >= num_nodes:
            continue                       # padding-only tile: skip everything
        g_lo = batch[r0]
        g_hi = batch[r1 - 1]
        c0 = int(np.searchsorted(batch, g_lo, side="left"))
        c1 = int(np.searchsorted(batch, g_hi, side="right"))
        klo[i] = c0 // tm
        kcnt[i] = (c1 - 1) // tm - klo[i] + 1
    max_kt = max(1, int(kcnt.max()))
    kidx = np.zeros((nt, max_kt), np.int32)
    for i in range(nt):
        if kcnt[i] > 0:
            for kk in range(max_kt):
                kidx[i, kk] = klo[i] + min(kk, int(kcnt[i]) - 1)
    return (jnp.asarray(kidx.reshape(-1), jnp.int32),
            jnp.asarray(kcnt, jnp.int32), max_kt)


# ----------------------------------------------------------------------------
# Fused GIN layer kernel: block-skipped aggregation -> MLP -> ReLU (bf16 out)
# ----------------------------------------------------------------------------
def _gin_layer_kernel(kidx_ref, kcnt_ref, adj_ref, h_ref, w1_ref, b1_ref,
                      w2_ref, b2_ref, hout_ref, acc_ref, *, mxu_dtype):
    """Grid (node_tile i, adj K-tile kk).  Self-loop is folded into adj.

    acc  += adj[i, kidx[i,kk]] @ h[kidx[i,kk]]      (only while kk < kcnt[i])
    hout  = relu(relu(acc @ w1 + b1) @ w2 + b2)     (on the last kk, bf16 out)
    """
    i = pl.program_id(0)
    kk = pl.program_id(1)

    @pl.when(kk == 0)
    def _init():
        acc_ref[...] = jnp.zeros_like(acc_ref)

    @pl.when(kk < kcnt_ref[i])              # skip MXU work on all-zero blocks
    def _accum():
        acc_ref[...] += jnp.dot(adj_ref[...], h_ref[...],
                                preferred_element_type=jnp.float32)

    @pl.when(kk == pl.num_programs(1) - 1)
    def _finish():
        agg = acc_ref[...]
        h1 = jnp.maximum(
            jnp.dot(agg.astype(mxu_dtype), w1_ref[...],
                    preferred_element_type=jnp.float32) + b1_ref[...], 0.0)
        h2 = jnp.maximum(
            jnp.dot(h1.astype(mxu_dtype), w2_ref[...],
                    preferred_element_type=jnp.float32) + b2_ref[...], 0.0)
        hout_ref[...] = h2.astype(hout_ref.dtype)


def gin_layer(adj, h, kidx, kcnt, max_kt, w1, b1, w2, b2, *, tm, mxu_dtype):
    np_ = adj.shape[0]
    fin = h.shape[1]
    hp = w1.shape[1]
    nt = np_ // tm
    kernel = functools.partial(_gin_layer_kernel, mxu_dtype=mxu_dtype)

    def adj_map(i, kk, kidx_ref, kcnt_ref):
        return (i, kidx_ref[i * max_kt + kk])

    def h_map(i, kk, kidx_ref, kcnt_ref):
        return (kidx_ref[i * max_kt + kk], 0)

    def const_map(i, kk, kidx_ref, kcnt_ref):
        return (0, 0)

    def out_map(i, kk, kidx_ref, kcnt_ref):
        return (i, 0)

    return pl.pallas_call(
        kernel,
        out_shape=jax.ShapeDtypeStruct((np_, hp), mxu_dtype),   # bf16 node feats
        grid_spec=pltpu.PrefetchScalarGridSpec(
            num_scalar_prefetch=2,
            grid=(nt, max_kt),
            in_specs=[
                pl.BlockSpec((tm, tm), adj_map),     # adjacency block (bf16)
                pl.BlockSpec((tm, fin), h_map),      # node-feature K block (bf16)
                pl.BlockSpec((fin, hp), const_map),  # weights stay resident
                pl.BlockSpec((1, hp), const_map),
                pl.BlockSpec((hp, hp), const_map),
                pl.BlockSpec((1, hp), const_map),
            ],
            out_specs=pl.BlockSpec((tm, hp), out_map),
            scratch_shapes=[pltpu.VMEM((tm, fin), jnp.float32)]),
        compiler_params=pltpu.CompilerParams(
            # node tiles are independent -> "parallel" (v7x megacore);
            # the adjacency contraction is the reduction -> "arbitrary" (last).
            dimension_semantics=("parallel", "arbitrary"),
            vmem_limit_bytes=_VMEM_LIMIT),
    )(kidx, kcnt, adj, h, w1, b1, w2, b2)


# ----------------------------------------------------------------------------
# FF block on per-layer slabs (no in-VMEM concat): x@W = sum_l x_l @ W_slot_l
# ----------------------------------------------------------------------------
def _ff_block_partial(x_parts, w1_ref, b1_ref, w2_ref, b2_ref, w3_ref, b3_ref,
                      ws_ref, bs_ref, *, hp, mxu_dtype):
    acc1 = None
    accs = None
    for l, xl in enumerate(x_parts):
        p1 = jnp.dot(xl, w1_ref[l * hp:(l + 1) * hp, :],
                     preferred_element_type=jnp.float32)
        ps = jnp.dot(xl, ws_ref[l * hp:(l + 1) * hp, :],
                     preferred_element_type=jnp.float32)
        acc1 = p1 if acc1 is None else acc1 + p1
        accs = ps if accs is None else accs + ps
    h = jnp.maximum(acc1 + b1_ref[...], 0.0)
    h = jnp.maximum(jnp.dot(h.astype(mxu_dtype), w2_ref[...],
                            preferred_element_type=jnp.float32) + b2_ref[...],
                    0.0)
    h = jnp.maximum(jnp.dot(h.astype(mxu_dtype), w3_ref[...],
                            preferred_element_type=jnp.float32) + b3_ref[...],
                    0.0)
    return h + accs + bs_ref[...]


# ----------------------------------------------------------------------------
# Fused local FF head (3x Linear+ReLU + shortcut), tiled over node rows
# ----------------------------------------------------------------------------
def _ff_local_kernel(*refs, num_layers, hp, mxu_dtype):
    h_refs = refs[:num_layers]
    (w1, b1, w2, b2, w3, b3, ws, bs, out_ref) = refs[num_layers:]
    x_parts = [r[...] for r in h_refs]                    # bf16 per-layer slabs
    out_ref[...] = _ff_block_partial(x_parts, w1, b1, w2, b2, w3, b3, ws, bs,
                                     hp=hp, mxu_dtype=mxu_dtype)


def ff_local(h_list, ffp, *, tm, mxu_dtype):
    np_, hp = h_list[0].shape
    num_layers = len(h_list)
    cp, ep = ffp["w1"].shape
    nt = np_ // tm
    kernel = functools.partial(_ff_local_kernel, num_layers=num_layers, hp=hp,
                               mxu_dtype=mxu_dtype)
    tile_spec = pl.BlockSpec((tm, hp), lambda i: (i, 0))
    const = lambda shape: pl.BlockSpec(shape, lambda i: (0, 0))
    in_specs = ([tile_spec] * num_layers +
                [const((cp, ep)), const((1, ep)),
                 const((ep, ep)), const((1, ep)),
                 const((ep, ep)), const((1, ep)),
                 const((cp, ep)), const((1, ep))])
    return pl.pallas_call(
        kernel,
        out_shape=jax.ShapeDtypeStruct((np_, ep), jnp.float32),
        grid=(nt,),
        in_specs=in_specs,
        out_specs=pl.BlockSpec((tm, ep), lambda i: (i, 0)),
        compiler_params=pltpu.CompilerParams(
            dimension_semantics=("parallel",),   # node tiles are independent
            vmem_limit_bytes=_VMEM_LIMIT),
    )(*h_list, ffp["w1"], ffp["b1"], ffp["w2"], ffp["b2"],
      ffp["w3"], ffp["b3"], ffp["ws"], ffp["bs"])


# ----------------------------------------------------------------------------
# Fused global head: global_add_pool (node-reduction grid axis) + global FF
# + cluster Linear + student-t soft assignment q (exact f32 divides)
# ----------------------------------------------------------------------------
def _global_head_kernel(*refs, num_layers, hp, mxu_dtype, alpha, num_clusters):
    pool_ref = refs[0]
    h_refs = refs[1:1 + num_layers]
    (w1, b1, w2, b2, w3, b3, ws, bs,
     cw, cb, ct, csq, g_ref, z_ref, q_ref, y_acc) = refs[1 + num_layers:]
    i = pl.program_id(0)

    @pl.when(i == 0)
    def _init():
        y_acc[...] = jnp.zeros_like(y_acc)

    # global_add_pool, accumulated over node tiles in slot-row layout
    p = pool_ref[...]
    for l in range(num_layers):
        cur = y_acc[:, l * hp:(l + 1) * hp]
        y_acc[:, l * hp:(l + 1) * hp] = cur + jnp.dot(
            p, h_refs[l][...], preferred_element_type=jnp.float32)

    @pl.when(i == pl.num_programs(0) - 1)
    def _finish():
        y = y_acc[...]
        y_parts = [y[:, l * hp:(l + 1) * hp].astype(mxu_dtype)
                   for l in range(num_layers)]

        # global_d FF head
        g_ref[...] = _ff_block_partial(y_parts, w1, b1, w2, b2, w3, b3, ws, bs,
                                       hp=hp, mxu_dtype=mxu_dtype)

        # cluster embedding z = y @ Wc + bc (per-layer partial matmuls)
        z = None
        for l in range(num_layers):
            pz = jnp.dot(y_parts[l], cw[l * hp:(l + 1) * hp, :],
                         preferred_element_type=jnp.float32)
            z = pz if z is None else z + pz
        z = z + cb[...]
        z_ref[...] = z

        # student-t soft assignment, f32 throughout:
        #   d[g,k] = ||z_g - c_k||^2 = ||z||^2 + ||c||^2 - 2 z.c  (clamped >= 0;
        #   near z ~= c the absolute error in q is O(eps), which is benign)
        cross = jnp.dot(z, ct[...], preferred_element_type=jnp.float32)
        z_sq = jnp.sum(z * z, axis=1, keepdims=True)
        d = jnp.maximum(z_sq + csq[...] - 2.0 * cross, 0.0)
        q = 1.0 / (1.0 + d * (1.0 / alpha))          # exact f32 divide (tiny op)
        exponent = (alpha + 1.0) / 2.0
        if exponent != 1.0:                          # statically skipped, alpha=1
            q = q ** exponent
        col = jax.lax.broadcasted_iota(jnp.int32, q.shape, 1)
        q = jnp.where(col < num_clusters, q, 0.0)    # mask padded cluster cols
        q_ref[...] = q / jnp.sum(q, axis=1, keepdims=True)   # exact row-norm


def global_head(h_list, pool, ffp, clp, *, tm, alpha, num_clusters, mxu_dtype):
    np_, hp = h_list[0].shape
    num_layers = len(h_list)
    gp = pool.shape[0]
    cp, ep = ffp["w1"].shape
    kp = clp["cw"].shape[1]
    nt = np_ // tm
    kernel = functools.partial(_global_head_kernel, num_layers=num_layers,
                               hp=hp, mxu_dtype=mxu_dtype, alpha=alpha,
                               num_clusters=num_clusters)
    tile_h = pl.BlockSpec((tm, hp), lambda i: (i, 0))
    const = lambda shape: pl.BlockSpec(shape, lambda i: (0, 0))
    in_specs = ([pl.BlockSpec((gp, tm), lambda i: (0, i))] +   # pool column tile
                [tile_h] * num_layers +
                [const((cp, ep)), const((1, ep)),
                 const((ep, ep)), const((1, ep)),
                 const((ep, ep)), const((1, ep)),
                 const((cp, ep)), const((1, ep)),
                 const((cp, kp)), const((1, kp)),
                 const((kp, kp)), const((1, kp))])
    return pl.pallas_call(
        kernel,
        out_shape=(jax.ShapeDtypeStruct((gp, ep), jnp.float32),   # g_enc
                   jax.ShapeDtypeStruct((gp, kp), jnp.float32),   # z
                   jax.ShapeDtypeStruct((gp, kp), jnp.float32)),  # q
        grid=(nt,),
        in_specs=in_specs,
        out_specs=(const((gp, ep)), const((gp, kp)), const((gp, kp))),
        scratch_shapes=[pltpu.VMEM((gp, cp), jnp.float32)],       # pooled y acc
        compiler_params=pltpu.CompilerParams(
            dimension_semantics=("arbitrary",),   # node axis is a reduction here
            vmem_limit_bytes=_VMEM_LIMIT),
    )(pool, *h_list, ffp["w1"], ffp["b1"], ffp["w2"], ffp["b2"],
      ffp["w3"], ffp["b3"], ffp["ws"], ffp["bs"],
      clp["cw"], clp["cb"], clp["ct"], clp["csq"])


# ----------------------------------------------------------------------------
# Parameters (Xavier uniform, zero biases, as in init_emb) and their packing
# ----------------------------------------------------------------------------
def xavier_uniform(key, fan_in, fan_out):
    limit = math.sqrt(6.0 / (fan_in + fan_out))
    return jax.random.uniform(key, (fan_in, fan_out), jnp.float32, -limit, limit)


def make_params(key, num_features, hidden_dim, num_gc_layers, cluster_emb):
    embedding_dim = hidden_dim * num_gc_layers
    keys = iter(jax.random.split(key, 64))
    params = {}

    gin = []
    in_dim = num_features
    for _ in range(num_gc_layers):
        w1 = xavier_uniform(next(keys), in_dim, hidden_dim)
        b1 = jnp.zeros((hidden_dim,), jnp.float32)
        w2 = xavier_uniform(next(keys), hidden_dim, hidden_dim)
        b2 = jnp.zeros((hidden_dim,), jnp.float32)
        gin.append((w1, b1, w2, b2))
        in_dim = hidden_dim
    params["gin"] = gin

    def ff_params():
        p = {}
        for name in ("w1", "w2", "w3", "ws"):
            p[name] = xavier_uniform(next(keys), embedding_dim, embedding_dim)
        for name in ("b1", "b2", "b3", "bs"):
            p[name] = jnp.zeros((embedding_dim,), jnp.float32)
        return p

    params["global_d"] = ff_params()
    params["local_d"] = ff_params()
    params["cluster_w"] = xavier_uniform(next(keys), embedding_dim, cluster_emb)
    params["cluster_b"] = jnp.zeros((cluster_emb,), jnp.float32)
    params["cluster_layer"] = xavier_uniform(next(keys), cluster_emb, cluster_emb)
    return params


def _slot_rows(w, hidden, hid_pad, num_layers, out_cols):
    """Embed a [num_layers*hidden, out_dim] weight into the padded per-layer
    slot-row layout [num_layers*hid_pad, out_cols] (zeros elsewhere), so the
    concatenated-feature matmul can be done as per-layer partial matmuls."""
    w = jnp.asarray(w, jnp.float32)
    out_dim = w.shape[1]
    wp = jnp.zeros((num_layers * hid_pad, out_cols), jnp.float32)
    for l in range(num_layers):
        wp = wp.at[l * hid_pad:l * hid_pad + hidden, :out_dim].set(
            w[l * hidden:(l + 1) * hidden, :])
    return wp


def pack_params(params, num_features, hidden_dim, num_gc_layers, cluster_emb,
                mxu_dtype=jnp.bfloat16):
    """One-time (outside jit) padding / layout / dtype prep of the parameters.
    Padded weight rows / bias columns are zero, which (together with zero
    padded adjacency / pool columns) keeps all padding mathematically inert."""
    fp = _ceil_to(num_features, LANE)
    hp = _ceil_to(hidden_dim, LANE)
    emb = hidden_dim * num_gc_layers
    ep = _ceil_to(emb, LANE)
    kp = _ceil_to(cluster_emb, LANE)
    cp = num_gc_layers * hp

    dims = dict(F=num_features, Fp=fp, hidden=hidden_dim, Hp=hp,
                L=num_gc_layers, emb=emb, Ep=ep, K=cluster_emb, Kp=kp, Cp=cp)

    packed = {}
    gin = []
    in_pad = fp
    for (w1, b1, w2, b2) in params["gin"]:
        gin.append((
            _pad2d(w1, in_pad, hp).astype(mxu_dtype),
            _pad2d(b1.reshape(1, -1), 1, hp),
            _pad2d(w2, hp, hp).astype(mxu_dtype),
            _pad2d(b2.reshape(1, -1), 1, hp),
        ))
        in_pad = hp
    packed["gin"] = gin

    def pack_ff(p):
        return dict(
            w1=_slot_rows(p["w1"], hidden_dim, hp, num_gc_layers, ep).astype(mxu_dtype),
            b1=_pad2d(p["b1"].reshape(1, -1), 1, ep),
            w2=_pad2d(p["w2"], ep, ep).astype(mxu_dtype),
            b2=_pad2d(p["b2"].reshape(1, -1), 1, ep),
            w3=_pad2d(p["w3"], ep, ep).astype(mxu_dtype),
            b3=_pad2d(p["b3"].reshape(1, -1), 1, ep),
            ws=_slot_rows(p["ws"], hidden_dim, hp, num_gc_layers, ep).astype(mxu_dtype),
            bs=_pad2d(p["bs"].reshape(1, -1), 1, ep),
        )

    packed["global_d"] = pack_ff(params["global_d"])
    packed["local_d"] = pack_ff(params["local_d"])

    c = jnp.asarray(params["cluster_layer"], jnp.float32)
    packed["cluster"] = dict(
        cw=_slot_rows(params["cluster_w"], hidden_dim, hp,
                      num_gc_layers, kp).astype(mxu_dtype),
        cb=_pad2d(params["cluster_b"].reshape(1, -1), 1, kp),
        ct=_pad2d(c.T, kp, kp),                                  # f32 precision
        csq=_pad2d(jnp.sum(c * c, axis=1).reshape(1, -1), 1, kp),
    )
    return packed, dims


# ----------------------------------------------------------------------------
# InfoGraph forward
# ----------------------------------------------------------------------------
def infograph_forward(x, adj, pool, kidx, kcnt, packed, *, dims, max_kt,
                      alpha=1.0, mxu_dtype=jnp.bfloat16):
    """InfoGraph.forward: returns (z, q, g_enc, l_enc).

    x    [num_nodes, num_features]
    adj  [num_nodes, num_nodes]    dense adjacency (from edge_index)
    pool [num_graphs, num_nodes]   one-hot sum-pooling matrix (from batch)
    kidx, kcnt                     block-skip tables from build_block_skip_tables
    """
    num_nodes = x.shape[0]
    num_graphs = pool.shape[0]
    np_, tm, gp = dims["Np"], dims["Tm"], dims["Gp"]

    # Fold the GIN self-loop (eps=0) into the adjacency: adj + I is still an
    # exact 0/1/2 matrix, so the bf16 cast is lossless.
    adj_sl = adj + jnp.eye(num_nodes, dtype=adj.dtype)
    adj_pad = _pad2d(adj_sl, np_, np_, mxu_dtype)
    pool_pad = _pad2d(pool, gp, np_, mxu_dtype)
    # h is carried in bf16 across layers: every consumer (adj@h, pool@h, FF
    # matmuls) casts to bf16 anyway, so this loses nothing and halves its DMA.
    h = _pad2d(x, np_, dims["Fp"], mxu_dtype)

    # ---- Encoder: one fused, block-skipped pallas_call per GIN layer --------
    h_list = []
    for (w1, b1, w2, b2) in packed["gin"]:
        h = gin_layer(adj_pad, h, kidx, kcnt, max_kt, w1, b1, w2, b2,
                      tm=tm, mxu_dtype=mxu_dtype)
        h_list.append(h)

    # ---- local FF head + (pool -> global FF -> cluster -> q) head -----------
    l_enc_pad = ff_local(h_list, packed["local_d"], tm=tm, mxu_dtype=mxu_dtype)
    g_enc_pad, z_pad, q_pad = global_head(
        h_list, pool_pad, packed["global_d"], packed["cluster"],
        tm=tm, alpha=alpha, num_clusters=dims["K"], mxu_dtype=mxu_dtype)

    emb, k = dims["emb"], dims["K"]
    return (z_pad[:num_graphs, :k], q_pad[:num_graphs, :k],
            g_enc_pad[:num_graphs, :emb], l_enc_pad[:num_nodes, :emb])


# ----------------------------------------------------------------------------
# Pure-JAX reference (same module semantics, matching bf16 MXU operands)
# ----------------------------------------------------------------------------
def reference_forward(x, adj, pool, params, alpha=1.0, mxu_dtype=jnp.bfloat16):
    def mm(a, b):
        return jnp.dot(a.astype(mxu_dtype), b.astype(mxu_dtype),
                       preferred_element_type=jnp.float32)

    h = jnp.asarray(x, jnp.float32)
    hs, ys = [], []
    for (w1, b1, w2, b2) in params["gin"]:
        agg = mm(adj, h) + h
        h1 = jnp.maximum(mm(agg, w1) + b1[None, :], 0.0)
        h = jnp.maximum(mm(h1, w2) + b2[None, :], 0.0)
        hs.append(h)
        ys.append(mm(pool, h))
    m = jnp.concatenate(hs, axis=1)
    y = jnp.concatenate(ys, axis=1)

    def ff(inp, p):
        hh = jnp.maximum(mm(inp, p["w1"]) + p["b1"][None, :], 0.0)
        hh = jnp.maximum(mm(hh, p["w2"]) + p["b2"][None, :], 0.0)
        hh = jnp.maximum(mm(hh, p["w3"]) + p["b3"][None, :], 0.0)
        return hh + mm(inp, p["ws"]) + p["bs"][None, :]

    g_enc = ff(y, params["global_d"])
    l_enc = ff(m, params["local_d"])
    z = mm(y, params["cluster_w"]) + params["cluster_b"][None, :]
    c = jnp.asarray(params["cluster_layer"], jnp.float32)
    d = jnp.sum((z[:, None, :] - c[None, :, :]) ** 2, axis=2)
    q = 1.0 / (1.0 + d / alpha)
    q = q ** ((alpha + 1.0) / 2.0)
    q = q / jnp.sum(q, axis=1, keepdims=True)
    return z, q, g_enc, l_enc


# ----------------------------------------------------------------------------
# Main
# ----------------------------------------------------------------------------
if __name__ == "__main__":
    # Small config
    num_features = 4
    hidden_dim = 16
    num_gc_layers = 2
    cluster_emb = 8
    num_graphs = 2
    nodes_per_graph = 8
    num_nodes = num_graphs * nodes_per_graph

    key = jax.random.PRNGKey(0)
    k_x, k_params = jax.random.split(key)

    # Node features
    x = jax.random.normal(k_x, (num_nodes, num_features), jnp.float32)

    # Deterministic graph structure: ring within each graph of 8 nodes
    idx = jnp.arange(num_nodes)
    src = idx
    dst = ((idx % nodes_per_graph + 1) % nodes_per_graph
           + (idx // nodes_per_graph) * nodes_per_graph)
    adj = jnp.zeros((num_nodes, num_nodes), jnp.float32).at[src, dst].set(1.0)
    adj = adj + adj.T                                   # symmetric 0/1 adjacency

    # batch vector (sorted, graphs contiguous) -> sum-pooling matrix
    batch = np.arange(num_nodes) // nodes_per_graph
    pool = jnp.asarray(batch[None, :] == np.arange(num_graphs)[:, None],
                       jnp.float32)

    params = make_params(k_params, num_features, hidden_dim,
                         num_gc_layers, cluster_emb)
    packed, dims = pack_params(params, num_features, hidden_dim,
                               num_gc_layers, cluster_emb,
                               mxu_dtype=jnp.bfloat16)

    np_, tm = _node_padding(num_nodes)
    gp = _ceil_to(max(num_graphs, 1), SUB)
    dims.update(Np=np_, Tm=tm, Gp=gp)
    kidx, kcnt, max_kt = build_block_skip_tables(batch, num_nodes, tm, np_)

    fwd = jax.jit(functools.partial(infograph_forward, dims=dims, max_kt=max_kt,
                                    alpha=1.0, mxu_dtype=jnp.bfloat16))
    z, q, g_enc, l_enc = fwd(x, adj, pool, kidx, kcnt, packed)
    jax.block_until_ready((z, q, g_enc, l_enc))

    emb_dim = hidden_dim * num_gc_layers
    assert z.shape == (num_graphs, cluster_emb)
    assert q.shape == (num_graphs, cluster_emb)
    assert g_enc.shape == (num_graphs, emb_dim)
    assert l_enc.shape == (num_nodes, emb_dim)
    # q rows sum to 1 (exact f32 row-normalization)
    assert jnp.allclose(jnp.sum(q, axis=1), 1.0, atol=1e-5)

    # Numerical check against a pure-JAX reference (same bf16 matmul operands)
    z_r, q_r, g_r, l_r = reference_forward(x, adj, pool, params, alpha=1.0)
    for name, got, ref in (("z", z, z_r), ("q", q, q_r),
                           ("g_enc", g_enc, g_r), ("l_enc", l_enc, l_r)):
        assert jnp.allclose(got, ref, rtol=5e-2, atol=5e-2), name

    print("KERNEL_OK")
</pallas_src>

<mosaic_0001>
module attributes {stable_mosaic.version = 11 : i64} {
  func.func @_global_head_kernel(%arg0: i32, %arg1: memref<8x128xbf16, #tpu.memory_space<vmem>>, %arg2: memref<128x128xbf16, #tpu.memory_space<vmem>>, %arg3: memref<128x128xbf16, #tpu.memory_space<vmem>>, %arg4: memref<256x128xbf16, #tpu.memory_space<vmem>>, %arg5: memref<1x128xf32, #tpu.memory_space<vmem>>, %arg6: memref<128x128xbf16, #tpu.memory_space<vmem>>, %arg7: memref<1x128xf32, #tpu.memory_space<vmem>>, %arg8: memref<128x128xbf16, #tpu.memory_space<vmem>>, %arg9: memref<1x128xf32, #tpu.memory_space<vmem>>, %arg10: memref<256x128xbf16, #tpu.memory_space<vmem>>, %arg11: memref<1x128xf32, #tpu.memory_space<vmem>>, %arg12: memref<256x128xbf16, #tpu.memory_space<vmem>>, %arg13: memref<1x128xf32, #tpu.memory_space<vmem>>, %arg14: memref<128x128xf32, #tpu.memory_space<vmem>>, %arg15: memref<1x128xf32, #tpu.memory_space<vmem>>, %arg16: memref<8x128xf32, #tpu.memory_space<vmem>>, %arg17: memref<8x128xf32, #tpu.memory_space<vmem>>, %arg18: memref<8x128xf32, #tpu.memory_space<vmem>>, %arg19: memref<8x256xf32, #tpu.memory_space<vmem>>) attributes {dimension_semantics = [#tpu.dimension_semantics<arbitrary>], iteration_bounds = array<i64: 1>, scalar_prefetch = 0 : i64, scratch_operands = 1 : i64, tpu.core_type = #tpu.core_type<tc>, window_params = [{transform_indices = @transform_0, window_bounds = array<i64: 8, 128>}, {transform_indices = @transform_1, window_bounds = array<i64: 128, 128>}, {transform_indices = @transform_2, window_bounds = array<i64: 128, 128>}, {pipeline_mode = #tpu.pipeline_mode<synchronous>, transform_indices = @transform_3, window_bounds = array<i64: 256, 128>}, {pipeline_mode = #tpu.pipeline_mode<synchronous>, transform_indices = @transform_4, window_bounds = array<i64: 1, 128>}, {pipeline_mode = #tpu.pipeline_mode<synchronous>, transform_indices = @transform_5, window_bounds = array<i64: 128, 128>}, {pipeline_mode = #tpu.pipeline_mode<synchronous>, transform_indices = @transform_6, window_bounds = array<i64: 1, 128>}, {pipeline_mode = #tpu.pipeline_mode<synchronous>, transform_indices = @transform_7, window_bounds = array<i64: 128, 128>}, {pipeline_mode = #tpu.pipeline_mode<synchronous>, transform_indices = @transform_8, window_bounds = array<i64: 1, 128>}, {pipeline_mode = #tpu.pipeline_mode<synchronous>, transform_indices = @transform_9, window_bounds = array<i64: 256, 128>}, {pipeline_mode = #tpu.pipeline_mode<synchronous>, transform_indices = @transform_10, window_bounds = array<i64: 1, 128>}, {pipeline_mode = #tpu.pipeline_mode<synchronous>, transform_indices = @transform_11, window_bounds = array<i64: 256, 128>}, {pipeline_mode = #tpu.pipeline_mode<synchronous>, transform_indices = @transform_12, window_bounds = array<i64: 1, 128>}, {pipeline_mode = #tpu.pipeline_mode<synchronous>, transform_indices = @transform_13, window_bounds = array<i64: 128, 128>}, {pipeline_mode = #tpu.pipeline_mode<synchronous>, transform_indices = @transform_14, window_bounds = array<i64: 1, 128>}, {pipeline_mode = #tpu.pipeline_mode<synchronous>, transform_indices = @transform_15, window_bounds = array<i64: 8, 128>}, {pipeline_mode = #tpu.pipeline_mode<synchronous>, transform_indices = @transform_16, window_bounds = array<i64: 8, 128>}, {pipeline_mode = #tpu.pipeline_mode<synchronous>, transform_indices = @transform_17, window_bounds = array<i64: 8, 128>}]} {
    %c0_i32 = arith.constant 0 : i32
    %0 = arith.cmpi eq, %arg0, %c0_i32 : i32
    %1 = arith.extui %0 : i1 to i32
    %c0_i32_0 = arith.constant 0 : i32
    %2 = arith.cmpi ne, %1, %c0_i32_0 : i32
    scf.if %2 {
      %cst_16 = arith.constant 0.000000e+00 : f32
      %17 = vector.broadcast %cst_16 : f32 to vector<8x256xf32>
      %c0_17 = arith.constant 0 : index
      %c0_18 = arith.constant 0 : index
      %18 = vector.load %arg19[%c0_17, %c0_18] : memref<8x256xf32, #tpu.memory_space<vmem>>, vector<8x256xf32>
      tpu.vector_store %arg19[%c0_17, %c0_18], %17 {strides = array<i32>} : memref<8x256xf32, #tpu.memory_space<vmem>>, vector<8x256xf32>,
    } else {
    }
    %c0 = arith.constant 0 : index
    %c0_1 = arith.constant 0 : index
    %3 = vector.load %arg1[%c0, %c0_1] : memref<8x128xbf16, #tpu.memory_space<vmem>>, vector<8x128xbf16>
    %c0_2 = arith.constant 0 : index
    %c0_3 = arith.constant 0 : index
    %4 = vector.load %arg19[%c0_2, %c0_3] : memref<8x256xf32, #tpu.memory_space<vmem>>, vector<8x128xf32>
    %c0_4 = arith.constant 0 : index
    %c0_5 = arith.constant 0 : index
    %5 = vector.load %arg2[%c0_4, %c0_5] : memref<128x128xbf16, #tpu.memory_space<vmem>>, vector<128x128xbf16>
    %cst = arith.constant dense<0.000000e+00> : vector<8x128xf32>
    %6 = tpu.matmul %3, %5, %cst {dimension_numbers = #tpu.dot_dimension_numbers<[1], [0], [0], [1], [0, 0, 1, 1], [], []>} : vector<8x128xbf16>, vector<128x128xbf16>, vector<8x128xf32> -> vector<8x128xf32>
    %7 = arith.addf %4, %6 : vector<8x128xf32>
    %c0_6 = arith.constant 0 : index
    %c0_7 = arith.constant 0 : index
    %8 = vector.load %arg19[%c0_6, %c0_7] : memref<8x256xf32, #tpu.memory_space<vmem>>, vector<8x128xf32>
    tpu.vector_store %arg19[%c0_6, %c0_7], %7 {strides = array<i32>} : memref<8x256xf32, #tpu.memory_space<vmem>>, vector<8x128xf32>,
    %c0_8 = arith.constant 0 : index
    %c128 = arith.constant 128 : index
    %9 = vector.load %arg19[%c0_8, %c128] : memref<8x256xf32, #tpu.memory_space<vmem>>, vector<8x128xf32>
    %c0_9 = arith.constant 0 : index
    %c0_10 = arith.constant 0 : index
    %10 = vector.load %arg3[%c0_9, %c0_10] : memref<128x128xbf16, #tpu.memory_space<vmem>>, vector<128x128xbf16>
    %cst_11 = arith.constant dense<0.000000e+00> : vector<8x128xf32>
    %11 = tpu.matmul %3, %10, %cst_11 {dimension_numbers = #tpu.dot_dimension_numbers<[1], [0], [0], [1], [0, 0, 1, 1], [], []>} : vector<8x128xbf16>, vector<128x128xbf16>, vector<8x128xf32> -> vector<8x128xf32>
    %12 = arith.addf %9, %11 : vector<8x128xf32>
    %c0_12 = arith.constant 0 : index
    %c128_13 = arith.constant 128 : index
    %13 = vector.load %arg19[%c0_12, %c128_13] : memref<8x256xf32, #tpu.memory_space<vmem>>, vector<8x128xf32>
    tpu.vector_store %arg19[%c0_12, %c128_13], %12 {strides = array<i32>} : memref<8x256xf32, #tpu.memory_space<vmem>>, vector<8x128xf32>,
    %c0_i32_14 = arith.constant 0 : i32
    %14 = arith.cmpi eq, %arg0, %c0_i32_14 : i32
    %15 = arith.extui %14 : i1 to i32
    %c0_i32_15 = arith.constant 0 : i32
    %16 = arith.cmpi ne, %15, %c0_i32_15 : i32
    scf.if %16 {
      %c0_16 = arith.constant 0 : index
      %c0_17 = arith.constant 0 : index
      %17 = vector.load %arg19[%c0_16, %c0_17] : memref<8x256xf32, #tpu.memory_space<vmem>>, vector<8x256xf32>
      %18 = vector.extract_strided_slice %17 {offsets = [0, 0], sizes = [8, 128], strides = [1, 1]} : vector<8x256xf32> to vector<8x128xf32>
      %19 = arith.truncf %18 : vector<8x128xf32> to vector<8x128xbf16>
      %20 = vector.extract_strided_slice %17 {offsets = [0, 128], sizes = [8, 128], strides = [1, 1]} : vector<8x256xf32> to vector<8x128xf32>
      %21 = arith.truncf %20 : vector<8x128xf32> to vector<8x128xbf16>
      %c0_18 = arith.constant 0 : index
      %c0_19 = arith.constant 0 : index
      %22 = vector.load %arg4[%c0_18, %c0_19] : memref<256x128xbf16, #tpu.memory_space<vmem>>, vector<128x128xbf16>
      %cst_20 = arith.constant dense<0.000000e+00> : vector<8x128xf32>
      %23 = tpu.matmul %19, %22, %cst_20 {dimension_numbers = #tpu.dot_dimension_numbers<[1], [0], [0], [1], [0, 0, 1, 1], [], []>} : vector<8x128xbf16>, vector<128x128xbf16>, vector<8x128xf32> -> vector<8x128xf32>
      %c0_21 = arith.constant 0 : index
      %c0_22 = arith.constant 0 : index
      %24 = vector.load %arg10[%c0_21, %c0_22] : memref<256x128xbf16, #tpu.memory_space<vmem>>, vector<128x128xbf16>
      %cst_23 = arith.constant dense<0.000000e+00> : vector<8x128xf32>
      %25 = tpu.matmul %19, %24, %cst_23 {dimension_numbers = #tpu.dot_dimension_numbers<[1], [0], [0], [1], [0, 0, 1, 1], [], []>} : vector<8x128xbf16>, vector<128x128xbf16>, vector<8x128xf32> -> vector<8x128xf32>
      %c128_24 = arith.constant 128 : index
      %c0_25 = arith.constant 0 : index
      %26 = vector.load %arg4[%c128_24, %c0_25] : memref<256x128xbf16, #tpu.memory_space<vmem>>, vector<128x128xbf16>
      %cst_26 = arith.constant dense<0.000000e+00> : vector<8x128xf32>
      %27 = tpu.matmul %21, %26, %cst_26 {dimension_numbers = #tpu.dot_dimension_numbers<[1], [0], [0], [1], [0, 0, 1, 1], [], []>} : vector<8x128xbf16>, vector<128x128xbf16>, vector<8x128xf32> -> vector<8x128xf32>
      %c128_27 = arith.constant 128 : index
      %c0_28 = arith.constant 0 : index
      %28 = vector.load %arg10[%c128_27, %c0_28] : memref<256x128xbf16, #tpu.memory_space<vmem>>, vector<128x128xbf16>
      %cst_29 = arith.constant dense<0.000000e+00> : vector<8x128xf32>
      %29 = tpu.matmul %21, %28, %cst_29 {dimension_numbers = #tpu.dot_dimension_numbers<[1], [0], [0], [1], [0, 0, 1, 1], [], []>} : vector<8x128xbf16>, vector<128x128xbf16>, vector<8x128xf32> -> vector<8x128xf32>
      %30 = arith.addf %23, %27 : vector<8x128xf32>
      %31 = arith.addf %25, %29 : vector<8x128xf32>
      %c0_30 = arith.constant 0 : index
      %c0_31 = arith.constant 0 : index
      %32 = vector.load %arg5[%c0_30, %c0_31] : memref<1x128xf32, #tpu.memory_space<vmem>>, vector<1x128xf32>
      %33 = vector.broadcast %32 : vector<1x128xf32> to vector<8x128xf32>
      %34 = arith.addf %30, %33 : vector<8x128xf32>
      %cst_32 = arith.constant 0.000000e+00 : f32
      %35 = vector.broadcast %cst_32 : f32 to vector<8x128xf32>
      %36 = arith.maximumf %34, %35 : vector<8x128xf32>
      %37 = arith.truncf %36 : vector<8x128xf32> to vector<8x128xbf16>
      %c0_33 = arith.constant 0 : index
      %c0_34 = arith.constant 0 : index
      %38 = vector.load %arg6[%c0_33, %c0_34] : memref<128x128xbf16, #tpu.memory_space<vmem>>, vector<128x128xbf16>
      %cst_35 = arith.constant dense<0.000000e+00> : vector<8x128xf32>
      %39 = tpu.matmul %37, %38, %cst_35 {dimension_numbers = #tpu.dot_dimension_numbers<[1], [0], [0], [1], [0, 0, 1, 1], [], []>} : vector<8x128xbf16>, vector<128x128xbf16>, vector<8x128xf32> -> vector<8x128xf32>
      %c0_36 = arith.constant 0 : index
      %c0_37 = arith.constant 0 : index
      %40 = vector.load %arg7[%c0_36, %c0_37] : memref<1x128xf32, #tpu.memory_space<vmem>>, vector<1x128xf32>
      %41 = vector.broadcast %40 : vector<1x128xf32> to vector<8x128xf32>
      %42 = arith.addf %39, %41 : vector<8x128xf32>
      %cst_38 = arith.constant 0.000000e+00 : f32
      %43 = vector.broadcast %cst_38 : f32 to vector<8x128xf32>
      %44 = arith.maximumf %42, %43 : vector<8x128xf32>
      %45 = arith.truncf %44 : vector<8x128xf32> to vector<8x128xbf16>
      %c0_39 = arith.constant 0 : index
      %c0_40 = arith.constant 0 : index
      %46 = vector.load %arg8[%c0_39, %c0_40] : memref<128x128xbf16, #tpu.memory_space<vmem>>, vector<128x128xbf16>
      %cst_41 = arith.constant dense<0.000000e+00> : vector<8x128xf32>
      %47 = tpu.matmul %45, %46, %cst_41 {dimension_numbers = #tpu.dot_dimension_numbers<[1], [0], [0], [1], [0, 0, 1, 1], [], []>} : vector<8x128xbf16>, vector<128x128xbf16>, vector<8x128xf32> -> vector<8x128xf32>
      %c0_42 = arith.constant 0 : index
      %c0_43 = arith.constant 0 : index
      %48 = vector.load %arg9[%c0_42, %c0_43] : memref<1x128xf32, #tpu.memory_space<vmem>>, vector<1x128xf32>
      %49 = vector.broadcast %48 : vector<1x128xf32> to vector<8x128xf32>
      %50 = arith.addf %47, %49 : vector<8x128xf32>
      %cst_44 = arith.constant 0.000000e+00 : f32
      %51 = vector.broadcast %cst_44 : f32 to vector<8x128xf32>
      %52 = arith.maximumf %50, %51 : vector<8x128xf32>
      %53 = arith.addf %52, %31 : vector<8x128xf32>
      %c0_45 = arith.constant 0 : index
      %c0_46 = arith.constant 0 : index
      %54 = vector.load %arg11[%c0_45, %c0_46] : memref<1x128xf32, #tpu.memory_space<vmem>>, vector<1x128xf32>
      %55 = vector.broadcast %54 : vector<1x128xf32> to vector<8x128xf32>
      %56 = arith.addf %53, %55 : vector<8x128xf32>
      %c0_47 = arith.constant 0 : index
      %c0_48 = arith.constant 0 : index
      %57 = vector.load %arg16[%c0_47, %c0_48] : memref<8x128xf32, #tpu.memory_space<vmem>>, vector<8x128xf32>
      tpu.vector_store %arg16[%c0_47, %c0_48], %56 {strides = array<i32>} : memref<8x128xf32, #tpu.memory_space<vmem>>, vector<8x128xf32>,
      %c0_49 = arith.constant 0 : index
      %c0_50 = arith.constant 0 : index
      %58 = vector.load %arg12[%c0_49, %c0_50] : memref<256x128xbf16, #tpu.memory_space<vmem>>, vector<128x128xbf16>
      %cst_51 = arith.constant dense<0.000000e+00> : vector<8x128xf32>
      %59 = tpu.matmul %19, %58, %cst_51 {dimension_numbers = #tpu.dot_dimension_numbers<[1], [0], [0], [1], [0, 0, 1, 1], [], []>} : vector<8x128xbf16>, vector<128x128xbf16>, vector<8x128xf32> -> vector<8x128xf32>
      %c128_52 = arith.constant 128 : index
      %c0_53 = arith.constant 0 : index
      %60 = vector.load %arg12[%c128_52, %c0_53] : memref<256x128xbf16, #tpu.memory_space<vmem>>, vector<128x128xbf16>
      %cst_54 = arith.constant dense<0.000000e+00> : vector<8x128xf32>
      %61 = tpu.matmul %21, %60, %cst_54 {dimension_numbers = #tpu.dot_dimension_numbers<[1], [0], [0], [1], [0, 0, 1, 1], [], []>} : vector<8x128xbf16>, vector<128x128xbf16>, vector<8x128xf32> -> vector<8x128xf32>
      %62 = arith.addf %59, %61 : vector<8x128xf32>
      %c0_55 = arith.constant 0 : index
      %c0_56 = arith.constant 0 : index
      %63 = vector.load %arg13[%c0_55, %c0_56] : memref<1x128xf32, #tpu.memory_space<vmem>>, vector<1x128xf32>
      %64 = vector.broadcast %63 : vector<1x128xf32> to vector<8x128xf32>
      %65 = arith.addf %62, %64 : vector<8x128xf32>
      %c0_57 = arith.constant 0 : index
      %c0_58 = arith.constant 0 : index
      %66 = vector.load %arg17[%c0_57, %c0_58] : memref<8x128xf32, #tpu.memory_space<vmem>>, vector<8x128xf32>
      tpu.vector_store %arg17[%c0_57, %c0_58], %65 {strides = array<i32>} : memref<8x128xf32, #tpu.memory_space<vmem>>, vector<8x128xf32>,
      %c0_59 = arith.constant 0 : index
      %c0_60 = arith.constant 0 : index
      %67 = vector.load %arg14[%c0_59, %c0_60] : memref<128x128xf32, #tpu.memory_space<vmem>>, vector<128x128xf32>
      %cst_61 = arith.constant dense<0.000000e+00> : vector<8x128xf32>
      %68 = tpu.matmul %65, %67, %cst_61 {dimension_numbers = #tpu.dot_dimension_numbers<[1], [0], [0], [1], [0, 0, 1, 1], [], []>} : vector<8x128xf32>, vector<128x128xf32>, vector<8x128xf32> -> vector<8x128xf32>
      %69 = arith.mulf %65, %65 : vector<8x128xf32>
      %cst_62 = arith.constant dense<0.000000e+00> : vector<8xf32>
      %70 = vector.multi_reduction <add>, %69, %cst_62 [1] : vector<8x128xf32> to vector<8xf32>
      %71 = vector.shape_cast %70 : vector<8xf32> to vector<8x1xf32>
      %c0_63 = arith.constant 0 : index
      %c0_64 = arith.constant 0 : index
      %72 = vector.load %arg15[%c0_63, %c0_64] : memref<1x128xf32, #tpu.memory_space<vmem>>, vector<1x128xf32>
      %73 = vector.broadcast %71 : vector<8x1xf32> to vector<8x128xf32>
      %74 = vector.broadcast %72 : vector<1x128xf32> to vector<8x128xf32>
      %75 = arith.addf %73, %74 : vector<8x128xf32>
      %cst_65 = arith.constant 2.000000e+00 : f32
      %76 = vector.broadcast %cst_65 : f32 to vector<8x128xf32>
      %77 = arith.mulf %76, %68 : vector<8x128xf32>
      %78 = arith.subf %75, %77 : vector<8x128xf32>
      %cst_66 = arith.constant 0.000000e+00 : f32
      %79 = vector.broadcast %cst_66 : f32 to vector<8x128xf32>
      %80 = arith.maximumf %78, %79 : vector<8x128xf32>
      %cst_67 = arith.constant 1.000000e+00 : f32
      %81 = vector.broadcast %cst_67 : f32 to vector<8x128xf32>
      %82 = arith.mulf %80, %81 : vector<8x128xf32>
      %cst_68 = arith.constant 1.000000e+00 : f32
      %83 = vector.broadcast %cst_68 : f32 to vector<8x128xf32>
      %84 = arith.addf %83, %82 : vector<8x128xf32>
      %cst_69 = arith.constant 1.000000e+00 : f32
      %85 = vector.broadcast %cst_69 : f32 to vector<8x128xf32>
      %86 = arith.divf %85, %84 : vector<8x128xf32>
      %87 = tpu.iota {dimensions = array<i32: 1>} : vector<8x128xi32>
      %c8_i32 = arith.constant 8 : i32
      %88 = vector.broadcast %c8_i32 : i32 to vector<8x128xi32>
      %89 = arith.cmpi slt, %87, %88 : vector<8x128xi32>
      %cst_70 = arith.constant 0.000000e+00 : f32
      %90 = vector.broadcast %cst_70 : f32 to vector<8x128xf32>
      %91 = arith.select %89, %86, %90 : vector<8x128xi1>, vector<8x128xf32>
      %cst_71 = arith.constant dense<0.000000e+00> : vector<8xf32>
      %92 = vector.multi_reduction <add>, %91, %cst_71 [1] : vector<8x128xf32> to vector<8xf32>
      %93 = vector.shape_cast %92 : vector<8xf32> to vector<8x1xf32>
      %94 = vector.broadcast %93 : vector<8x1xf32> to vector<8x128xf32>
      %95 = arith.divf %91, %94 : vector<8x128xf32>
      %c0_72 = arith.constant 0 : index
      %c0_73 = arith.constant 0 : index
      %96 = vector.load %arg18[%c0_72, %c0_73] : memref<8x128xf32, #tpu.memory_space<vmem>>, vector<8x128xf32>
      tpu.vector_store %arg18[%c0_72, %c0_73], %95 {strides = array<i32>} : memref<8x128xf32, #tpu.memory_space<vmem>>, vector<8x128xf32>,
    } else {
    }
    return
  }
  func.func @transform_0(%arg0: i32) -> (i32, i32) {
    %c0_i32 = arith.constant 0 : i32
    %c0_i32_0 = arith.constant 0 : i32
    return %c0_i32, %arg0 : i32, i32
  }
  func.func @transform_1(%arg0: i32) -> (i32, i32) {
    %c0_i32 = arith.constant 0 : i32
    %c0_i32_0 = arith.constant 0 : i32
    return %arg0, %c0_i32 : i32, i32
  }
  func.func @transform_2(%arg0: i32) -> (i32, i32) {
    %c0_i32 = arith.constant 0 : i32
    %c0_i32_0 = arith.constant 0 : i32
    return %arg0, %c0_i32 : i32, i32
  }
  func.func @transform_3(%arg0: i32) -> (i32, i32) {
    %c0_i32 = arith.constant 0 : i32
    %c0_i32_0 = arith.constant 0 : i32
    %c0_i32_1 = arith.constant 0 : i32
    return %c0_i32, %c0_i32_0 : i32, i32
  }
  func.func @transform_4(%arg0: i32) -> (i32, i32) {
    %c0_i32 = arith.constant 0 : i32
    %c0_i32_0 = arith.constant 0 : i32
    %c0_i32_1 = arith.constant 0 : i32
    return %c0_i32, %c0_i32_0 : i32, i32
  }
  func.func @transform_5(%arg0: i32) -> (i32, i32) {
    %c0_i32 = arith.constant 0 : i32
    %c0_i32_0 = arith.constant 0 : i32
    %c0_i32_1 = arith.constant 0 : i32
    return %c0_i32, %c0_i32_0 : i32, i32
  }
  func.func @transform_6(%arg0: i32) -> (i32, i32) {
    %c0_i32 = arith.constant 0 : i32
    %c0_i32_0 = arith.constant 0 : i32
    %c0_i32_1 = arith.constant 0 : i32
    return %c0_i32, %c0_i32_0 : i32, i32
  }
  func.func @transform_7(%arg0: i32) -> (i32, i32) {
    %c0_i32 = arith.constant 0 : i32
    %c0_i32_0 = arith.constant 0 : i32
    %c0_i32_1 = arith.constant 0 : i32
    return %c0_i32, %c0_i32_0 : i32, i32
  }
  func.func @transform_8(%arg0: i32) -> (i32, i32) {
    %c0_i32 = arith.constant 0 : i32
    %c0_i32_0 = arith.constant 0 : i32
    %c0_i32_1 = arith.constant 0 : i32
    return %c0_i32, %c0_i32_0 : i32, i32
  }
  func.func @transform_9(%arg0: i32) -> (i32, i32) {
    %c0_i32 = arith.constant 0 : i32
    %c0_i32_0 = arith.constant 0 : i32
    %c0_i32_1 = arith.constant 0 : i32
    return %c0_i32, %c0_i32_0 : i32, i32
  }
  func.func @transform_10(%arg0: i32) -> (i32, i32) {
    %c0_i32 = arith.constant 0 : i32
    %c0_i32_0 = arith.constant 0 : i32
    %c0_i32_1 = arith.constant 0 : i32
    return %c0_i32, %c0_i32_0 : i32, i32
  }
  func.func @transform_11(%arg0: i32) -> (i32, i32) {
    %c0_i32 = arith.constant 0 : i32
    %c0_i32_0 = arith.constant 0 : i32
    %c0_i32_1 = arith.constant 0 : i32
    return %c0_i32, %c0_i32_0 : i32, i32
  }
  func.func @transform_12(%arg0: i32) -> (i32, i32) {
    %c0_i32 = arith.constant 0 : i32
    %c0_i32_0 = arith.constant 0 : i32
    %c0_i32_1 = arith.constant 0 : i32
    return %c0_i32, %c0_i32_0 : i32, i32
  }
  func.func @transform_13(%arg0: i32) -> (i32, i32) {
    %c0_i32 = arith.constant 0 : i32
    %c0_i32_0 = arith.constant 0 : i32
    %c0_i32_1 = arith.constant 0 : i32
    return %c0_i32, %c0_i32_0 : i32, i32
  }
  func.func @transform_14(%arg0: i32) -> (i32, i32) {
    %c0_i32 = arith.constant 0 : i32
    %c0_i32_0 = arith.constant 0 : i32
    %c0_i32_1 = arith.constant 0 : i32
    return %c0_i32, %c0_i32_0 : i32, i32
  }
  func.func @transform_15(%arg0: i32) -> (i32, i32) {
    %c0_i32 = arith.constant 0 : i32
    %c0_i32_0 = arith.constant 0 : i32
    %c0_i32_1 = arith.constant 0 : i32
    return %c0_i32, %c0_i32_0 : i32, i32
  }
  func.func @transform_16(%arg0: i32) -> (i32, i32) {
    %c0_i32 = arith.constant 0 : i32
    %c0_i32_0 = arith.constant 0 : i32
    %c0_i32_1 = arith.constant 0 : i32
    return %c0_i32, %c0_i32_0 : i32, i32
  }
  func.func @transform_17(%arg0: i32) -> (i32, i32) {
    %c0_i32 = arith.constant 0 : i32
    %c0_i32_0 = arith.constant 0 : i32
    %c0_i32_1 = arith.constant 0 : i32
    return %c0_i32, %c0_i32_0 : i32, i32
  }
}

module attributes {stable_mosaic.version = 11 : i64} {
  func.func @_gin_layer_kernel(%arg0: i32, %arg1: i32, %arg2: memref<1xi32, #tpu.memory_space<smem>>, %arg3: memref<1xi32, #tpu.memory_space<smem>>, %arg4: memref<128x128xbf16, #tpu.memory_space<vmem>>, %arg5: memref<128x128xbf16, #tpu.memory_space<vmem>>, %arg6: memref<128x128xbf16, #tpu.memory_space<vmem>>, %arg7: memref<1x128xf32, #tpu.memory_space<vmem>>, %arg8: memref<128x128xbf16, #tpu.memory_space<vmem>>, %arg9: memref<1x128xf32, #tpu.memory_space<vmem>>, %arg10: memref<128x128xbf16, #tpu.memory_space<vmem>>, %arg11: memref<128x128xf32, #tpu.memory_space<vmem>>) attributes {dimension_semantics = [#tpu.dimension_semantics<parallel>, #tpu.dimension_semantics<arbitrary>], iteration_bounds = array<i64: 1, 1>, scalar_prefetch = 2 : i64, scratch_operands = 1 : i64, tpu.core_type = #tpu.core_type<tc>, window_params = [{transform_indices = @transform_0, window_bounds = array<i64: 128, 128>}, {transform_indices = @transform_1, window_bounds = array<i64: 128, 128>}, {pipeline_mode = #tpu.pipeline_mode<synchronous>, transform_indices = @transform_2, window_bounds = array<i64: 128, 128>}, {pipeline_mode = #tpu.pipeline_mode<synchronous>, transform_indices = @transform_3, window_bounds = array<i64: 1, 128>}, {pipeline_mode = #tpu.pipeline_mode<synchronous>, transform_indices = @transform_4, window_bounds = array<i64: 128, 128>}, {pipeline_mode = #tpu.pipeline_mode<synchronous>, transform_indices = @transform_5, window_bounds = array<i64: 1, 128>}, {transform_indices = @transform_6, window_bounds = array<i64: 128, 128>}]} {
    %c0_i32 = arith.constant 0 : i32
    %0 = arith.cmpi eq, %arg1, %c0_i32 : i32
    %1 = arith.extui %0 : i1 to i32
    %c0_i32_0 = arith.constant 0 : i32
    %2 = arith.cmpi ne, %1, %c0_i32_0 : i32
    scf.if %2 {
      %cst = arith.constant 0.000000e+00 : f32
      %11 = vector.broadcast %cst : f32 to vector<128x128xf32>
      %c0 = arith.constant 0 : index
      %c0_4 = arith.constant 0 : index
      %12 = vector.load %arg11[%c0, %c0_4] : memref<128x128xf32, #tpu.memory_space<vmem>>, vector<128x128xf32>
      tpu.vector_store %arg11[%c0, %c0_4], %11 {strides = array<i32>} : memref<128x128xf32, #tpu.memory_space<vmem>>, vector<128x128xf32>,
    } else {
    }
    %3 = arith.index_cast %arg0 : i32 to index
    %4 = memref.load %arg3[%3] : memref<1xi32, #tpu.memory_space<smem>>
    %5 = arith.cmpi slt, %arg1, %4 : i32
    %6 = arith.extui %5 : i1 to i32
    %c0_i32_1 = arith.constant 0 : i32
    %7 = arith.cmpi ne, %6, %c0_i32_1 : i32
    scf.if %7 {
      %c0 = arith.constant 0 : index
      %c0_4 = arith.constant 0 : index
      %11 = vector.load %arg11[%c0, %c0_4] : memref<128x128xf32, #tpu.memory_space<vmem>>, vector<128x128xf32>
      %c0_5 = arith.constant 0 : index
      %c0_6 = arith.constant 0 : index
      %12 = vector.load %arg4[%c0_5, %c0_6] : memref<128x128xbf16, #tpu.memory_space<vmem>>, vector<128x128xbf16>
      %c0_7 = arith.constant 0 : index
      %c0_8 = arith.constant 0 : index
      %13 = vector.load %arg5[%c0_7, %c0_8] : memref<128x128xbf16, #tpu.memory_space<vmem>>, vector<128x128xbf16>
      %cst = arith.constant dense<0.000000e+00> : vector<128x128xf32>
      %14 = tpu.matmul %12, %13, %cst {dimension_numbers = #tpu.dot_dimension_numbers<[1], [0], [0], [1], [0, 0, 1, 1], [], []>} : vector<128x128xbf16>, vector<128x128xbf16>, vector<128x128xf32> -> vector<128x128xf32>
      %15 = arith.addf %11, %14 : vector<128x128xf32>
      %c0_9 = arith.constant 0 : index
      %c0_10 = arith.constant 0 : index
      %16 = vector.load %arg11[%c0_9, %c0_10] : memref<128x128xf32, #tpu.memory_space<vmem>>, vector<128x128xf32>
      tpu.vector_store %arg11[%c0_9, %c0_10], %15 {strides = array<i32>} : memref<128x128xf32, #tpu.memory_space<vmem>>, vector<128x128xf32>,
    } else {
    }
    %c0_i32_2 = arith.constant 0 : i32
    %8 = arith.cmpi eq, %arg1, %c0_i32_2 : i32
    %9 = arith.extui %8 : i1 to i32
    %c0_i32_3 = arith.constant 0 : i32
    %10 = arith.cmpi ne, %9, %c0_i32_3 : i32
    scf.if %10 {
      %c0 = arith.constant 0 : index
      %c0_4 = arith.constant 0 : index
      %11 = vector.load %arg11[%c0, %c0_4] : memref<128x128xf32, #tpu.memory_space<vmem>>, vector<128x128xf32>
      %12 = arith.truncf %11 : vector<128x128xf32> to vector<128x128xbf16>
      %c0_5 = arith.constant 0 : index
      %c0_6 = arith.constant 0 : index
      %13 = vector.load %arg6[%c0_5, %c0_6] : memref<128x128xbf16, #tpu.memory_space<vmem>>, vector<128x128xbf16>
      %cst = arith.constant dense<0.000000e+00> : vector<128x128xf32>
      %14 = tpu.matmul %12, %13, %cst {dimension_numbers = #tpu.dot_dimension_numbers<[1], [0], [0], [1], [0, 0, 1, 1], [], []>} : vector<128x128xbf16>, vector<128x128xbf16>, vector<128x128xf32> -> vector<128x128xf32>
      %c0_7 = arith.constant 0 : index
      %c0_8 = arith.constant 0 : index
      %15 = vector.load %arg7[%c0_7, %c0_8] : memref<1x128xf32, #tpu.memory_space<vmem>>, vector<1x128xf32>
      %16 = vector.broadcast %15 : vector<1x128xf32> to vector<128x128xf32>
      %17 = arith.addf %14, %16 : vector<128x128xf32>
      %cst_9 = arith.constant 0.000000e+00 : f32
      %18 = vector.broadcast %cst_9 : f32 to vector<128x128xf32>
      %19 = arith.maximumf %17, %18 : vector<128x128xf32>
      %20 = arith.truncf %19 : vector<128x128xf32> to vector<128x128xbf16>
      %c0_10 = arith.constant 0 : index
      %c0_11 = arith.constant 0 : index
      %21 = vector.load %arg8[%c0_10, %c0_11] : memref<128x128xbf16, #tpu.memory_space<vmem>>, vector<128x128xbf16>
      %cst_12 = arith.constant dense<0.000000e+00> : vector<128x128xf32>
      %22 = tpu.matmul %20, %21, %cst_12 {dimension_numbers = #tpu.dot_dimension_numbers<[1], [0], [0], [1], [0, 0, 1, 1], [], []>} : vector<128x128xbf16>, vector<128x128xbf16>, vector<128x128xf32> -> vector<128x128xf32>
      %c0_13 = arith.constant 0 : index
      %c0_14 = arith.constant 0 : index
      %23 = vector.load %arg9[%c0_13, %c0_14] : memref<1x128xf32, #tpu.memory_space<vmem>>, vector<1x128xf32>
      %24 = vector.broadcast %23 : vector<1x128xf32> to vector<128x128xf32>
      %25 = arith.addf %22, %24 : vector<128x128xf32>
      %cst_15 = arith.constant 0.000000e+00 : f32
      %26 = vector.broadcast %cst_15 : f32 to vector<128x128xf32>
      %27 = arith.maximumf %25, %26 : vector<128x128xf32>
      %28 = arith.truncf %27 : vector<128x128xf32> to vector<128x128xbf16>
      %c0_16 = arith.constant 0 : index
      %c0_17 = arith.constant 0 : index
      %29 = vector.load %arg10[%c0_16, %c0_17] : memref<128x128xbf16, #tpu.memory_space<vmem>>, vector<128x128xbf16>
      tpu.vector_store %arg10[%c0_16, %c0_17], %28 {strides = array<i32>} : memref<128x128xbf16, #tpu.memory_space<vmem>>, vector<128x128xbf16>,
    } else {
    }
    return
  }
  func.func @transform_0(%arg0: i32, %arg1: i32, %arg2: memref<1xi32, #tpu.memory_space<smem>>, %arg3: memref<1xi32, #tpu.memory_space<smem>>) -> (i32, i32) {
    %c1_i32 = arith.constant 1 : i32
    %0 = arith.muli %arg0, %c1_i32 : i32
    %1 = arith.addi %0, %arg1 : i32
    %2 = arith.index_cast %1 : i32 to index
    %3 = memref.load %arg2[%2] : memref<1xi32, #tpu.memory_space<smem>>
    %c0_i32 = arith.constant 0 : i32
    return %arg0, %3 : i32, i32
  }
  func.func @transform_1(%arg0: i32, %arg1: i32, %arg2: memref<1xi32, #tpu.memory_space<smem>>, %arg3: memref<1xi32, #tpu.memory_space<smem>>) -> (i32, i32) {
    %c1_i32 = arith.constant 1 : i32
    %0 = arith.muli %arg0, %c1_i32 : i32
    %1 = arith.addi %0, %arg1 : i32
    %2 = arith.index_cast %1 : i32 to index
    %3 = memref.load %arg2[%2] : memref<1xi32, #tpu.memory_space<smem>>
    %c0_i32 = arith.constant 0 : i32
    %c0_i32_0 = arith.constant 0 : i32
    return %3, %c0_i32 : i32, i32
  }
  func.func @transform_2(%arg0: i32, %arg1: i32, %arg2: memref<1xi32, #tpu.memory_space<smem>>, %arg3: memref<1xi32, #tpu.memory_space<smem>>) -> (i32, i32) {
    %c0_i32 = arith.constant 0 : i32
    %c0_i32_0 = arith.constant 0 : i32
    %c0_i32_1 = arith.constant 0 : i32
    return %c0_i32, %c0_i32_0 : i32, i32
  }
  func.func @transform_3(%arg0: i32, %arg1: i32, %arg2: memref<1xi32, #tpu.memory_space<smem>>, %arg3: memref<1xi32, #tpu.memory_space<smem>>) -> (i32, i32) {
    %c0_i32 = arith.constant 0 : i32
    %c0_i32_0 = arith.constant 0 : i32
    %c0_i32_1 = arith.constant 0 : i32
    return %c0_i32, %c0_i32_0 : i32, i32
  }
  func.func @transform_4(%arg0: i32, %arg1: i32, %arg2: memref<1xi32, #tpu.memory_space<smem>>, %arg3: memref<1xi32, #tpu.memory_space<smem>>) -> (i32, i32) {
    %c0_i32 = arith.constant 0 : i32
    %c0_i32_0 = arith.constant 0 : i32
    %c0_i32_1 = arith.constant 0 : i32
    return %c0_i32, %c0_i32_0 : i32, i32
  }
  func.func @transform_5(%arg0: i32, %arg1: i32, %arg2: memref<1xi32, #tpu.memory_space<smem>>, %arg3: memref<1xi32, #tpu.memory_space<smem>>) -> (i32, i32) {
    %c0_i32 = arith.constant 0 : i32
    %c0_i32_0 = arith.constant 0 : i32
    %c0_i32_1 = arith.constant 0 : i32
    return %c0_i32, %c0_i32_0 : i32, i32
  }
  func.func @transform_6(%arg0: i32, %arg1: i32, %arg2: memref<1xi32, #tpu.memory_space<smem>>, %arg3: memref<1xi32, #tpu.memory_space<smem>>) -> (i32, i32) {
    %c0_i32 = arith.constant 0 : i32
    %c0_i32_0 = arith.constant 0 : i32
    return %arg0, %c0_i32 : i32, i32
  }
}

module attributes {stable_mosaic.version = 11 : i64} {
  func.func @_gin_layer_kernel(%arg0: i32, %arg1: i32, %arg2: memref<1xi32, #tpu.memory_space<smem>>, %arg3: memref<1xi32, #tpu.memory_space<smem>>, %arg4: memref<128x128xbf16, #tpu.memory_space<vmem>>, %arg5: memref<128x128xbf16, #tpu.memory_space<vmem>>, %arg6: memref<128x128xbf16, #tpu.memory_space<vmem>>, %arg7: memref<1x128xf32, #tpu.memory_space<vmem>>, %arg8: memref<128x128xbf16, #tpu.memory_space<vmem>>, %arg9: memref<1x128xf32, #tpu.memory_space<vmem>>, %arg10: memref<128x128xbf16, #tpu.memory_space<vmem>>, %arg11: memref<128x128xf32, #tpu.memory_space<vmem>>) attributes {dimension_semantics = [#tpu.dimension_semantics<parallel>, #tpu.dimension_semantics<arbitrary>], iteration_bounds = array<i64: 1, 1>, scalar_prefetch = 2 : i64, scratch_operands = 1 : i64, tpu.core_type = #tpu.core_type<tc>, window_params = [{transform_indices = @transform_0, window_bounds = array<i64: 128, 128>}, {transform_indices = @transform_1, window_bounds = array<i64: 128, 128>}, {pipeline_mode = #tpu.pipeline_mode<synchronous>, transform_indices = @transform_2, window_bounds = array<i64: 128, 128>}, {pipeline_mode = #tpu.pipeline_mode<synchronous>, transform_indices = @transform_3, window_bounds = array<i64: 1, 128>}, {pipeline_mode = #tpu.pipeline_mode<synchronous>, transform_indices = @transform_4, window_bounds = array<i64: 128, 128>}, {pipeline_mode = #tpu.pipeline_mode<synchronous>, transform_indices = @transform_5, window_bounds = array<i64: 1, 128>}, {transform_indices = @transform_6, window_bounds = array<i64: 128, 128>}]} {
    %c0_i32 = arith.constant 0 : i32
    %0 = arith.cmpi eq, %arg1, %c0_i32 : i32
    %1 = arith.extui %0 : i1 to i32
    %c0_i32_0 = arith.constant 0 : i32
    %2 = arith.cmpi ne, %1, %c0_i32_0 : i32
    scf.if %2 {
      %cst = arith.constant 0.000000e+00 : f32
      %11 = vector.broadcast %cst : f32 to vector<128x128xf32>
      %c0 = arith.constant 0 : index
      %c0_4 = arith.constant 0 : index
      %12 = vector.load %arg11[%c0, %c0_4] : memref<128x128xf32, #tpu.memory_space<vmem>>, vector<128x128xf32>
      tpu.vector_store %arg11[%c0, %c0_4], %11 {strides = array<i32>} : memref<128x128xf32, #tpu.memory_space<vmem>>, vector<128x128xf32>,
    } else {
    }
    %3 = arith.index_cast %arg0 : i32 to index
    %4 = memref.load %arg3[%3] : memref<1xi32, #tpu.memory_space<smem>>
    %5 = arith.cmpi slt, %arg1, %4 : i32
    %6 = arith.extui %5 : i1 to i32
    %c0_i32_1 = arith.constant 0 : i32
    %7 = arith.cmpi ne, %6, %c0_i32_1 : i32
    scf.if %7 {
      %c0 = arith.constant 0 : index
      %c0_4 = arith.constant 0 : index
      %11 = vector.load %arg11[%c0, %c0_4] : memref<128x128xf32, #tpu.memory_space<vmem>>, vector<128x128xf32>
      %c0_5 = arith.constant 0 : index
      %c0_6 = arith.constant 0 : index
      %12 = vector.load %arg4[%c0_5, %c0_6] : memref<128x128xbf16, #tpu.memory_space<vmem>>, vector<128x128xbf16>
      %c0_7 = arith.constant 0 : index
      %c0_8 = arith.constant 0 : index
      %13 = vector.load %arg5[%c0_7, %c0_8] : memref<128x128xbf16, #tpu.memory_space<vmem>>, vector<128x128xbf16>
      %cst = arith.constant dense<0.000000e+00> : vector<128x128xf32>
      %14 = tpu.matmul %12, %13, %cst {dimension_numbers = #tpu.dot_dimension_numbers<[1], [0], [0], [1], [0, 0, 1, 1], [], []>} : vector<128x128xbf16>, vector<128x128xbf16>, vector<128x128xf32> -> vector<128x128xf32>
      %15 = arith.addf %11, %14 : vector<128x128xf32>
      %c0_9 = arith.constant 0 : index
      %c0_10 = arith.constant 0 : index
      %16 = vector.load %arg11[%c0_9, %c0_10] : memref<128x128xf32, #tpu.memory_space<vmem>>, vector<128x128xf32>
      tpu.vector_store %arg11[%c0_9, %c0_10], %15 {strides = array<i32>} : memref<128x128xf32, #tpu.memory_space<vmem>>, vector<128x128xf32>,
    } else {
    }
    %c0_i32_2 = arith.constant 0 : i32
    %8 = arith.cmpi eq, %arg1, %c0_i32_2 : i32
    %9 = arith.extui %8 : i1 to i32
    %c0_i32_3 = arith.constant 0 : i32
    %10 = arith.cmpi ne, %9, %c0_i32_3 : i32
    scf.if %10 {
      %c0 = arith.constant 0 : index
      %c0_4 = arith.constant 0 : index
      %11 = vector.load %arg11[%c0, %c0_4] : memref<128x128xf32, #tpu.memory_space<vmem>>, vector<128x128xf32>
      %12 = arith.truncf %11 : vector<128x128xf32> to vector<128x128xbf16>
      %c0_5 = arith.constant 0 : index
      %c0_6 = arith.constant 0 : index
      %13 = vector.load %arg6[%c0_5, %c0_6] : memref<128x128xbf16, #tpu.memory_space<vmem>>, vector<128x128xbf16>
      %cst = arith.constant dense<0.000000e+00> : vector<128x128xf32>
      %14 = tpu.matmul %12, %13, %cst {dimension_numbers = #tpu.dot_dimension_numbers<[1], [0], [0], [1], [0, 0, 1, 1], [], []>} : vector<128x128xbf16>, vector<128x128xbf16>, vector<128x128xf32> -> vector<128x128xf32>
      %c0_7 = arith.constant 0 : index
      %c0_8 = arith.constant 0 : index
      %15 = vector.load %arg7[%c0_7, %c0_8] : memref<1x128xf32, #tpu.memory_space<vmem>>, vector<1x128xf32>
      %16 = vector.broadcast %15 : vector<1x128xf32> to vector<128x128xf32>
      %17 = arith.addf %14, %16 : vector<128x128xf32>
      %cst_9 = arith.constant 0.000000e+00 : f32
      %18 = vector.broadcast %cst_9 : f32 to vector<128x128xf32>
      %19 = arith.maximumf %17, %18 : vector<128x128xf32>
      %20 = arith.truncf %19 : vector<128x128xf32> to vector<128x128xbf16>
      %c0_10 = arith.constant 0 : index
      %c0_11 = arith.constant 0 : index
      %21 = vector.load %arg8[%c0_10, %c0_11] : memref<128x128xbf16, #tpu.memory_space<vmem>>, vector<128x128xbf16>
      %cst_12 = arith.constant dense<0.000000e+00> : vector<128x128xf32>
      %22 = tpu.matmul %20, %21, %cst_12 {dimension_numbers = #tpu.dot_dimension_numbers<[1], [0], [0], [1], [0, 0, 1, 1], [], []>} : vector<128x128xbf16>, vector<128x128xbf16>, vector<128x128xf32> -> vector<128x128xf32>
      %c0_13 = arith.constant 0 : index
      %c0_14 = arith.constant 0 : index
      %23 = vector.load %arg9[%c0_13, %c0_14] : memref<1x128xf32, #tpu.memory_space<vmem>>, vector<1x128xf32>
      %24 = vector.broadcast %23 : vector<1x128xf32> to vector<128x128xf32>
      %25 = arith.addf %22, %24 : vector<128x128xf32>
      %cst_15 = arith.constant 0.000000e+00 : f32
      %26 = vector.broadcast %cst_15 : f32 to vector<128x128xf32>
      %27 = arith.maximumf %25, %26 : vector<128x128xf32>
      %28 = arith.truncf %27 : vector<128x128xf32> to vector<128x128xbf16>
      %c0_16 = arith.constant 0 : index
      %c0_17 = arith.constant 0 : index
      %29 = vector.load %arg10[%c0_16, %c0_17] : memref<128x128xbf16, #tpu.memory_space<vmem>>, vector<128x128xbf16>
      tpu.vector_store %arg10[%c0_16, %c0_17], %28 {strides = array<i32>} : memref<128x128xbf16, #tpu.memory_space<vmem>>, vector<128x128xbf16>,
    } else {
    }
    return
  }
  func.func @transform_0(%arg0: i32, %arg1: i32, %arg2: memref<1xi32, #tpu.memory_space<smem>>, %arg3: memref<1xi32, #tpu.memory_space<smem>>) -> (i32, i32) {
    %c1_i32 = arith.constant 1 : i32
    %0 = arith.muli %arg0, %c1_i32 : i32
    %1 = arith.addi %0, %arg1 : i32
    %2 = arith.index_cast %1 : i32 to index
    %3 = memref.load %arg2[%2] : memref<1xi32, #tpu.memory_space<smem>>
    %c0_i32 = arith.constant 0 : i32
    return %arg0, %3 : i32, i32
  }
  func.func @transform_1(%arg0: i32, %arg1: i32, %arg2: memref<1xi32, #tpu.memory_space<smem>>, %arg3: memref<1xi32, #tpu.memory_space<smem>>) -> (i32, i32) {
    %c1_i32 = arith.constant 1 : i32
    %0 = arith.muli %arg0, %c1_i32 : i32
    %1 = arith.addi %0, %arg1 : i32
    %2 = arith.index_cast %1 : i32 to index
    %3 = memref.load %arg2[%2] : memref<1xi32, #tpu.memory_space<smem>>
    %c0_i32 = arith.constant 0 : i32
    %c0_i32_0 = arith.constant 0 : i32
    return %3, %c0_i32 : i32, i32
  }
  func.func @transform_2(%arg0: i32, %arg1: i32, %arg2: memref<1xi32, #tpu.memory_space<smem>>, %arg3: memref<1xi32, #tpu.memory_space<smem>>) -> (i32, i32) {
    %c0_i32 = arith.constant 0 : i32
    %c0_i32_0 = arith.constant 0 : i32
    %c0_i32_1 = arith.constant 0 : i32
    return %c0_i32, %c0_i32_0 : i32, i32
  }
  func.func @transform_3(%arg0: i32, %arg1: i32, %arg2: memref<1xi32, #tpu.memory_space<smem>>, %arg3: memref<1xi32, #tpu.memory_space<smem>>) -> (i32, i32) {
    %c0_i32 = arith.constant 0 : i32
    %c0_i32_0 = arith.constant 0 : i32
    %c0_i32_1 = arith.constant 0 : i32
    return %c0_i32, %c0_i32_0 : i32, i32
  }
  func.func @transform_4(%arg0: i32, %arg1: i32, %arg2: memref<1xi32, #tpu.memory_space<smem>>, %arg3: memref<1xi32, #tpu.memory_space<smem>>) -> (i32, i32) {
    %c0_i32 = arith.constant 0 : i32
    %c0_i32_0 = arith.constant 0 : i32
    %c0_i32_1 = arith.constant 0 : i32
    return %c0_i32, %c0_i32_0 : i32, i32
  }
  func.func @transform_5(%arg0: i32, %arg1: i32, %arg2: memref<1xi32, #tpu.memory_space<smem>>, %arg3: memref<1xi32, #tpu.memory_space<smem>>) -> (i32, i32) {
    %c0_i32 = arith.constant 0 : i32
    %c0_i32_0 = arith.constant 0 : i32
    %c0_i32_1 = arith.constant 0 : i32
    return %c0_i32, %c0_i32_0 : i32, i32
  }
  func.func @transform_6(%arg0: i32, %arg1: i32, %arg2: memref<1xi32, #tpu.memory_space<smem>>, %arg3: memref<1xi32, #tpu.memory_space<smem>>) -> (i32, i32) {
    %c0_i32 = arith.constant 0 : i32
    %c0_i32_0 = arith.constant 0 : i32
    return %arg0, %c0_i32 : i32, i32
  }
}

module attributes {stable_mosaic.version = 11 : i64} {
  func.func @_ff_local_kernel(%arg0: i32, %arg1: memref<128x128xbf16, #tpu.memory_space<vmem>>, %arg2: memref<128x128xbf16, #tpu.memory_space<vmem>>, %arg3: memref<256x128xbf16, #tpu.memory_space<vmem>>, %arg4: memref<1x128xf32, #tpu.memory_space<vmem>>, %arg5: memref<128x128xbf16, #tpu.memory_space<vmem>>, %arg6: memref<1x128xf32, #tpu.memory_space<vmem>>, %arg7: memref<128x128xbf16, #tpu.memory_space<vmem>>, %arg8: memref<1x128xf32, #tpu.memory_space<vmem>>, %arg9: memref<256x128xbf16, #tpu.memory_space<vmem>>, %arg10: memref<1x128xf32, #tpu.memory_space<vmem>>, %arg11: memref<128x128xf32, #tpu.memory_space<vmem>>) attributes {dimension_semantics = [#tpu.dimension_semantics<parallel>], iteration_bounds = array<i64: 1>, scalar_prefetch = 0 : i64, scratch_operands = 0 : i64, tpu.core_type = #tpu.core_type<tc>, window_params = [{transform_indices = @transform_0, window_bounds = array<i64: 128, 128>}, {transform_indices = @transform_1, window_bounds = array<i64: 128, 128>}, {pipeline_mode = #tpu.pipeline_mode<synchronous>, transform_indices = @transform_2, window_bounds = array<i64: 256, 128>}, {pipeline_mode = #tpu.pipeline_mode<synchronous>, transform_indices = @transform_3, window_bounds = array<i64: 1, 128>}, {pipeline_mode = #tpu.pipeline_mode<synchronous>, transform_indices = @transform_4, window_bounds = array<i64: 128, 128>}, {pipeline_mode = #tpu.pipeline_mode<synchronous>, transform_indices = @transform_5, window_bounds = array<i64: 1, 128>}, {pipeline_mode = #tpu.pipeline_mode<synchronous>, transform_indices = @transform_6, window_bounds = array<i64: 128, 128>}, {pipeline_mode = #tpu.pipeline_mode<synchronous>, transform_indices = @transform_7, window_bounds = array<i64: 1, 128>}, {pipeline_mode = #tpu.pipeline_mode<synchronous>, transform_indices = @transform_8, window_bounds = array<i64: 256, 128>}, {pipeline_mode = #tpu.pipeline_mode<synchronous>, transform_indices = @transform_9, window_bounds = array<i64: 1, 128>}, {transform_indices = @transform_10, window_bounds = array<i64: 128, 128>}]} {
    %c0 = arith.constant 0 : index
    %c0_0 = arith.constant 0 : index
    %0 = vector.load %arg1[%c0, %c0_0] : memref<128x128xbf16, #tpu.memory_space<vmem>>, vector<128x128xbf16>
    %c0_1 = arith.constant 0 : index
    %c0_2 = arith.constant 0 : index
    %1 = vector.load %arg2[%c0_1, %c0_2] : memref<128x128xbf16, #tpu.memory_space<vmem>>, vector<128x128xbf16>
    %c0_3 = arith.constant 0 : index
    %c0_4 = arith.constant 0 : index
    %2 = vector.load %arg3[%c0_3, %c0_4] : memref<256x128xbf16, #tpu.memory_space<vmem>>, vector<128x128xbf16>
    %cst = arith.constant dense<0.000000e+00> : vector<128x128xf32>
    %3 = tpu.matmul %0, %2, %cst {dimension_numbers = #tpu.dot_dimension_numbers<[1], [0], [0], [1], [0, 0, 1, 1], [], []>} : vector<128x128xbf16>, vector<128x128xbf16>, vector<128x128xf32> -> vector<128x128xf32>
    %c0_5 = arith.constant 0 : index
    %c0_6 = arith.constant 0 : index
    %4 = vector.load %arg9[%c0_5, %c0_6] : memref<256x128xbf16, #tpu.memory_space<vmem>>, vector<128x128xbf16>
    %cst_7 = arith.constant dense<0.000000e+00> : vector<128x128xf32>
    %5 = tpu.matmul %0, %4, %cst_7 {dimension_numbers = #tpu.dot_dimension_numbers<[1], [0], [0], [1], [0, 0, 1, 1], [], []>} : vector<128x128xbf16>, vector<128x128xbf16>, vector<128x128xf32> -> vector<128x128xf32>
    %c128 = arith.constant 128 : index
    %c0_8 = arith.constant 0 : index
    %6 = vector.load %arg3[%c128, %c0_8] : memref<256x128xbf16, #tpu.memory_space<vmem>>, vector<128x128xbf16>
    %cst_9 = arith.constant dense<0.000000e+00> : vector<128x128xf32>
    %7 = tpu.matmul %1, %6, %cst_9 {dimension_numbers = #tpu.dot_dimension_numbers<[1], [0], [0], [1], [0, 0, 1, 1], [], []>} : vector<128x128xbf16>, vector<128x128xbf16>, vector<128x128xf32> -> vector<128x128xf32>
    %c128_10 = arith.constant 128 : index
    %c0_11 = arith.constant 0 : index
    %8 = vector.load %arg9[%c128_10, %c0_11] : memref<256x128xbf16, #tpu.memory_space<vmem>>, vector<128x128xbf16>
    %cst_12 = arith.constant dense<0.000000e+00> : vector<128x128xf32>
    %9 = tpu.matmul %1, %8, %cst_12 {dimension_numbers = #tpu.dot_dimension_numbers<[1], [0], [0], [1], [0, 0, 1, 1], [], []>} : vector<128x128xbf16>, vector<128x128xbf16>, vector<128x128xf32> -> vector<128x128xf32>
    %10 = arith.addf %3, %7 : vector<128x128xf32>
    %11 = arith.addf %5, %9 : vector<128x128xf32>
    %c0_13 = arith.constant 0 : index
    %c0_14 = arith.constant 0 : index
    %12 = vector.load %arg4[%c0_13, %c0_14] : memref<1x128xf32, #tpu.memory_space<vmem>>, vector<1x128xf32>
    %13 = vector.broadcast %12 : vector<1x128xf32> to vector<128x128xf32>
    %14 = arith.addf %10, %13 : vector<128x128xf32>
    %cst_15 = arith.constant 0.000000e+00 : f32
    %15 = vector.broadcast %cst_15 : f32 to vector<128x128xf32>
    %16 = arith.maximumf %14, %15 : vector<128x128xf32>
    %17 = arith.truncf %16 : vector<128x128xf32> to vector<128x128xbf16>
    %c0_16 = arith.constant 0 : index
    %c0_17 = arith.constant 0 : index
    %18 = vector.load %arg5[%c0_16, %c0_17] : memref<128x128xbf16, #tpu.memory_space<vmem>>, vector<128x128xbf16>
    %cst_18 = arith.constant dense<0.000000e+00> : vector<128x128xf32>
    %19 = tpu.matmul %17, %18, %cst_18 {dimension_numbers = #tpu.dot_dimension_numbers<[1], [0], [0], [1], [0, 0, 1, 1], [], []>} : vector<128x128xbf16>, vector<128x128xbf16>, vector<128x128xf32> -> vector<128x128xf32>
    %c0_19 = arith.constant 0 : index
    %c0_20 = arith.constant 0 : index
    %20 = vector.load %arg6[%c0_19, %c0_20] : memref<1x128xf32, #tpu.memory_space<vmem>>, vector<1x128xf32>
    %21 = vector.broadcast %20 : vector<1x128xf32> to vector<128x128xf32>
    %22 = arith.addf %19, %21 : vector<128x128xf32>
    %cst_21 = arith.constant 0.000000e+00 : f32
    %23 = vector.broadcast %cst_21 : f32 to vector<128x128xf32>
    %24 = arith.maximumf %22, %23 : vector<128x128xf32>
    %25 = arith.truncf %24 : vector<128x128xf32> to vector<128x128xbf16>
    %c0_22 = arith.constant 0 : index
    %c0_23 = arith.constant 0 : index
    %26 = vector.load %arg7[%c0_22, %c0_23] : memref<128x128xbf16, #tpu.memory_space<vmem>>, vector<128x128xbf16>
    %cst_24 = arith.constant dense<0.000000e+00> : vector<128x128xf32>
    %27 = tpu.matmul %25, %26, %cst_24 {dimension_numbers = #tpu.dot_dimension_numbers<[1], [0], [0], [1], [0, 0, 1, 1], [], []>} : vector<128x128xbf16>, vector<128x128xbf16>, vector<128x128xf32> -> vector<128x128xf32>
    %c0_25 = arith.constant 0 : index
    %c0_26 = arith.constant 0 : index
    %28 = vector.load %arg8[%c0_25, %c0_26] : memref<1x128xf32, #tpu.memory_space<vmem>>, vector<1x128xf32>
    %29 = vector.broadcast %28 : vector<1x128xf32> to vector<128x128xf32>
    %30 = arith.addf %27, %29 : vector<128x128xf32>
    %cst_27 = arith.constant 0.000000e+00 : f32
    %31 = vector.broadcast %cst_27 : f32 to vector<128x128xf32>
    %32 = arith.maximumf %30, %31 : vector<128x128xf32>
    %33 = arith.addf %32, %11 : vector<128x128xf32>
    %c0_28 = arith.constant 0 : index
    %c0_29 = arith.constant 0 : index
    %34 = vector.load %arg10[%c0_28, %c0_29] : memref<1x128xf32, #tpu.memory_space<vmem>>, vector<1x128xf32>
    %35 = vector.broadcast %34 : vector<1x128xf32> to vector<128x128xf32>
    %36 = arith.addf %33, %35 : vector<128x128xf32>
    %c0_30 = arith.constant 0 : index
    %c0_31 = arith.constant 0 : index
    %37 = vector.load %arg11[%c0_30, %c0_31] : memref<128x128xf32, #tpu.memory_space<vmem>>, vector<128x128xf32>
    tpu.vector_store %arg11[%c0_30, %c0_31], %36 {strides = array<i32>} : memref<128x128xf32, #tpu.memory_space<vmem>>, vector<128x128xf32>,
    return
  }
  func.func @transform_0(%arg0: i32) -> (i32, i32) {
    %c0_i32 = arith.constant 0 : i32
    %c0_i32_0 = arith.constant 0 : i32
    return %arg0, %c0_i32 : i32, i32
  }
  func.func @transform_1(%arg0: i32) -> (i32, i32) {
    %c0_i32 = arith.constant 0 : i32
    %c0_i32_0 = arith.constant 0 : i32
    return %arg0, %c0_i32 : i32, i32
  }
  func.func @transform_2(%arg0: i32) -> (i32, i32) {
    %c0_i32 = arith.constant 0 : i32
    %c0_i32_0 = arith.constant 0 : i32
    %c0_i32_1 = arith.constant 0 : i32
    return %c0_i32, %c0_i32_0 : i32, i32
  }
  func.func @transform_3(%arg0: i32) -> (i32, i32) {
    %c0_i32 = arith.constant 0 : i32
    %c0_i32_0 = arith.constant 0 : i32
    %c0_i32_1 = arith.constant 0 : i32
    return %c0_i32, %c0_i32_0 : i32, i32
  }
  func.func @transform_4(%arg0: i32) -> (i32, i32) {
    %c0_i32 = arith.constant 0 : i32
    %c0_i32_0 = arith.constant 0 : i32
    %c0_i32_1 = arith.constant 0 : i32
    return %c0_i32, %c0_i32_0 : i32, i32
  }
  func.func @transform_5(%arg0: i32) -> (i32, i32) {
    %c0_i32 = arith.constant 0 : i32
    %c0_i32_0 = arith.constant 0 : i32
    %c0_i32_1 = arith.constant 0 : i32
    return %c0_i32, %c0_i32_0 : i32, i32
  }
  func.func @transform_6(%arg0: i32) -> (i32, i32) {
    %c0_i32 = arith.constant 0 : i32
    %c0_i32_0 = arith.constant 0 : i32
    %c0_i32_1 = arith.constant 0 : i32
    return %c0_i32, %c0_i32_0 : i32, i32
  }
  func.func @transform_7(%arg0: i32) -> (i32, i32) {
    %c0_i32 = arith.constant 0 : i32
    %c0_i32_0 = arith.constant 0 : i32
    %c0_i32_1 = arith.constant 0 : i32
    return %c0_i32, %c0_i32_0 : i32, i32
  }
  func.func @transform_8(%arg0: i32) -> (i32, i32) {
    %c0_i32 = arith.constant 0 : i32
    %c0_i32_0 = arith.constant 0 : i32
    %c0_i32_1 = arith.constant 0 : i32
    return %c0_i32, %c0_i32_0 : i32, i32
  }
  func.func @transform_9(%arg0: i32) -> (i32, i32) {
    %c0_i32 = arith.constant 0 : i32
    %c0_i32_0 = arith.constant 0 : i32
    %c0_i32_1 = arith.constant 0 : i32
    return %c0_i32, %c0_i32_0 : i32, i32
  }
  func.func @transform_10(%arg0: i32) -> (i32, i32) {
    %c0_i32 = arith.constant 0 : i32
    %c0_i32_0 = arith.constant 0 : i32
    return %arg0, %c0_i32 : i32, i32
  }
}

</mosaic_0001>

<llo_original>
// kernel: infograph_forward.7
$region0: #{infograph_forward.7}
  #allocation0 [shape = 'u32[]', space=smem, size = 0x4, offset = 0x4, fixed_abs, tag = 'smem constant byte address 0x4 - core index']
  #allocation1 [shape = 'u32[72,128]{1,0:T(1,128)}', space=vmem, size = 0x9000, scoped, tag = 'internal scratch']
  #allocation2 [shape = 'f32[8,256]{1,0:T(8,128)}', space=vmem, size = 0x2000, scoped, tag = 'scratch operand']
  %s0 = inlined_call_operand.vmem [shape: bf16[8,128], index: 0, kind: input, shape index: {}]
  %s1 = inlined_call_operand.vmem [shape: bf16[128,128], index: 1, kind: input, shape index: {}]
  %s2 = inlined_call_operand.vmem [shape: bf16[128,128], index: 2, kind: input, shape index: {}]
  %s3 = inlined_call_operand.hbm [shape: bf16[256,128], index: 3, kind: input, shape index: {}]
  %s4 = inlined_call_operand.vmem [shape: f32[1,128], index: 4, kind: input, shape index: {}]
  %s5 = inlined_call_operand.hbm [shape: bf16[128,128], index: 5, kind: input, shape index: {}]
  %s6 = inlined_call_operand.vmem [shape: f32[1,128], index: 6, kind: input, shape index: {}]
  %s7 = inlined_call_operand.hbm [shape: bf16[128,128], index: 7, kind: input, shape index: {}]
  %s8 = inlined_call_operand.vmem [shape: f32[1,128], index: 8, kind: input, shape index: {}]
  %s9 = inlined_call_operand.hbm [shape: bf16[256,128], index: 9, kind: input, shape index: {}]
  %s10 = inlined_call_operand.vmem [shape: f32[1,128], index: 10, kind: input, shape index: {}]
  %s11 = inlined_call_operand.hbm [shape: bf16[256,128], index: 11, kind: input, shape index: {}]
  %s12 = inlined_call_operand.vmem [shape: f32[1,128], index: 12, kind: input, shape index: {}]
  %s13 = inlined_call_operand.hbm [shape: f32[128,128], index: 13, kind: input, shape index: {}]
  %s14 = inlined_call_operand.vmem [shape: f32[1,128], index: 14, kind: input, shape index: {}]
  %s15 = inlined_call_operand.vmem [shape: f32[8,128], index: 15, kind: output, shape index: {0}]
  %s16 = inlined_call_operand.vmem [shape: f32[8,128], index: 16, kind: output, shape index: {1}]
  %s17 = inlined_call_operand.vmem [shape: f32[8,128], index: 17, kind: output, shape index: {2}]
  %18 = xla_tuple %s15, %s16, %s17
  %s19 = sld [smem:[#allocation0]]
  $region118: #{infograph_forward.7} parent=0
    _
  %s21 = ssub.s32 1, %s19
  %s22 = scalar_select 0, %s21, %s19
  $region1: #{infograph_forward.7} parent=0
    #allocation3 [shape = 'u8[65536]{0}', space=vmem, size = 0x10000, scoped, tag = 'input window, operand 3, single buffered']
    #allocation4 [shape = 's32[1]{0}', space=sflag, size = 0x4, scoped, tag = 'scoped memory for infograph_forward.7']
    #allocation5 [shape = 'u8[32768]{0}', space=vmem, size = 0x8000, scoped, tag = 'input window, operand 5, single buffered']
    #allocation6 [shape = 's32[1]{0}', space=sflag, size = 0x4, scoped, tag = 'scoped memory for infograph_forward.7']
    #allocation7 [shape = 'u8[32768]{0}', space=vmem, size = 0x8000, scoped, tag = 'input window, operand 7, single buffered']
    #allocation8 [shape = 'u8[65536]{0}', space=vmem, size = 0x10000, scoped, tag = 'input window, operand 9, single buffered']
    #allocation9 [shape = 's32[1]{0}', space=sflag, size = 0x4, scoped, tag = 'scoped memory for infograph_forward.7']
    #allocation10 [shape = 'u8[65536]{0}', space=vmem, size = 0x10000, scoped, tag = 'input window, operand 11, single buffered']
    #allocation11 [shape = 'u8[65536]{0}', space=vmem, size = 0x10000, scoped, tag = 'input window, operand 13, single buffered']
    #allocation12 [shape = 's32[1]{0}', space=sflag, size = 0x4, scoped, tag = 'scoped memory for infograph_forward.7']
    %23 = vsyncpa [#allocation4], 0
    %24 = vsyncpa [#allocation6], 0
    %25 = vsyncpa [#allocation9], 0
    %26 = vsyncpa [#allocation12], 0
    // Predicated region
    $region2: #{infograph_forward.7} parent=1 // pred_check
      _
    $region3: #{infograph_forward.7} parent=1 // pred_check_branch
      %28 = sbr.rel (0) target = $region5
    $region4: #{infograph_forward.7} parent=1 // pred_region
      _
    $region5: #{infograph_forward.7} parent=1 // pred_fallthru
      _
    // Predicated region
    $region6: #{infograph_forward.7} parent=1 // pred_check
      _
    $region7: #{infograph_forward.7} parent=1 // pred_check_branch
      %30 = sbr.rel (0) target = $region9
    $region8: #{infograph_forward.7} parent=1 // pred_region
      _
    $region9: #{infograph_forward.7} parent=1 // pred_fallthru
      _
    // Predicated region
    $region10: #{infograph_forward.7} parent=1 // pred_check
      _
    $region11: #{infograph_forward.7} parent=1 // pred_check_branch
      %32 = sbr.rel (0) target = $region13
    $region12: #{infograph_forward.7} parent=1 // pred_region
      _
    $region13: #{infograph_forward.7} parent=1 // pred_fallthru
      _
    // Predicated region
    $region14: #{infograph_forward.7} parent=1 // pred_check
      _
    $region15: #{infograph_forward.7} parent=1 // pred_check_branch
      %34 = sbr.rel (0) target = $region17
    $region16: #{infograph_forward.7} parent=1 // pred_region
      %36 = vsyncadd [#allocation4], 0
      %s37 = sshll.u32 %s3, 4
      %s38 = int_to_ptr.hbm [resolvable:$true] %s37
      %s39 = sshll.u32 [#allocation3], 4
      %s40 = int_to_ptr.vmem [resolvable:$true] %s39
      %45 = dma.hbm_to_vmem [thread:$0]  %s38, 2048, %s40, [#allocation4], 64, 64, 4
    $region17: #{infograph_forward.7} parent=1 // pred_fallthru
      _
    // Predicated region
    $region18: #{infograph_forward.7} parent=1 // pred_check
      _
    $region19: #{infograph_forward.7} parent=1 // pred_check_branch
      %47 = sbr.rel (0) target = $region21
    $region20: #{infograph_forward.7} parent=1 // pred_region
      _
    $region21: #{infograph_forward.7} parent=1 // pred_fallthru
      _
    // Predicated region
    $region22: #{infograph_forward.7} parent=1 // pred_check
      _
    $region23: #{infograph_forward.7} parent=1 // pred_check_branch
      %49 = sbr.rel (0) target = $region25
    $region24: #{infograph_forward.7} parent=1 // pred_region
      %51 = vsyncadd [#allocation6], 0
      %s52 = sshll.u32 %s5, 4
      %s53 = int_to_ptr.hbm [resolvable:$true] %s52
      %s54 = sshll.u32 [#allocation5], 4
      %s55 = int_to_ptr.vmem [resolvable:$true] %s54
      %60 = dma.hbm_to_vmem [thread:$0]  %s53, 1024, %s55, [#allocation6], 64, 64, 4
    $region25: #{infograph_forward.7} parent=1 // pred_fallthru
      _
    // Predicated region
    $region26: #{infograph_forward.7} parent=1 // pred_check
      _
    $region27: #{infograph_forward.7} parent=1 // pred_check_branch
      %62 = sbr.rel (0) target = $region29
    $region28: #{infograph_forward.7} parent=1 // pred_region
      _
    $region29: #{infograph_forward.7} parent=1 // pred_fallthru
      _
    // Predicated region
    $region30: #{infograph_forward.7} parent=1 // pred_check
      _
    $region31: #{infograph_forward.7} parent=1 // pred_check_branch
      %64 = sbr.rel (0) target = $region33
    $region32: #{infograph_forward.7} parent=1 // pred_region
      %66 = vsyncadd [#allocation6], 0
      %s67 = sshll.u32 %s7, 4
      %s68 = int_to_ptr.hbm [resolvable:$true] %s67
      %s69 = sshll.u32 [#allocation7], 4
      %s70 = int_to_ptr.vmem [resolvable:$true] %s69
      %75 = dma.hbm_to_vmem [thread:$0]  %s68, 1024, %s70, [#allocation6], 64, 64, 4
    $region33: #{infograph_forward.7} parent=1 // pred_fallthru
      _
    // Predicated region
    $region34: #{infograph_forward.7} parent=1 // pred_check
      _
    $region35: #{infograph_forward.7} parent=1 // pred_check_branch
      %77 = sbr.rel (0) target = $region37
    $region36: #{infograph_forward.7} parent=1 // pred_region
      _
    $region37: #{infograph_forward.7} parent=1 // pred_fallthru
      _
    // Predicated region
    $region38: #{infograph_forward.7} parent=1 // pred_check
      _
    $region39: #{infograph_forward.7} parent=1 // pred_check_branch
      %79 = sbr.rel (0) target = $region41
    $region40: #{infograph_forward.7} parent=1 // pred_region
      %81 = vsyncadd [#allocation9], 0
      %s82 = sshll.u32 %s9, 4
      %s83 = int_to_ptr.hbm [resolvable:$true] %s82
      %s84 = sshll.u32 [#allocation8], 4
      %s85 = int_to_ptr.vmem [resolvable:$true] %s84
      %90 = dma.hbm_to_vmem [thread:$0]  %s83, 2048, %s85, [#allocation9], 64, 64, 4
    $region41: #{infograph_forward.7} parent=1 // pred_fallthru
      _
    // Predicated region
    $region42: #{infograph_forward.7} parent=1 // pred_check
      _
    $region43: #{infograph_forward.7} parent=1 // pred_check_branch
      %92 = sbr.rel (0) target = $region45
    $region44: #{infograph_forward.7} parent=1 // pred_region
      _
    $region45: #{infograph_forward.7} parent=1 // pred_fallthru
      _
    // Predicated region
    $region46: #{infograph_forward.7} parent=1 // pred_check
      _
    $region47: #{infograph_forward.7} parent=1 // pred_check_branch
      %94 = sbr.rel (0) target = $region49
    $region48: #{infograph_forward.7} parent=1 // pred_region
      %96 = vsyncadd [#allocation9], 0
      %s97 = sshll.u32 %s11, 4
      %s98 = int_to_ptr.hbm [resolvable:$true] %s97
      %s99 = sshll.u32 [#allocation10], 4
      %s100 = int_to_ptr.vmem [resolvable:$true] %s99
      %105 = dma.hbm_to_vmem [thread:$0]  %s98, 2048, %s100, [#allocation9], 64, 64, 4
    $region49: #{infograph_forward.7} parent=1 // pred_fallthru
      _
    // Predicated region
    $region50: #{infograph_forward.7} parent=1 // pred_check
      _
    $region51: #{infograph_forward.7} parent=1 // pred_check_branch
      %107 = sbr.rel (0) target = $region53
    $region52: #{infograph_forward.7} parent=1 // pred_region
      _
    $region53: #{infograph_forward.7} parent=1 // pred_fallthru
      _
    // Predicated region
    $region54: #{infograph_forward.7} parent=1 // pred_check
      _
    $region55: #{infograph_forward.7} parent=1 // pred_check_branch
      %109 = sbr.rel (0) target = $region57
    $region56: #{infograph_forward.7} parent=1 // pred_region
      %111 = vsyncadd [#allocation12], 0
      %s112 = sshll.u32 %s13, 4
      %s113 = int_to_ptr.hbm [resolvable:$true] %s112
      %s114 = sshll.u32 [#allocation11], 4
      %s115 = int_to_ptr.vmem [resolvable:$true] %s114
      %120 = dma.hbm_to_vmem [thread:$0]  %s113, 2048, %s115, [#allocation12], 128, 128, 8
    $region57: #{infograph_forward.7} parent=1 // pred_fallthru
      _
    // Predicated region
    $region58: #{infograph_forward.7} parent=1 // pred_check
      _
    $region59: #{infograph_forward.7} parent=1 // pred_check_branch
      %122 = sbr.rel (0) target = $region61
    $region60: #{infograph_forward.7} parent=1 // pred_region
      _
    $region61: #{infograph_forward.7} parent=1 // pred_fallthru
      _
    // Predicated region
    $region62: #{infograph_forward.7} parent=1 // pred_check
      _
    $region63: #{infograph_forward.7} parent=1 // pred_check_branch
      %124 = sbr.rel (0) target = $region65
    $region64: #{infograph_forward.7} parent=1 // pred_region
      %126 = dma.done [#allocation4], 2048
    $region65: #{infograph_forward.7} parent=1 // pred_fallthru
      _
    // Predicated region
    $region66: #{infograph_forward.7} parent=1 // pred_check
      _
    $region67: #{infograph_forward.7} parent=1 // pred_check_branch
      %128 = sbr.rel (0) target = $region69
    $region68: #{infograph_forward.7} parent=1 // pred_region
      %130 = dma.done [#allocation6], 1024
    $region69: #{infograph_forward.7} parent=1 // pred_fallthru
      _
    // Predicated region
    $region70: #{infograph_forward.7} parent=1 // pred_check
      _
    $region71: #{infograph_forward.7} parent=1 // pred_check_branch
      %132 = sbr.rel (0) target = $region73
    $region72: #{infograph_forward.7} parent=1 // pred_region
      %134 = dma.done [#allocation6], 1024
    $region73: #{infograph_forward.7} parent=1 // pred_fallthru
      _
    // Predicated region
    $region74: #{infograph_forward.7} parent=1 // pred_check
      _
    $region75: #{infograph_forward.7} parent=1 // pred_check_branch
      %136 = sbr.rel (0) target = $region77
    $region76: #{infograph_forward.7} parent=1 // pred_region
      %138 = dma.done [#allocation9], 2048
    $region77: #{infograph_forward.7} parent=1 // pred_fallthru
      _
    // Predicated region
    $region78: #{infograph_forward.7} parent=1 // pred_check
      _
    $region79: #{infograph_forward.7} parent=1 // pred_check_branch
      %140 = sbr.rel (0) target = $region81
    $region80: #{infograph_forward.7} parent=1 // pred_region
      %142 = dma.done [#allocation9], 2048
    $region81: #{infograph_forward.7} parent=1 // pred_fallthru
      _
    // Predicated region
    $region82: #{infograph_forward.7} parent=1 // pred_check
      _
    $region83: #{infograph_forward.7} parent=1 // pred_check_branch
      %144 = sbr.rel (0) target = $region85
    $region84: #{infograph_forward.7} parent=1 // pred_region
      %146 = dma.done [#allocation12], 2048
    $region85: #{infograph_forward.7} parent=1 // pred_fallthru
      _
    %p147 = scmp.eq.s32.totalorder 0, 0
    // Predicated region
    $region86: #{infograph_forward.7} parent=1 // pred_check
      %p148 = pneg %p147
    $region87: #{infograph_forward.7} parent=1 // pred_check_branch
      %150 = sbr.rel (%p148) target = $region89
    $region88: #{infograph_forward.7} parent=1 // pred_region
      %151 = vst [vmem:[#allocation2] sm:$0xff] 0.0
      %152 = vst [vmem:[#allocation2 + $0x8] sm:$0xff] 0.0
    $region89: #{infograph_forward.7} parent=1 // pred_fallthru
      _
    %v153 = vld [vmem:[%s0] sm:$0xf]
    %v154 = vld [vmem:[#allocation2] sm:$0xff]
    %v155 = vld [vmem:[%s1] sm:$0xf]
    %v156 = vld [vmem:[%s1 + $0x4] sm:$0xf]
    %v157 = vld [vmem:[%s1 + $0x8] sm:$0xf]
    %v158 = vld [vmem:[%s1 + $0xc] sm:$0xf]
    %v159 = vld [vmem:[%s1 + $0x10] sm:$0xf]
    %v160 = vld [vmem:[%s1 + $0x14] sm:$0xf]
    %v161 = vld [vmem:[%s1 + $0x18] sm:$0xf]
    %v162 = vld [vmem:[%s1 + $0x1c] sm:$0xf]
    %v163 = vld [vmem:[%s1 + $0x20] sm:$0xf]
    %v164 = vld [vmem:[%s1 + $0x24] sm:$0xf]
    %v165 = vld [vmem:[%s1 + $0x28] sm:$0xf]
    %v166 = vld [vmem:[%s1 + $0x2c] sm:$0xf]
    %v167 = vld [vmem:[%s1 + $0x30] sm:$0xf]
    %v168 = vld [vmem:[%s1 + $0x34] sm:$0xf]
    %v169 = vld [vmem:[%s1 + $0x38] sm:$0xf]
    %v170 = vld [vmem:[%s1 + $0x3c] sm:$0xf]
    %v187 = vunpack.c.l.b16 %v155
    %v188 = vunpack.c.l.b16 %v156
    %v189 = vunpack.c.l.b16 %v157
    %v190 = vunpack.c.l.b16 %v158
    %v191 = vunpack.c.l.b16 %v159
    %v192 = vunpack.c.l.b16 %v160
    %v193 = vunpack.c.l.b16 %v161
    %v194 = vunpack.c.l.b16 %v162
    %v195 = vunpack.c.l.b16 %v163
    %v196 = vunpack.c.l.b16 %v164
    %v197 = vunpack.c.l.b16 %v165
    %v198 = vunpack.c.l.b16 %v166
    %v199 = vunpack.c.l.b16 %v167
    %v200 = vunpack.c.l.b16 %v168
    %v201 = vunpack.c.l.b16 %v169
    %v202 = vunpack.c.l.b16 %v170
    %v203 = vpack.c.b16 %v188, %v187
    %v204 = vpack.c.b16 %v190, %v189
    %v205 = vpack.c.b16 %v192, %v191
    %v206 = vpack.c.b16 %v194, %v193
    %v207 = vpack.c.b16 %v196, %v195
    %v208 = vpack.c.b16 %v198, %v197
    %v209 = vpack.c.b16 %v200, %v199
    %v210 = vpack.c.b16 %v202, %v201
    %219 = vmatpush.bf16.msra.mxu0 %v210
    %220 = vmatpush.bf16.msra.mxu0 %v209
    %221 = vmatpush.bf16.msra.mxu0 %v208
    %222 = vmatpush.bf16.msra.mxu0 %v207
    %223 = vmatpush.bf16.msra.mxu0 %v206
    %224 = vmatpush.bf16.msra.mxu0 %v205
    %225 = vmatpush.bf16.msra.mxu0 %v204
    %226 = vmatpush.bf16.msra.mxu0 %v203
    %227 = vmatmul.bf16.gmra.mxu0 %v153
    %v228 = vpop.f32.mrf.mxu0
    %v229 = vadd.f32 0.0, %v228
    %v230 = vpop.f32.mrf.mxu0
    %231 = vdwg.mxu0
    %v232 = vadd.f32 %v154, %v229
    %233 = vst [vmem:[#allocation2] sm:$0xff] %v232
    %v234 = vld [vmem:[#allocation2 + $0x8] sm:$0xff]
    %v235 = vld [vmem:[%s2] sm:$0xf]
    %v236 = vld [vmem:[%s2 + $0x4] sm:$0xf]
    %v237 = vld [vmem:[%s2 + $0x8] sm:$0xf]
    %v238 = vld [vmem:[%s2 + $0xc] sm:$0xf]
    %v239 = vld [vmem:[%s2 + $0x10] sm:$0xf]
    %v240 = vld [vmem:[%s2 + $0x14] sm:$0xf]
    %v241 = vld [vmem:[%s2 + $0x18] sm:$0xf]
    %v242 = vld [vmem:[%s2 + $0x1c] sm:$0xf]
    %v243 = vld [vmem:[%s2 + $0x20] sm:$0xf]
    %v244 = vld [vmem:[%s2 + $0x24] sm:$0xf]
    %v245 = vld [vmem:[%s2 + $0x28] sm:$0xf]
    %v246 = vld [vmem:[%s2 + $0x2c] sm:$0xf]
    %v247 = vld [vmem:[%s2 + $0x30] sm:$0xf]
    %v248 = vld [vmem:[%s2 + $0x34] sm:$0xf]
    %v249 = vld [vmem:[%s2 + $0x38] sm:$0xf]
    %v250 = vld [vmem:[%s2 + $0x3c] sm:$0xf]
    %v267 = vunpack.c.l.b16 %v235
    %v268 = vunpack.c.l.b16 %v236
    %v269 = vunpack.c.l.b16 %v237
    %v270 = vunpack.c.l.b16 %v238
    %v271 = vunpack.c.l.b16 %v239
    %v272 = vunpack.c.l.b16 %v240
    %v273 = vunpack.c.l.b16 %v241
    %v274 = vunpack.c.l.b16 %v242
    %v275 = vunpack.c.l.b16 %v243
    %v276 = vunpack.c.l.b16 %v244
    %v277 = vunpack.c.l.b16 %v245
    %v278 = vunpack.c.l.b16 %v246
    %v279 = vunpack.c.l.b16 %v247
    %v280 = vunpack.c.l.b16 %v248
    %v281 = vunpack.c.l.b16 %v249
    %v282 = vunpack.c.l.b16 %v250
    %v283 = vpack.c.b16 %v268, %v267
    %v284 = vpack.c.b16 %v270, %v269
    %v285 = vpack.c.b16 %v272, %v271
    %v286 = vpack.c.b16 %v274, %v273
    %v287 = vpack.c.b16 %v276, %v275
    %v288 = vpack.c.b16 %v278, %v277
    %v289 = vpack.c.b16 %v280, %v279
    %v290 = vpack.c.b16 %v282, %v281
    %299 = vmatpush.bf16.msra.mxu0 %v290
    %300 = vmatpush.bf16.msra.mxu0 %v289
    %301 = vmatpush.bf16.msra.mxu0 %v288
    %302 = vmatpush.bf16.msra.mxu0 %v287
    %303 = vmatpush.bf16.msra.mxu0 %v286
    %304 = vmatpush.bf16.msra.mxu0 %v285
    %305 = vmatpush.bf16.msra.mxu0 %v284
    %306 = vmatpush.bf16.msra.mxu0 %v283
    %307 = vmatmul.bf16.gmra.mxu0 %v153
    %v308 = vpop.f32.mrf.mxu0
    %v309 = vadd.f32 0.0, %v308
    %v310 = vpop.f32.mrf.mxu0
    %311 = vdwg.mxu0
    %v312 = vadd.f32 %v234, %v309
    %313 = vst [vmem:[#allocation2 + $0x8] sm:$0xff] %v312
    // Predicated region
    $region90: #{infograph_forward.7} parent=1 // pred_check
      %p314 = pneg %p147
    $region91: #{infograph_forward.7} parent=1 // pred_check_branch
      %316 = sbr.rel (%p314) target = $region93
    $region92: #{infograph_forward.7} parent=1 // pred_region
      %v317 = vld [vmem:[#allocation2] sm:$0xff]
      %v318 = vld [vmem:[#allocation2 + $0x8] sm:$0xff]
      %v319 = vpack.c.bf16 %v317, %v317
      %v320 = vpack.c.bf16 %v318, %v318
      %v321 = vld [vmem:[#allocation3] sm:$0xf]
      %v322 = vld [vmem:[#allocation3 + $0x4] sm:$0xf]
      %v323 = vld [vmem:[#allocation3 + $0x8] sm:$0xf]
      %v324 = vld [vmem:[#allocation3 + $0xc] sm:$0xf]
      %v325 = vld [vmem:[#allocation3 + $0x10] sm:$0xf]
      %v326 = vld [vmem:[#allocation3 + $0x14] sm:$0xf]
      %v327 = vld [vmem:[#allocation3 + $0x18] sm:$0xf]
      %v328 = vld [vmem:[#allocation3 + $0x1c] sm:$0xf]
      %v329 = vld [vmem:[#allocation3 + $0x20] sm:$0xf]
      %v330 = vld [vmem:[#allocation3 + $0x24] sm:$0xf]
      %v331 = vld [vmem:[#allocation3 + $0x28] sm:$0xf]
      %v332 = vld [vmem:[#allocation3 + $0x2c] sm:$0xf]
      %v333 = vld [vmem:[#allocation3 + $0x30] sm:$0xf]
      %v334 = vld [vmem:[#allocation3 + $0x34] sm:$0xf]
      %v335 = vld [vmem:[#allocation3 + $0x38] sm:$0xf]
      %v336 = vld [vmem:[#allocation3 + $0x3c] sm:$0xf]
      %v337 = vld [vmem:[#allocation8] sm:$0xf]
      %v338 = vld [vmem:[#allocation8 + $0x4] sm:$0xf]
      %v339 = vld [vmem:[#allocation8 + $0x8] sm:$0xf]
      %v340 = vld [vmem:[#allocation8 + $0xc] sm:$0xf]
      %v341 = vld [vmem:[#allocation8 + $0x10] sm:$0xf]
      %v342 = vld [vmem:[#allocation8 + $0x14] sm:$0xf]
      %v343 = vld [vmem:[#allocation8 + $0x18] sm:$0xf]
      %v344 = vld [vmem:[#allocation8 + $0x1c] sm:$0xf]
      %v345 = vld [vmem:[#allocation8 + $0x20] sm:$0xf]
      %v346 = vld [vmem:[#allocation8 + $0x24] sm:$0xf]
      %v347 = vld [vmem:[#allocation8 + $0x28] sm:$0xf]
      %v348 = vld [vmem:[#allocation8 + $0x2c] sm:$0xf]
      %v349 = vld [vmem:[#allocation8 + $0x30] sm:$0xf]
      %v350 = vld [vmem:[#allocation8 + $0x34] sm:$0xf]
      %v351 = vld [vmem:[#allocation8 + $0x38] sm:$0xf]
      %v352 = vld [vmem:[#allocation8 + $0x3c] sm:$0xf]
      %v353 = vld [vmem:[#allocation3 + $0x40] sm:$0xf]
      %v354 = vld [vmem:[#allocation3 + $0x44] sm:$0xf]
      %v355 = vld [vmem:[#allocation3 + $0x48] sm:$0xf]
      %v356 = vld [vmem:[#allocation3 + $0x4c] sm:$0xf]
      %v357 = vld [vmem:[#allocation3 + $0x50] sm:$0xf]
      %v358 = vld [vmem:[#allocation3 + $0x54] sm:$0xf]
      %v359 = vld [vmem:[#allocation3 + $0x58] sm:$0xf]
      %v360 = vld [vmem:[#allocation3 + $0x5c] sm:$0xf]
      %v361 = vld [vmem:[#allocation3 + $0x60] sm:$0xf]
      %v362 = vld [vmem:[#allocation3 + $0x64] sm:$0xf]
      %v363 = vld [vmem:[#allocation3 + $0x68] sm:$0xf]
      %v364 = vld [vmem:[#allocation3 + $0x6c] sm:$0xf]
      %v365 = vld [vmem:[#allocation3 + $0x70] sm:$0xf]
      %v366 = vld [vmem:[#allocation3 + $0x74] sm:$0xf]
      %v367 = vld [vmem:[#allocation3 + $0x78] sm:$0xf]
      %v368 = vld [vmem:[#allocation3 + $0x7c] sm:$0xf]
      %v385 = vunpack.c.l.b16 %v353
      %v386 = vunpack.c.l.b16 %v354
      %v387 = vunpack.c.l.b16 %v355
      %v388 = vunpack.c.l.b16 %v356
      %v389 = vunpack.c.l.b16 %v357
      %v390 = vunpack.c.l.b16 %v358
      %v391 = vunpack.c.l.b16 %v359
      %v392 = vunpack.c.l.b16 %v360
      %v393 = vunpack.c.l.b16 %v361
      %v394 = vunpack.c.l.b16 %v362
      %v395 = vunpack.c.l.b16 %v363
      %v396 = vunpack.c.l.b16 %v364
      %v397 = vunpack.c.l.b16 %v365
      %v398 = vunpack.c.l.b16 %v366
      %v399 = vunpack.c.l.b16 %v367
      %v400 = vunpack.c.l.b16 %v368
      %v401 = vpack.c.b16 %v386, %v385
      %v402 = vpack.c.b16 %v388, %v387
      %v403 = vpack.c.b16 %v390, %v389
      %v404 = vpack.c.b16 %v392, %v391
      %v405 = vpack.c.b16 %v394, %v393
      %v406 = vpack.c.b16 %v396, %v395
      %v407 = vpack.c.b16 %v398, %v397
      %v408 = vpack.c.b16 %v400, %v399
      %417 = vmatpush.bf16.msra.mxu0 %v408
      %418 = vmatpush.bf16.msra.mxu0 %v407
      %419 = vmatpush.bf16.msra.mxu0 %v406
      %420 = vmatpush.bf16.msra.mxu0 %v405
      %421 = vmatpush.bf16.msra.mxu0 %v404
      %422 = vmatpush.bf16.msra.mxu0 %v403
      %423 = vmatpush.bf16.msra.mxu0 %v402
      %424 = vmatpush.bf16.msra.mxu0 %v401
      %425 = vmatmul.bf16.gmra.mxu0 %v320
      %v426 = vpop.f32.mrf.mxu0
      %v427 = vadd.f32 0.0, %v426
      %v428 = vpop.f32.mrf.mxu0
      %429 = vdwg.mxu0
      %v430 = vld [vmem:[#allocation8 + $0x40] sm:$0xf]
      %v431 = vld [vmem:[#allocation8 + $0x44] sm:$0xf]
      %v432 = vld [vmem:[#allocation8 + $0x48] sm:$0xf]
      %v433 = vld [vmem:[#allocation8 + $0x4c] sm:$0xf]
      %v434 = vld [vmem:[#allocation8 + $0x50] sm:$0xf]
      %v435 = vld [vmem:[#allocation8 + $0x54] sm:$0xf]
      %v436 = vld [vmem:[#allocation8 + $0x58] sm:$0xf]
      %v437 = vld [vmem:[#allocation8 + $0x5c] sm:$0xf]
      %v438 = vld [vmem:[#allocation8 + $0x60] sm:$0xf]
      %v439 = vld [vmem:[#allocation8 + $0x64] sm:$0xf]
      %v440 = vld [vmem:[#allocation8 + $0x68] sm:$0xf]
      %v441 = vld [vmem:[#allocation8 + $0x6c] sm:$0xf]
      %v442 = vld [vmem:[#allocation8 + $0x70] sm:$0xf]
      %v443 = vld [vmem:[#allocation8 + $0x74] sm:$0xf]
      %v444 = vld [vmem:[#allocation8 + $0x78] sm:$0xf]
      %v445 = vld [vmem:[#allocation8 + $0x7c] sm:$0xf]
      %v462 = vunpack.c.l.b16 %v430
      %v463 = vunpack.c.l.b16 %v431
      %v464 = vunpack.c.l.b16 %v432
      %v465 = vunpack.c.l.b16 %v433
      %v466 = vunpack.c.l.b16 %v434
      %v467 = vunpack.c.l.b16 %v435
      %v468 = vunpack.c.l.b16 %v436
      %v469 = vunpack.c.l.b16 %v437
      %v470 = vunpack.c.l.b16 %v438
      %v471 = vunpack.c.l.b16 %v439
      %v472 = vunpack.c.l.b16 %v440
      %v473 = vunpack.c.l.b16 %v441
      %v474 = vunpack.c.l.b16 %v442
      %v475 = vunpack.c.l.b16 %v443
      %v476 = vunpack.c.l.b16 %v444
      %v477 = vunpack.c.l.b16 %v445
      %v478 = vpack.c.b16 %v463, %v462
      %v479 = vpack.c.b16 %v465, %v464
      %v480 = vpack.c.b16 %v467, %v466
      %v481 = vpack.c.b16 %v469, %v468
      %v482 = vpack.c.b16 %v471, %v470
      %v483 = vpack.c.b16 %v473, %v472
      %v484 = vpack.c.b16 %v475, %v474
      %v485 = vpack.c.b16 %v477, %v476
      %494 = vmatpush.bf16.msra.mxu0 %v485
      %495 = vmatpush.bf16.msra.mxu0 %v484
      %496 = vmatpush.bf16.msra.mxu0 %v483
      %497 = vmatpush.bf16.msra.mxu0 %v482
      %498 = vmatpush.bf16.msra.mxu0 %v481
      %499 = vmatpush.bf16.msra.mxu0 %v480
      %500 = vmatpush.bf16.msra.mxu0 %v479
      %501 = vmatpush.bf16.msra.mxu0 %v478
      %502 = vmatmul.bf16.gmra.mxu0 %v320
      %v503 = vpop.f32.mrf.mxu0
      %v504 = vadd.f32 0.0, %v503
      %v505 = vpop.f32.mrf.mxu0
      %506 = vdwg.mxu0
      %v523 = vunpack.c.l.b16 %v321
      %v524 = vunpack.c.l.b16 %v322
      %v525 = vunpack.c.l.b16 %v323
      %v526 = vunpack.c.l.b16 %v324
      %v527 = vunpack.c.l.b16 %v325
      %v528 = vunpack.c.l.b16 %v326
      %v529 = vunpack.c.l.b16 %v327
      %v530 = vunpack.c.l.b16 %v328
      %v531 = vunpack.c.l.b16 %v329
      %v532 = vunpack.c.l.b16 %v330
      %v533 = vunpack.c.l.b16 %v331
      %v534 = vunpack.c.l.b16 %v332
      %v535 = vunpack.c.l.b16 %v333
      %v536 = vunpack.c.l.b16 %v334
      %v537 = vunpack.c.l.b16 %v335
      %v538 = vunpack.c.l.b16 %v336
      %v539 = vpack.c.b16 %v524, %v523
      %v540 = vpack.c.b16 %v526, %v525
      %v541 = vpack.c.b16 %v528, %v527
      %v542 = vpack.c.b16 %v530, %v529
      %v543 = vpack.c.b16 %v532, %v531
      %v544 = vpack.c.b16 %v534, %v533
      %v545 = vpack.c.b16 %v536, %v535
      %v546 = vpack.c.b16 %v538, %v537
      %555 = vmatpush.bf16.msra.mxu0 %v546
      %556 = vmatpush.bf16.msra.mxu0 %v545
      %557 = vmatpush.bf16.msra.mxu0 %v544
      %558 = vmatpush.bf16.msra.mxu0 %v543
      %559 = vmatpush.bf16.msra.mxu0 %v542
      %560 = vmatpush.bf16.msra.mxu0 %v541
      %561 = vmatpush.bf16.msra.mxu0 %v540
      %562 = vmatpush.bf16.msra.mxu0 %v539
      %563 = vmatmul.bf16.gmra.mxu0 %v319
      %v564 = vpop.f32.mrf.mxu0
      %v565 = vadd.f32 %v427, %v564
      %v566 = vpop.f32.mrf.mxu0
      %567 = vdwg.mxu0
      %v584 = vunpack.c.l.b16 %v337
      %v585 = vunpack.c.l.b16 %v338
      %v586 = vunpack.c.l.b16 %v339
      %v587 = vunpack.c.l.b16 %v340
      %v588 = vunpack.c.l.b16 %v341
      %v589 = vunpack.c.l.b16 %v342
      %v590 = vunpack.c.l.b16 %v343
      %v591 = vunpack.c.l.b16 %v344
      %v592 = vunpack.c.l.b16 %v345
      %v593 = vunpack.c.l.b16 %v346
      %v594 = vunpack.c.l.b16 %v347
      %v595 = vunpack.c.l.b16 %v348
      %v596 = vunpack.c.l.b16 %v349
      %v597 = vunpack.c.l.b16 %v350
      %v598 = vunpack.c.l.b16 %v351
      %v599 = vunpack.c.l.b16 %v352
      %v600 = vpack.c.b16 %v585, %v584
      %v601 = vpack.c.b16 %v587, %v586
      %v602 = vpack.c.b16 %v589, %v588
      %v603 = vpack.c.b16 %v591, %v590
      %v604 = vpack.c.b16 %v593, %v592
      %v605 = vpack.c.b16 %v595, %v594
      %v606 = vpack.c.b16 %v597, %v596
      %v607 = vpack.c.b16 %v599, %v598
      %616 = vmatpush.bf16.msra.mxu0 %v607
      %617 = vmatpush.bf16.msra.mxu0 %v606
      %618 = vmatpush.bf16.msra.mxu0 %v605
      %619 = vmatpush.bf16.msra.mxu0 %v604
      %620 = vmatpush.bf16.msra.mxu0 %v603
      %621 = vmatpush.bf16.msra.mxu0 %v602
      %622 = vmatpush.bf16.msra.mxu0 %v601
      %623 = vmatpush.bf16.msra.mxu0 %v600
      %624 = vmatmul.bf16.gmra.mxu0 %v319
      %v625 = vpop.f32.mrf.mxu0
      %v626 = vadd.f32 %v504, %v625
      %v627 = vpop.f32.mrf.mxu0
      %628 = vdwg.mxu0
      %v629 = vld [vmem:[%s4] sm:$0x1]
      %v631 = vperm.slane %v629, 0
      %v633 = vadd.f32 %v565, %v631
      %v634 = vmax.f32 %v633, 0.0
      %v635 = vpack.c.bf16 %v634, %v634
      %v636 = vld [vmem:[#allocation5] sm:$0xf]
      %v637 = vld [vmem:[#allocation5 + $0x4] sm:$0xf]
      %v638 = vld [vmem:[#allocation5 + $0x8] sm:$0xf]
      %v639 = vld [vmem:[#allocation5 + $0xc] sm:$0xf]
      %v640 = vld [vmem:[#allocation5 + $0x10] sm:$0xf]
      %v641 = vld [vmem:[#allocation5 + $0x14] sm:$0xf]
      %v642 = vld [vmem:[#allocation5 + $0x18] sm:$0xf]
      %v643 = vld [vmem:[#allocation5 + $0x1c] sm:$0xf]
      %v644 = vld [vmem:[#allocation5 + $0x20] sm:$0xf]
      %v645 = vld [vmem:[#allocation5 + $0x24] sm:$0xf]
      %v646 = vld [vmem:[#allocation5 + $0x28] sm:$0xf]
      %v647 = vld [vmem:[#allocation5 + $0x2c] sm:$0xf]
      %v648 = vld [vmem:[#allocation5 + $0x30] sm:$0xf]
      %v649 = vld [vmem:[#allocation5 + $0x34] sm:$0xf]
      %v650 = vld [vmem:[#allocation5 + $0x38] sm:$0xf]
      %v651 = vld [vmem:[#allocation5 + $0x3c] sm:$0xf]
      %v652 = vld [vmem:[%s6] sm:$0x1]
      %v654 = vperm.slane %v652, 0
      %v672 = vunpack.c.l.b16 %v636
      %v673 = vunpack.c.l.b16 %v637
      %v674 = vunpack.c.l.b16 %v638
      %v675 = vunpack.c.l.b16 %v639
      %v676 = vunpack.c.l.b16 %v640
      %v677 = vunpack.c.l.b16 %v641
      %v678 = vunpack.c.l.b16 %v642
      %v679 = vunpack.c.l.b16 %v643
      %v680 = vunpack.c.l.b16 %v644
      %v681 = vunpack.c.l.b16 %v645
      %v682 = vunpack.c.l.b16 %v646
      %v683 = vunpack.c.l.b16 %v647
      %v684 = vunpack.c.l.b16 %v648
      %v685 = vunpack.c.l.b16 %v649
      %v686 = vunpack.c.l.b16 %v650
      %v687 = vunpack.c.l.b16 %v651
      %v688 = vpack.c.b16 %v673, %v672
      %v689 = vpack.c.b16 %v675, %v674
      %v690 = vpack.c.b16 %v677, %v676
      %v691 = vpack.c.b16 %v679, %v678
      %v692 = vpack.c.b16 %v681, %v680
      %v693 = vpack.c.b16 %v683, %v682
      %v694 = vpack.c.b16 %v685, %v684
      %v695 = vpack.c.b16 %v687, %v686
      %704 = vmatpush.bf16.msra.mxu0 %v695
      %705 = vmatpush.bf16.msra.mxu0 %v694
      %706 = vmatpush.bf16.msra.mxu0 %v693
      %707 = vmatpush.bf16.msra.mxu0 %v692
      %708 = vmatpush.bf16.msra.mxu0 %v691
      %709 = vmatpush.bf16.msra.mxu0 %v690
      %710 = vmatpush.bf16.msra.mxu0 %v689
      %711 = vmatpush.bf16.msra.mxu0 %v688
      %712 = vmatmul.bf16.gmra.mxu0 %v635
      %v713 = vpop.f32.mrf.mxu0
      %v714 = vadd.f32 %v654, %v713
      %v715 = vpop.f32.mrf.mxu0
      %716 = vdwg.mxu0
      %v717 = vmax.f32 %v714, 0.0
      %v718 = vpack.c.bf16 %v717, %v717
      %v719 = vld [vmem:[#allocation7] sm:$0xf]
      %v720 = vld [vmem:[#allocation7 + $0x4] sm:$0xf]
      %v721 = vld [vmem:[#allocation7 + $0x8] sm:$0xf]
      %v722 = vld [vmem:[#allocation7 + $0xc] sm:$0xf]
      %v723 = vld [vmem:[#allocation7 + $0x10] sm:$0xf]
      %v724 = vld [vmem:[#allocation7 + $0x14] sm:$0xf]
      %v725 = vld [vmem:[#allocation7 + $0x18] sm:$0xf]
      %v726 = vld [vmem:[#allocation7 + $0x1c] sm:$0xf]
      %v727 = vld [vmem:[#allocation7 + $0x20] sm:$0xf]
      %v728 = vld [vmem:[#allocation7 + $0x24] sm:$0xf]
      %v729 = vld [vmem:[#allocation7 + $0x28] sm:$0xf]
      %v730 = vld [vmem:[#allocation7 + $0x2c] sm:$0xf]
      %v731 = vld [vmem:[#allocation7 + $0x30] sm:$0xf]
      %v732 = vld [vmem:[#allocation7 + $0x34] sm:$0xf]
      %v733 = vld [vmem:[#allocation7 + $0x38] sm:$0xf]
      %v734 = vld [vmem:[#allocation7 + $0x3c] sm:$0xf]
      %v735 = vld [vmem:[%s8] sm:$0x1]
      %v737 = vperm.slane %v735, 0
      %v755 = vunpack.c.l.b16 %v719
      %v756 = vunpack.c.l.b16 %v720
      %v757 = vunpack.c.l.b16 %v721
      %v758 = vunpack.c.l.b16 %v722
      %v759 = vunpack.c.l.b16 %v723
      %v760 = vunpack.c.l.b16 %v724
      %v761 = vunpack.c.l.b16 %v725
      %v762 = vunpack.c.l.b16 %v726
      %v763 = vunpack.c.l.b16 %v727
      %v764 = vunpack.c.l.b16 %v728
      %v765 = vunpack.c.l.b16 %v729
      %v766 = vunpack.c.l.b16 %v730
      %v767 = vunpack.c.l.b16 %v731
      %v768 = vunpack.c.l.b16 %v732
      %v769 = vunpack.c.l.b16 %v733
      %v770 = vunpack.c.l.b16 %v734
      %v771 = vpack.c.b16 %v756, %v755
      %v772 = vpack.c.b16 %v758, %v757
      %v773 = vpack.c.b16 %v760, %v759
      %v774 = vpack.c.b16 %v762, %v761
      %v775 = vpack.c.b16 %v764, %v763
      %v776 = vpack.c.b16 %v766, %v765
      %v777 = vpack.c.b16 %v768, %v767
      %v778 = vpack.c.b16 %v770, %v769
      %787 = vmatpush.bf16.msra.mxu0 %v778
      %788 = vmatpush.bf16.msra.mxu0 %v777
      %789 = vmatpush.bf16.msra.mxu0 %v776
      %790 = vmatpush.bf16.msra.mxu0 %v775
      %791 = vmatpush.bf16.msra.mxu0 %v774
      %792 = vmatpush.bf16.msra.mxu0 %v773
      %793 = vmatpush.bf16.msra.mxu0 %v772
      %794 = vmatpush.bf16.msra.mxu0 %v771
      %795 = vmatmul.bf16.gmra.mxu0 %v718
      %v796 = vpop.f32.mrf.mxu0
      %v797 = vadd.f32 %v737, %v796
      %v798 = vpop.f32.mrf.mxu0
      %799 = vdwg.mxu0
      %v800 = vmax.f32 %v797, 0.0
      %v801 = vadd.f32 %v800, %v626
      %v802 = vld [vmem:[%s10] sm:$0x1]
      %v804 = vperm.slane %v802, 0
      %v806 = vadd.f32 %v801, %v804
      %807 = vst [vmem:[%s15] sm:$0xff] %v806
      %v808 = vld [vmem:[#allocation10] sm:$0xf]
      %v809 = vld [vmem:[#allocation10 + $0x4] sm:$0xf]
      %v810 = vld [vmem:[#allocation10 + $0x8] sm:$0xf]
      %v811 = vld [vmem:[#allocation10 + $0xc] sm:$0xf]
      %v812 = vld [vmem:[#allocation10 + $0x10] sm:$0xf]
      %v813 = vld [vmem:[#allocation10 + $0x14] sm:$0xf]
      %v814 = vld [vmem:[#allocation10 + $0x18] sm:$0xf]
      %v815 = vld [vmem:[#allocation10 + $0x1c] sm:$0xf]
      %v816 = vld [vmem:[#allocation10 + $0x20] sm:$0xf]
      %v817 = vld [vmem:[#allocation10 + $0x24] sm:$0xf]
      %v818 = vld [vmem:[#allocation10 + $0x28] sm:$0xf]
      %v819 = vld [vmem:[#allocation10 + $0x2c] sm:$0xf]
      %v820 = vld [vmem:[#allocation10 + $0x30] sm:$0xf]
      %v821 = vld [vmem:[#allocation10 + $0x34] sm:$0xf]
      %v822 = vld [vmem:[#allocation10 + $0x38] sm:$0xf]
      %v823 = vld [vmem:[#allocation10 + $0x3c] sm:$0xf]
      %v824 = vld [vmem:[#allocation10 + $0x40] sm:$0xf]
      %v825 = vld [vmem:[#allocation10 + $0x44] sm:$0xf]
      %v826 = vld [vmem:[#allocation10 + $0x48] sm:$0xf]
      %v827 = vld [vmem:[#allocation10 + $0x4c] sm:$0xf]
      %v828 = vld [vmem:[#allocation10 + $0x50] sm:$0xf]
      %v829 = vld [vmem:[#allocation10 + $0x54] sm:$0xf]
      %v830 = vld [vmem:[#allocation10 + $0x58] sm:$0xf]
      %v831 = vld [vmem:[#allocation10 + $0x5c] sm:$0xf]
      %v832 = vld [vmem:[#allocation10 + $0x60] sm:$0xf]
      %v833 = vld [vmem:[#allocation10 + $0x64] sm:$0xf]
      %v834 = vld [vmem:[#allocation10 + $0x68] sm:$0xf]
      %v835 = vld [vmem:[#allocation10 + $0x6c] sm:$0xf]
      %v836 = vld [vmem:[#allocation10 + $0x70] sm:$0xf]
      %v837 = vld [vmem:[#allocation10 + $0x74] sm:$0xf]
      %v838 = vld [vmem:[#allocation10 + $0x78] sm:$0xf]
      %v839 = vld [vmem:[#allocation10 + $0x7c] sm:$0xf]
      %v856 = vunpack.c.l.b16 %v824
      %v857 = vunpack.c.l.b16 %v825
      %v858 = vunpack.c.l.b16 %v826
      %v859 = vunpack.c.l.b16 %v827
      %v860 = vunpack.c.l.b16 %v828
      %v861 = vunpack.c.l.b16 %v829
      %v862 = vunpack.c.l.b16 %v830
      %v863 = vunpack.c.l.b16 %v831
      %v864 = vunpack.c.l.b16 %v832
      %v865 = vunpack.c.l.b16 %v833
      %v866 = vunpack.c.l.b16 %v834
      %v867 = vunpack.c.l.b16 %v835
      %v868 = vunpack.c.l.b16 %v836
      %v869 = vunpack.c.l.b16 %v837
      %v870 = vunpack.c.l.b16 %v838
      %v871 = vunpack.c.l.b16 %v839
      %v872 = vpack.c.b16 %v857, %v856
      %v873 = vpack.c.b16 %v859, %v858
      %v874 = vpack.c.b16 %v861, %v860
      %v875 = vpack.c.b16 %v863, %v862
      %v876 = vpack.c.b16 %v865, %v864
      %v877 = vpack.c.b16 %v867, %v866
      %v878 = vpack.c.b16 %v869, %v868
      %v879 = vpack.c.b16 %v871, %v870
      %888 = vmatpush.bf16.msra.mxu0 %v879
      %889 = vmatpush.bf16.msra.mxu0 %v878
      %890 = vmatpush.bf16.msra.mxu0 %v877
      %891 = vmatpush.bf16.msra.mxu0 %v876
      %892 = vmatpush.bf16.msra.mxu0 %v875
      %893 = vmatpush.bf16.msra.mxu0 %v874
      %894 = vmatpush.bf16.msra.mxu0 %v873
      %895 = vmatpush.bf16.msra.mxu0 %v872
      %896 = vmatmul.bf16.gmra.mxu0 %v320
      %v897 = vpop.f32.mrf.mxu0
      %v898 = vadd.f32 0.0, %v897
      %v899 = vpop.f32.mrf.mxu0
      %900 = vdwg.mxu0
      %v917 = vunpack.c.l.b16 %v808
      %v918 = vunpack.c.l.b16 %v809
      %v919 = vunpack.c.l.b16 %v810
      %v920 = vunpack.c.l.b16 %v811
      %v921 = vunpack.c.l.b16 %v812
      %v922 = vunpack.c.l.b16 %v813
      %v923 = vunpack.c.l.b16 %v814
      %v924 = vunpack.c.l.b16 %v815
      %v925 = vunpack.c.l.b16 %v816
      %v926 = vunpack.c.l.b16 %v817
      %v927 = vunpack.c.l.b16 %v818
      %v928 = vunpack.c.l.b16 %v819
      %v929 = vunpack.c.l.b16 %v820
      %v930 = vunpack.c.l.b16 %v821
      %v931 = vunpack.c.l.b16 %v822
      %v932 = vunpack.c.l.b16 %v823
      %v933 = vpack.c.b16 %v918, %v917
      %v934 = vpack.c.b16 %v920, %v919
      %v935 = vpack.c.b16 %v922, %v921
      %v936 = vpack.c.b16 %v924, %v923
      %v937 = vpack.c.b16 %v926, %v925
      %v938 = vpack.c.b16 %v928, %v927
      %v939 = vpack.c.b16 %v930, %v929
      %v940 = vpack.c.b16 %v932, %v931
      %949 = vmatpush.bf16.msra.mxu0 %v940
      %950 = vmatpush.bf16.msra.mxu0 %v939
      %951 = vmatpush.bf16.msra.mxu0 %v938
      %952 = vmatpush.bf16.msra.mxu0 %v937
      %953 = vmatpush.bf16.msra.mxu0 %v936
      %954 = vmatpush.bf16.msra.mxu0 %v935
      %955 = vmatpush.bf16.msra.mxu0 %v934
      %956 = vmatpush.bf16.msra.mxu0 %v933
      %957 = vmatmul.bf16.gmra.mxu0 %v319
      %v958 = vpop.f32.mrf.mxu0
      %v959 = vadd.f32 %v898, %v958
      %v960 = vpop.f32.mrf.mxu0
      %961 = vdwg.mxu0
      %v962 = vld [vmem:[%s12] sm:$0x1]
      %v964 = vperm.slane %v962, 0
      %v966 = vadd.f32 %v959, %v964
      %967 = vst [vmem:[%s16] sm:$0xff] %v966
      %v968 = vld [vmem:[#allocation11] sm:$0xff]
      %v969 = vld [vmem:[#allocation11 + $0x8] sm:$0xff]
      %v970 = vld [vmem:[#allocation11 + $0x10] sm:$0xff]
      %v971 = vld [vmem:[#allocation11 + $0x18] sm:$0xff]
      %v972 = vld [vmem:[#allocation11 + $0x20] sm:$0xff]
      %v973 = vld [vmem:[#allocation11 + $0x28] sm:$0xff]
      %v974 = vld [vmem:[#allocation11 + $0x30] sm:$0xff]
      %v975 = vld [vmem:[#allocation11 + $0x38] sm:$0xff]
      %v976 = vld [vmem:[#allocation11 + $0x40] sm:$0xff]
      %v977 = vld [vmem:[#allocation11 + $0x48] sm:$0xff]
      %v978 = vld [vmem:[#allocation11 + $0x50] sm:$0xff]
      %v979 = vld [vmem:[#allocation11 + $0x58] sm:$0xff]
      %v980 = vld [vmem:[#allocation11 + $0x60] sm:$0xff]
      %v981 = vld [vmem:[#allocation11 + $0x68] sm:$0xff]
      %v982 = vld [vmem:[#allocation11 + $0x70] sm:$0xff]
      %v983 = vld [vmem:[#allocation11 + $0x78] sm:$0xff]
      %984 = vmatpush.msra.mxu0 %v983
      %985 = vmatpush.msra.mxu0 %v982
      %986 = vmatpush.msra.mxu0 %v981
      %987 = vmatpush.msra.mxu0 %v980
      %988 = vmatpush.msra.mxu0 %v979
      %989 = vmatpush.msra.mxu0 %v978
      %990 = vmatpush.msra.mxu0 %v977
      %991 = vmatpush.msra.mxu0 %v976
      %992 = vmatpush.msra.mxu0 %v975
      %993 = vmatpush.msra.mxu0 %v974
      %994 = vmatpush.msra.mxu0 %v973
      %995 = vmatpush.msra.mxu0 %v972
      %996 = vmatpush.msra.mxu0 %v971
      %997 = vmatpush.msra.mxu0 %v970
      %998 = vmatpush.msra.mxu0 %v969
      %999 = vmatpush.msra.mxu0 %v968
      %1000 = vmatmul.f32.gmra.mxu0 %v966
      %v1001 = vpop.f32.mrf.mxu0
      %v1002 = vadd.f32 0.0, %v1001
      %1003 = vdwg.mxu0
      %v1004 = vmul.f32 %v966, %v966
      %1005 = vadd.xlane.f32.xlu0 %v1004
      %v1006 = vpop.xlane.xlu0 %1005
      %v1007 = vld [vmem:[%s14] sm:$0x1]
      %v1009 = vperm.slane %v1007, 0
      %v1011 = vadd.f32 %v1006, %v1009
      %v1012 = vmul.f32 %v1002, 2.0
      %v1013 = vsub.f32 %v1011, %v1012
      %v1014 = vmax.f32 %v1013, 0.0
      %v1015 = vadd.f32 %v1014, 1.0
      %v1016 = vrcp.pop %v1015
      %v1017 = vmul.f32 %v1015, %v1016
      %v1018 = vsub.f32 1.0, %v1017
      %v1019 = vmul.f32 %v1016, %v1018
      %v1020 = vadd.f32 %v1016, %v1019
      %vm1021 = vweird.f32 %v1015
      %vm1022 = vweird.f32 %v1016
      %vm1023 = vmor %vm1021, %vm1022
      %v1024 = vsel %vm1023, %v1016, %v1020
      %v1025 = vand.u32 2147483647, %v1015
      %vm1026 = vcmp.eq.f32.partialorder %v1025, 8.507059e+37
      %v1027 = vand.u32 %v1015, 2147483648
      %v1028 = vor.u32 1.1754944e-38, %v1027
      %v1029 = vsel %vm1026, %v1028, %v1024
      %v1030 = vmul.f32 1.0, %v1029
      %v1031 = vlaneseq
      %v1032 = vand.u32 %v1031, 127
      %vm1033 = vcmp.lt.s32.totalorder %v1032, 8
      %v1034 = vsel %vm1033, %v1030, 0.0
      %1035 = vadd.xlane.f32.xlu0 %v1034
      %v1036 = vpop.xlane.xlu0 %1035
      %v1037 = vrcp.pop %v1036
      %v1038 = vmul.f32 %v1036, %v1037
      %v1039 = vsub.f32 1.0, %v1038
      %v1040 = vmul.f32 %v1037, %v1039
      %v1041 = vadd.f32 %v1037, %v1040
      %vm1042 = vweird.f32 %v1036
      %vm1043 = vweird.f32 %v1037
      %vm1044 = vmor %vm1042, %vm1043
      %v1045 = vsel %vm1044, %v1037, %v1041
      %v1046 = vand.u32 2147483647, %v1036
      %vm1047 = vcmp.eq.f32.partialorder %v1046, 8.507059e+37
      %v1048 = vand.u32 %v1036, 2147483648
      %v1049 = vor.u32 1.1754944e-38, %v1048
      %v1050 = vsel %vm1047, %v1049, %v1045
      %v1051 = vmul.f32 %v1034, %v1050
      %1052 = vst [vmem:[%s17] sm:$0xff] %v1051
    $region93: #{infograph_forward.7} parent=1 // pred_fallthru
      _
    // Predicated region
    $region94: #{infograph_forward.7} parent=1 // pred_check
      _
    $region95: #{infograph_forward.7} parent=1 // pred_check_branch
      %1054 = sbr.rel (0) target = $region97
    $region96: #{infograph_forward.7} parent=1 // pred_region
      _
    $region97: #{infograph_forward.7} parent=1 // pred_fallthru
      _
    // Predicated region
    $region98: #{infograph_forward.7} parent=1 // pred_check
      _
    $region99: #{infograph_forward.7} parent=1 // pred_check_branch
      %1056 = sbr.rel (0) target = $region101
    $region100: #{infograph_forward.7} parent=1 // pred_region
      _
    $region101: #{infograph_forward.7} parent=1 // pred_fallthru
      _
    // Predicated region
    $region102: #{infograph_forward.7} parent=1 // pred_check
      _
    $region103: #{infograph_forward.7} parent=1 // pred_check_branch
      %1058 = sbr.rel (0) target = $region105
    $region104: #{infograph_forward.7} parent=1 // pred_region
      _
    $region105: #{infograph_forward.7} parent=1 // pred_fallthru
      _
    // Predicated region
    $region106: #{infograph_forward.7} parent=1 // pred_check
      _
    $region107: #{infograph_forward.7} parent=1 // pred_check_branch
      %1060 = sbr.rel (0) target = $region109
    $region108: #{infograph_forward.7} parent=1 // pred_region
      _
    $region109: #{infograph_forward.7} parent=1 // pred_fallthru
      _
    // Predicated region
    $region110: #{infograph_forward.7} parent=1 // pred_check
      _
    $region111: #{infograph_forward.7} parent=1 // pred_check_branch
      %1062 = sbr.rel (0) target = $region113
    $region112: #{infograph_forward.7} parent=1 // pred_region
      _
    $region113: #{infograph_forward.7} parent=1 // pred_fallthru
      _
    // Predicated region
    $region114: #{infograph_forward.7} parent=1 // pred_check
      _
    $region115: #{infograph_forward.7} parent=1 // pred_check_branch
      %1064 = sbr.rel (0) target = $region117
    $region116: #{infograph_forward.7} parent=1 // pred_region
      _
    $region117: #{infograph_forward.7} parent=1 // pred_fallthru
      _
    %1065 = vsyncpa [#allocation4], 1
    %1066 = vsyncpa [#allocation6], 1
    %1067 = vsyncpa [#allocation9], 1
    %1068 = vsyncpa [#allocation12], 1

// kernel: infograph_forward.5
$region0: #{infograph_forward.5}
  #allocation0 [shape = 'u32[]', space=smem, size = 0x4, offset = 0x4, fixed_abs, tag = 'smem constant byte address 0x4 - core index']
  #allocation1 [shape = 'u32[72,128]{1,0:T(1,128)}', space=vmem, size = 0x9000, scoped, tag = 'internal scratch']
  #allocation2 [shape = 'f32[128,128]{1,0:T(8,128)}', space=vmem, size = 0x10000, scoped, tag = 'scratch operand']
  #allocation3 [shape = 's32[1]{0}', space=sflag, size = 0x4, scoped, tag = 'scoped memory for infograph_forward.5']
  #allocation4 [shape = 's32[1]{0:T(128)S(6)}', space=smem, size = 0x200, scoped, tag = 'prefetched SMEM operand 0']
  #allocation5 [shape = 's32[1]{0:T(128)S(6)}', space=smem, size = 0x200, scoped, tag = 'prefetched SMEM operand 1']
  %s0 = inlined_call_operand.<no memory space> [shape: s32[1], index: 0, kind: input, shape index: {}]
  %s1 = inlined_call_operand.<no memory space> [shape: s32[1], index: 1, kind: input, shape index: {}]
  %s2 = inlined_call_operand.vmem [shape: bf16[128,128], index: 2, kind: input, shape index: {}]
  %s3 = inlined_call_operand.vmem [shape: bf16[128,128], index: 3, kind: input, shape index: {}]
  %s4 = inlined_call_operand.hbm [shape: bf16[128,128], index: 4, kind: input, shape index: {}]
  %s5 = inlined_call_operand.vmem [shape: f32[1,128], index: 5, kind: input, shape index: {}]
  %s6 = inlined_call_operand.hbm [shape: bf16[128,128], index: 6, kind: input, shape index: {}]
  %s7 = inlined_call_operand.vmem [shape: f32[1,128], index: 7, kind: input, shape index: {}]
  %s8 = inlined_call_operand.vmem [shape: bf16[128,128], index: 8, kind: output, shape index: {}]
  %s9 = sld [smem:[#allocation0]]
  $region54: #{infograph_forward.5} parent=0
    _
  %s11 = ssub.s32 1, %s9
  %s12 = scalar_select 0, %s11, %s9
  %13 = sst [smem:[#allocation4]] %s0
  %14 = sst [smem:[#allocation5]] %s1
  $region1: #{infograph_forward.5} parent=0
    #allocation6 [shape = 'u8[32768]{0}', space=vmem, size = 0x8000, scoped, tag = 'input window, operand 4, single buffered']
    #allocation7 [shape = 's32[1]{0}', space=sflag, size = 0x4, scoped, tag = 'scoped memory for infograph_forward.5']
    #allocation8 [shape = 'u8[32768]{0}', space=vmem, size = 0x8000, scoped, tag = 'input window, operand 6, single buffered']
    #allocation9 [shape = 's32[1]{0}', space=sflag, size = 0x4, scoped, tag = 'scoped memory for infograph_forward.5']
    %15 = vsyncpa [#allocation7], 0
    %16 = vsyncpa [#allocation9], 0
    // Predicated region
    $region2: #{infograph_forward.5} parent=1 // pred_check
      _
    $region3: #{infograph_forward.5} parent=1 // pred_check_branch
      %18 = sbr.rel (0) target = $region5
    $region4: #{infograph_forward.5} parent=1 // pred_region
      %s19 = sadd.s32 0, 0
      %s20 = sld [smem:[#allocation4 + %s19]]
      %p21 = scmp.lt.s32.totalorder %s20, 0
      %s22 = scalar_select %p21, %s20, 0
      %s23 = smul.addr %s22, 4
      %s24 = scalar_lea.vmem %s2, %s23
      %s25 = sadd.s32 0, 0
      %s26 = sld [smem:[#allocation4 + %s25]]
    $region5: #{infograph_forward.5} parent=1 // pred_fallthru
      _
    // Predicated region
    $region6: #{infograph_forward.5} parent=1 // pred_check
      _
    $region7: #{infograph_forward.5} parent=1 // pred_check_branch
      %28 = sbr.rel (0) target = $region9
    $region8: #{infograph_forward.5} parent=1 // pred_region
      %s29 = sadd.s32 0, 0
      %s30 = sld [smem:[#allocation4 + %s29]]
      %s31 = smul.u32 16, %s30
      %p32 = scmp.lt.s32.totalorder %s31, 15
      %s33 = scalar_select %p32, %s31, 15
      %s34 = smul.addr %s33, 4
      %s35 = scalar_lea.vmem %s3, %s34
      %s36 = sadd.s32 0, 0
      %s37 = sld [smem:[#allocation4 + %s36]]
      %s38 = smul.u32 16, %s37
    $region9: #{infograph_forward.5} parent=1 // pred_fallthru
      _
    // Predicated region
    $region10: #{infograph_forward.5} parent=1 // pred_check
      _
    $region11: #{infograph_forward.5} parent=1 // pred_check_branch
      %40 = sbr.rel (0) target = $region13
    $region12: #{infograph_forward.5} parent=1 // pred_region
      %42 = vsyncadd [#allocation7], 0
      %s43 = sshll.u32 %s4, 4
      %s44 = int_to_ptr.hbm [resolvable:$true] %s43
      %s45 = sshll.u32 [#allocation6], 4
      %s46 = int_to_ptr.vmem [resolvable:$true] %s45
      %51 = dma.hbm_to_vmem [thread:$0]  %s44, 1024, %s46, [#allocation7], 64, 64, 4
    $region13: #{infograph_forward.5} parent=1 // pred_fallthru
      _
    // Predicated region
    $region14: #{infograph_forward.5} parent=1 // pred_check
      _
    $region15: #{infograph_forward.5} parent=1 // pred_check_branch
      %53 = sbr.rel (0) target = $region17
    $region16: #{infograph_forward.5} parent=1 // pred_region
      _
    $region17: #{infograph_forward.5} parent=1 // pred_fallthru
      _
    // Predicated region
    $region18: #{infograph_forward.5} parent=1 // pred_check
      _
    $region19: #{infograph_forward.5} parent=1 // pred_check_branch
      %55 = sbr.rel (0) target = $region21
    $region20: #{infograph_forward.5} parent=1 // pred_region
      %57 = vsyncadd [#allocation9], 0
      %s58 = sshll.u32 %s6, 4
      %s59 = int_to_ptr.hbm [resolvable:$true] %s58
      %s60 = sshll.u32 [#allocation8], 4
      %s61 = int_to_ptr.vmem [resolvable:$true] %s60
      %66 = dma.hbm_to_vmem [thread:$0]  %s59, 1024, %s61, [#allocation9], 64, 64, 4
    $region21: #{infograph_forward.5} parent=1 // pred_fallthru
      _
    // Predicated region
    $region22: #{infograph_forward.5} parent=1 // pred_check
      _
    $region23: #{infograph_forward.5} parent=1 // pred_check_branch
      %68 = sbr.rel (0) target = $region25
    $region24: #{infograph_forward.5} parent=1 // pred_region
      _
    $region25: #{infograph_forward.5} parent=1 // pred_fallthru
      _
    // Predicated region
    $region26: #{infograph_forward.5} parent=1 // pred_check
      _
    $region27: #{infograph_forward.5} parent=1 // pred_check_branch
      %70 = sbr.rel (0) target = $region29
    $region28: #{infograph_forward.5} parent=1 // pred_region
      %72 = dma.done [#allocation7], 1024
    $region29: #{infograph_forward.5} parent=1 // pred_fallthru
      _
    // Predicated region
    $region30: #{infograph_forward.5} parent=1 // pred_check
      _
    $region31: #{infograph_forward.5} parent=1 // pred_check_branch
      %74 = sbr.rel (0) target = $region33
    $region32: #{infograph_forward.5} parent=1 // pred_region
      %76 = dma.done [#allocation9], 1024
    $region33: #{infograph_forward.5} parent=1 // pred_fallthru
      _
    %s77 = sadd.s32 0, 0
    %s78 = sld [smem:[#allocation4 + %s77]]
    %p79 = scmp.lt.s32.totalorder %s78, 0
    %s80 = scalar_select %p79, %s78, 0
    %s81 = smul.addr %s80, 4
    %s82 = scalar_lea.vmem %s2, %s81
    %s83 = sadd.s32 0, 0
    %s84 = sld [smem:[#allocation4 + %s83]]
    %s85 = smul.u32 16, %s84
    %p86 = scmp.lt.s32.totalorder %s85, 15
    %s87 = scalar_select %p86, %s85, 15
    %s88 = smul.addr %s87, 4
    %s89 = scalar_lea.vmem %s3, %s88
    %s90 = sadd.s32 0, 0
    %s91 = sld [smem:[#allocation4 + %s90]]
    %p92 = scmp.lt.s32.totalorder %s91, 0
    %s93 = scalar_select %p92, %s91, 0
    %s94 = smul.addr %s93, 4
    %s95 = scalar_lea.vmem %s2, %s94
    %s96 = sadd.s32 0, 0
    %s97 = sld [smem:[#allocation4 + %s96]]
    %s98 = sadd.s32 0, 0
    %s99 = sld [smem:[#allocation4 + %s98]]
    %s100 = smul.u32 16, %s99
    %p101 = scmp.lt.s32.totalorder %s100, 15
    %s102 = scalar_select %p101, %s100, 15
    %s103 = smul.addr %s102, 4
    %s104 = scalar_lea.vmem %s3, %s103
    %s105 = sadd.s32 0, 0
    %s106 = sld [smem:[#allocation4 + %s105]]
    %s107 = smul.u32 16, %s106
    %p108 = scmp.eq.s32.totalorder 0, 0
    // Predicated region
    $region34: #{infograph_forward.5} parent=1 // pred_check
      %p109 = pneg %p108
    $region35: #{infograph_forward.5} parent=1 // pred_check_branch
      %111 = sbr.rel (%p109) target = $region37
    $region36: #{infograph_forward.5} parent=1 // pred_region
      %112 = vst [vmem:[#allocation2] sm:$0xff] 0.0
      %113 = vst [vmem:[#allocation2 + $0x8] sm:$0xff] 0.0
      %114 = vst [vmem:[#allocation2 + $0x10] sm:$0xff] 0.0
      %115 = vst [vmem:[#allocation2 + $0x18] sm:$0xff] 0.0
      %116 = vst [vmem:[#allocation2 + $0x20] sm:$0xff] 0.0
      %117 = vst [vmem:[#allocation2 + $0x28] sm:$0xff] 0.0
      %118 = vst [vmem:[#allocation2 + $0x30] sm:$0xff] 0.0
      %119 = vst [vmem:[#allocation2 + $0x38] sm:$0xff] 0.0
      %120 = vst [vmem:[#allocation2 + $0x40] sm:$0xff] 0.0
      %121 = vst [vmem:[#allocation2 + $0x48] sm:$0xff] 0.0
      %122 = vst [vmem:[#allocation2 + $0x50] sm:$0xff] 0.0
      %123 = vst [vmem:[#allocation2 + $0x58] sm:$0xff] 0.0
      %124 = vst [vmem:[#allocation2 + $0x60] sm:$0xff] 0.0
      %125 = vst [vmem:[#allocation2 + $0x68] sm:$0xff] 0.0
      %126 = vst [vmem:[#allocation2 + $0x70] sm:$0xff] 0.0
      %127 = vst [vmem:[#allocation2 + $0x78] sm:$0xff] 0.0
    $region37: #{infograph_forward.5} parent=1 // pred_fallthru
      _
    %s128 = sld [smem:[#allocation5]]
    %p129 = scmp.lt.s32.totalorder 0, %s128
    // Predicated region
    $region38: #{infograph_forward.5} parent=1 // pred_check
      %p130 = pneg %p129
    $region39: #{infograph_forward.5} parent=1 // pred_check_branch
      %132 = sbr.rel (%p130) target = $region41
    $region40: #{infograph_forward.5} parent=1 // pred_region
      %v133 = vld [vmem:[#allocation2] sm:$0xff]
      %v134 = vld [vmem:[#allocation2 + $0x8] sm:$0xff]
      %v135 = vld [vmem:[#allocation2 + $0x10] sm:$0xff]
      %v136 = vld [vmem:[#allocation2 + $0x18] sm:$0xff]
      %v137 = vld [vmem:[#allocation2 + $0x20] sm:$0xff]
      %v138 = vld [vmem:[#allocation2 + $0x28] sm:$0xff]
      %v139 = vld [vmem:[#allocation2 + $0x30] sm:$0xff]
      %v140 = vld [vmem:[#allocation2 + $0x38] sm:$0xff]
      %v141 = vld [vmem:[#allocation2 + $0x40] sm:$0xff]
      %v142 = vld [vmem:[#allocation2 + $0x48] sm:$0xff]
      %v143 = vld [vmem:[#allocation2 + $0x50] sm:$0xff]
      %v144 = vld [vmem:[#allocation2 + $0x58] sm:$0xff]
      %v145 = vld [vmem:[#allocation2 + $0x60] sm:$0xff]
      %v146 = vld [vmem:[#allocation2 + $0x68] sm:$0xff]
      %v147 = vld [vmem:[#allocation2 + $0x70] sm:$0xff]
      %v148 = vld [vmem:[#allocation2 + $0x78] sm:$0xff]
      %v149 = vld [vmem:[%s95] sm:$0xf]
      %v150 = vld [vmem:[%s95 + $0x4] sm:$0xf]
      %v151 = vld [vmem:[%s95 + $0x8] sm:$0xf]
      %v152 = vld [vmem:[%s95 + $0xc] sm:$0xf]
      %v153 = vld [vmem:[%s95 + $0x10] sm:$0xf]
      %v154 = vld [vmem:[%s95 + $0x14] sm:$0xf]
      %v155 = vld [vmem:[%s95 + $0x18] sm:$0xf]
      %v156 = vld [vmem:[%s95 + $0x1c] sm:$0xf]
      %v157 = vld [vmem:[%s95 + $0x20] sm:$0xf]
      %v158 = vld [vmem:[%s95 + $0x24] sm:$0xf]
      %v159 = vld [vmem:[%s95 + $0x28] sm:$0xf]
      %v160 = vld [vmem:[%s95 + $0x2c] sm:$0xf]
      %v161 = vld [vmem:[%s95 + $0x30] sm:$0xf]
      %v162 = vld [vmem:[%s95 + $0x34] sm:$0xf]
      %v163 = vld [vmem:[%s95 + $0x38] sm:$0xf]
      %v164 = vld [vmem:[%s95 + $0x3c] sm:$0xf]
      %v165 = vld [vmem:[%s104] sm:$0xf]
      %v166 = vld [vmem:[%s104 + $0x4] sm:$0xf]
      %v167 = vld [vmem:[%s104 + $0x8] sm:$0xf]
      %v168 = vld [vmem:[%s104 + $0xc] sm:$0xf]
      %v169 = vld [vmem:[%s104 + $0x10] sm:$0xf]
      %v170 = vld [vmem:[%s104 + $0x14] sm:$0xf]
      %v171 = vld [vmem:[%s104 + $0x18] sm:$0xf]
      %v172 = vld [vmem:[%s104 + $0x1c] sm:$0xf]
      %v173 = vld [vmem:[%s104 + $0x20] sm:$0xf]
      %v174 = vld [vmem:[%s104 + $0x24] sm:$0xf]
      %v175 = vld [vmem:[%s104 + $0x28] sm:$0xf]
      %v176 = vld [vmem:[%s104 + $0x2c] sm:$0xf]
      %v177 = vld [vmem:[%s104 + $0x30] sm:$0xf]
      %v178 = vld [vmem:[%s104 + $0x34] sm:$0xf]
      %v179 = vld [vmem:[%s104 + $0x38] sm:$0xf]
      %v180 = vld [vmem:[%s104 + $0x3c] sm:$0xf]
      %v197 = vunpack.c.l.b16 %v149
      %v198 = vunpack.c.l.b16 %v150
      %v199 = vunpack.c.l.b16 %v151
      %v200 = vunpack.c.l.b16 %v152
      %v201 = vunpack.c.l.b16 %v153
      %v202 = vunpack.c.l.b16 %v154
      %v203 = vunpack.c.l.b16 %v155
      %v204 = vunpack.c.l.b16 %v156
      %v205 = vunpack.c.l.b16 %v157
      %v206 = vunpack.c.l.b16 %v158
      %v207 = vunpack.c.l.b16 %v159
      %v208 = vunpack.c.l.b16 %v160
      %v209 = vunpack.c.l.b16 %v161
      %v210 = vunpack.c.l.b16 %v162
      %v211 = vunpack.c.l.b16 %v163
      %v212 = vunpack.c.l.b16 %v164
      %v213 = vpack.c.b16 %v198, %v197
      %v214 = vpack.c.b16 %v200, %v199
      %v215 = vpack.c.b16 %v202, %v201
      %v216 = vpack.c.b16 %v204, %v203
      %v217 = vpack.c.b16 %v206, %v205
      %v218 = vpack.c.b16 %v208, %v207
      %v219 = vpack.c.b16 %v210, %v209
      %v220 = vpack.c.b16 %v212, %v211
      %v245 = vunpack.c.l.b16 %v165
      %v246 = vunpack.c.l.b16 %v166
      %v247 = vunpack.c.l.b16 %v167
      %v248 = vunpack.c.l.b16 %v168
      %v249 = vunpack.c.l.b16 %v169
      %v250 = vunpack.c.l.b16 %v170
      %v251 = vunpack.c.l.b16 %v171
      %v252 = vunpack.c.l.b16 %v172
      %v253 = vunpack.c.l.b16 %v173
      %v254 = vunpack.c.l.b16 %v174
      %v255 = vunpack.c.l.b16 %v175
      %v256 = vunpack.c.l.b16 %v176
      %v257 = vunpack.c.l.b16 %v177
      %v258 = vunpack.c.l.b16 %v178
      %v259 = vunpack.c.l.b16 %v179
      %v260 = vunpack.c.l.b16 %v180
      %v261 = vpack.c.b16 %v246, %v245
      %v262 = vpack.c.b16 %v248, %v247
      %v263 = vpack.c.b16 %v250, %v249
      %v264 = vpack.c.b16 %v252, %v251
      %v265 = vpack.c.b16 %v254, %v253
      %v266 = vpack.c.b16 %v256, %v255
      %v267 = vpack.c.b16 %v258, %v257
      %v268 = vpack.c.b16 %v260, %v259
      %277 = vmatpush.bf16.msra.mxu0 %v268
      %278 = vmatpush.bf16.msra.mxu0 %v267
      %279 = vmatpush.bf16.msra.mxu0 %v266
      %280 = vmatpush.bf16.msra.mxu0 %v265
      %281 = vmatpush.bf16.msra.mxu0 %v264
      %282 = vmatpush.bf16.msra.mxu0 %v263
      %283 = vmatpush.bf16.msra.mxu0 %v262
      %284 = vmatpush.bf16.msra.mxu0 %v261
      %285 = vmatmul.bf16.gmra.mxu0 %v213
      %v286 = vpop.f32.mrf.mxu0
      %v287 = vadd.f32 0.0, %v286
      %v288 = vpop.f32.mrf.mxu0
      %v289 = vadd.f32 0.0, %v288
      %290 = vmatmul.bf16.gmra.mxu0 %v214
      %v291 = vpop.f32.mrf.mxu0
      %v292 = vadd.f32 0.0, %v291
      %v293 = vpop.f32.mrf.mxu0
      %v294 = vadd.f32 0.0, %v293
      %295 = vmatmul.bf16.gmra.mxu0 %v215
      %v296 = vpop.f32.mrf.mxu0
      %v297 = vadd.f32 0.0, %v296
      %v298 = vpop.f32.mrf.mxu0
      %v299 = vadd.f32 0.0, %v298
      %300 = vmatmul.bf16.gmra.mxu0 %v216
      %v301 = vpop.f32.mrf.mxu0
      %v302 = vadd.f32 0.0, %v301
      %v303 = vpop.f32.mrf.mxu0
      %v304 = vadd.f32 0.0, %v303
      %305 = vmatmul.bf16.gmra.mxu0 %v217
      %v306 = vpop.f32.mrf.mxu0
      %v307 = vadd.f32 0.0, %v306
      %v308 = vpop.f32.mrf.mxu0
      %v309 = vadd.f32 0.0, %v308
      %310 = vmatmul.bf16.gmra.mxu0 %v218
      %v311 = vpop.f32.mrf.mxu0
      %v312 = vadd.f32 0.0, %v311
      %v313 = vpop.f32.mrf.mxu0
      %v314 = vadd.f32 0.0, %v313
      %315 = vmatmul.bf16.gmra.mxu0 %v219
      %v316 = vpop.f32.mrf.mxu0
      %v317 = vadd.f32 0.0, %v316
      %v318 = vpop.f32.mrf.mxu0
      %v319 = vadd.f32 0.0, %v318
      %320 = vmatmul.bf16.gmra.mxu0 %v220
      %v321 = vpop.f32.mrf.mxu0
      %v322 = vadd.f32 0.0, %v321
      %v323 = vpop.f32.mrf.mxu0
      %v324 = vadd.f32 0.0, %v323
      %325 = vdwg.mxu0
      %v326 = vadd.f32 %v133, %v287
      %v327 = vadd.f32 %v134, %v289
      %v328 = vadd.f32 %v135, %v292
      %v329 = vadd.f32 %v136, %v294
      %v330 = vadd.f32 %v137, %v297
      %v331 = vadd.f32 %v138, %v299
      %v332 = vadd.f32 %v139, %v302
      %v333 = vadd.f32 %v140, %v304
      %v334 = vadd.f32 %v141, %v307
      %v335 = vadd.f32 %v142, %v309
      %v336 = vadd.f32 %v143, %v312
      %v337 = vadd.f32 %v144, %v314
      %v338 = vadd.f32 %v145, %v317
      %v339 = vadd.f32 %v146, %v319
      %v340 = vadd.f32 %v147, %v322
      %v341 = vadd.f32 %v148, %v324
      %342 = vst [vmem:[#allocation2] sm:$0xff] %v326
      %343 = vst [vmem:[#allocation2 + $0x8] sm:$0xff] %v327
      %344 = vst [vmem:[#allocation2 + $0x10] sm:$0xff] %v328
      %345 = vst [vmem:[#allocation2 + $0x18] sm:$0xff] %v329
      %346 = vst [vmem:[#allocation2 + $0x20] sm:$0xff] %v330
      %347 = vst [vmem:[#allocation2 + $0x28] sm:$0xff] %v331
      %348 = vst [vmem:[#allocation2 + $0x30] sm:$0xff] %v332
      %349 = vst [vmem:[#allocation2 + $0x38] sm:$0xff] %v333
      %350 = vst [vmem:[#allocation2 + $0x40] sm:$0xff] %v334
      %351 = vst [vmem:[#allocation2 + $0x48] sm:$0xff] %v335
      %352 = vst [vmem:[#allocation2 + $0x50] sm:$0xff] %v336
      %353 = vst [vmem:[#allocation2 + $0x58] sm:$0xff] %v337
      %354 = vst [vmem:[#allocation2 + $0x60] sm:$0xff] %v338
      %355 = vst [vmem:[#allocation2 + $0x68] sm:$0xff] %v339
      %356 = vst [vmem:[#allocation2 + $0x70] sm:$0xff] %v340
      %357 = vst [vmem:[#allocation2 + $0x78] sm:$0xff] %v341
    $region41: #{infograph_forward.5} parent=1 // pred_fallthru
      _
    // Predicated region
    $region42: #{infograph_forward.5} parent=1 // pred_check
      %p358 = pneg %p108
    $region43: #{infograph_forward.5} parent=1 // pred_check_branch
      %360 = sbr.rel (%p358) target = $region45
    $region44: #{infograph_forward.5} parent=1 // pred_region
      %v361 = vld [vmem:[#allocation2] sm:$0xff]
      %v362 = vld [vmem:[#allocation2 + $0x8] sm:$0xff]
      %v363 = vld [vmem:[#allocation2 + $0x10] sm:$0xff]
      %v364 = vld [vmem:[#allocation2 + $0x18] sm:$0xff]
      %v365 = vld [vmem:[#allocation2 + $0x20] sm:$0xff]
      %v366 = vld [vmem:[#allocation2 + $0x28] sm:$0xff]
      %v367 = vld [vmem:[#allocation2 + $0x30] sm:$0xff]
      %v368 = vld [vmem:[#allocation2 + $0x38] sm:$0xff]
      %v369 = vld [vmem:[#allocation2 + $0x40] sm:$0xff]
      %v370 = vld [vmem:[#allocation2 + $0x48] sm:$0xff]
      %v371 = vld [vmem:[#allocation2 + $0x50] sm:$0xff]
      %v372 = vld [vmem:[#allocation2 + $0x58] sm:$0xff]
      %v373 = vld [vmem:[#allocation2 + $0x60] sm:$0xff]
      %v374 = vld [vmem:[#allocation2 + $0x68] sm:$0xff]
      %v375 = vld [vmem:[#allocation2 + $0x70] sm:$0xff]
      %v376 = vld [vmem:[#allocation2 + $0x78] sm:$0xff]
      %v377 = vpack.c.bf16 %v362, %v361
      %v378 = vpack.c.bf16 %v364, %v363
      %v379 = vpack.c.bf16 %v366, %v365
      %v380 = vpack.c.bf16 %v368, %v367
      %v381 = vpack.c.bf16 %v370, %v369
      %v382 = vpack.c.bf16 %v372, %v371
      %v383 = vpack.c.bf16 %v374, %v373
      %v384 = vpack.c.bf16 %v376, %v375
      %v385 = vld [vmem:[#allocation6] sm:$0xf]
      %v386 = vld [vmem:[#allocation6 + $0x4] sm:$0xf]
      %v387 = vld [vmem:[#allocation6 + $0x8] sm:$0xf]
      %v388 = vld [vmem:[#allocation6 + $0xc] sm:$0xf]
      %v389 = vld [vmem:[#allocation6 + $0x10] sm:$0xf]
      %v390 = vld [vmem:[#allocation6 + $0x14] sm:$0xf]
      %v391 = vld [vmem:[#allocation6 + $0x18] sm:$0xf]
      %v392 = vld [vmem:[#allocation6 + $0x1c] sm:$0xf]
      %v393 = vld [vmem:[#allocation6 + $0x20] sm:$0xf]
      %v394 = vld [vmem:[#allocation6 + $0x24] sm:$0xf]
      %v395 = vld [vmem:[#allocation6 + $0x28] sm:$0xf]
      %v396 = vld [vmem:[#allocation6 + $0x2c] sm:$0xf]
      %v397 = vld [vmem:[#allocation6 + $0x30] sm:$0xf]
      %v398 = vld [vmem:[#allocation6 + $0x34] sm:$0xf]
      %v399 = vld [vmem:[#allocation6 + $0x38] sm:$0xf]
      %v400 = vld [vmem:[#allocation6 + $0x3c] sm:$0xf]
      %v401 = vld [vmem:[%s5] sm:$0x1]
      %v403 = vperm.slane %v401, 0
      %v421 = vunpack.c.l.b16 %v385
      %v422 = vunpack.c.l.b16 %v386
      %v423 = vunpack.c.l.b16 %v387
      %v424 = vunpack.c.l.b16 %v388
      %v425 = vunpack.c.l.b16 %v389
      %v426 = vunpack.c.l.b16 %v390
      %v427 = vunpack.c.l.b16 %v391
      %v428 = vunpack.c.l.b16 %v392
      %v429 = vunpack.c.l.b16 %v393
      %v430 = vunpack.c.l.b16 %v394
      %v431 = vunpack.c.l.b16 %v395
      %v432 = vunpack.c.l.b16 %v396
      %v433 = vunpack.c.l.b16 %v397
      %v434 = vunpack.c.l.b16 %v398
      %v435 = vunpack.c.l.b16 %v399
      %v436 = vunpack.c.l.b16 %v400
      %v437 = vpack.c.b16 %v422, %v421
      %v438 = vpack.c.b16 %v424, %v423
      %v439 = vpack.c.b16 %v426, %v425
      %v440 = vpack.c.b16 %v428, %v427
      %v441 = vpack.c.b16 %v430, %v429
      %v442 = vpack.c.b16 %v432, %v431
      %v443 = vpack.c.b16 %v434, %v433
      %v444 = vpack.c.b16 %v436, %v435
      %453 = vmatpush.bf16.msra.mxu0 %v444
      %454 = vmatpush.bf16.msra.mxu0 %v443
      %455 = vmatpush.bf16.msra.mxu0 %v442
      %456 = vmatpush.bf16.msra.mxu0 %v441
      %457 = vmatpush.bf16.msra.mxu0 %v440
      %458 = vmatpush.bf16.msra.mxu0 %v439
      %459 = vmatpush.bf16.msra.mxu0 %v438
      %460 = vmatpush.bf16.msra.mxu0 %v437
      %461 = vmatmul.bf16.gmra.mxu0 %v377
      %v462 = vpop.f32.mrf.mxu0
      %v463 = vadd.f32 %v403, %v462
      %v464 = vpop.f32.mrf.mxu0
      %v465 = vadd.f32 %v403, %v464
      %466 = vmatmul.bf16.gmra.mxu0 %v378
      %v467 = vpop.f32.mrf.mxu0
      %v468 = vadd.f32 %v403, %v467
      %v469 = vpop.f32.mrf.mxu0
      %v470 = vadd.f32 %v403, %v469
      %471 = vmatmul.bf16.gmra.mxu0 %v379
      %v472 = vpop.f32.mrf.mxu0
      %v473 = vadd.f32 %v403, %v472
      %v474 = vpop.f32.mrf.mxu0
      %v475 = vadd.f32 %v403, %v474
      %476 = vmatmul.bf16.gmra.mxu0 %v380
      %v477 = vpop.f32.mrf.mxu0
      %v478 = vadd.f32 %v403, %v477
      %v479 = vpop.f32.mrf.mxu0
      %v480 = vadd.f32 %v403, %v479
      %481 = vmatmul.bf16.gmra.mxu0 %v381
      %v482 = vpop.f32.mrf.mxu0
      %v483 = vadd.f32 %v403, %v482
      %v484 = vpop.f32.mrf.mxu0
      %v485 = vadd.f32 %v403, %v484
      %486 = vmatmul.bf16.gmra.mxu0 %v382
      %v487 = vpop.f32.mrf.mxu0
      %v488 = vadd.f32 %v403, %v487
      %v489 = vpop.f32.mrf.mxu0
      %v490 = vadd.f32 %v403, %v489
      %491 = vmatmul.bf16.gmra.mxu0 %v383
      %v492 = vpop.f32.mrf.mxu0
      %v493 = vadd.f32 %v403, %v492
      %v494 = vpop.f32.mrf.mxu0
      %v495 = vadd.f32 %v403, %v494
      %496 = vmatmul.bf16.gmra.mxu0 %v384
      %v497 = vpop.f32.mrf.mxu0
      %v498 = vadd.f32 %v403, %v497
      %v499 = vpop.f32.mrf.mxu0
      %v500 = vadd.f32 %v403, %v499
      %501 = vdwg.mxu0
      %v502 = vmax.f32 %v463, 0.0
      %v503 = vmax.f32 %v465, 0.0
      %v504 = vmax.f32 %v468, 0.0
      %v505 = vmax.f32 %v470, 0.0
      %v506 = vmax.f32 %v473, 0.0
      %v507 = vmax.f32 %v475, 0.0
      %v508 = vmax.f32 %v478, 0.0
      %v509 = vmax.f32 %v480, 0.0
      %v510 = vmax.f32 %v483, 0.0
      %v511 = vmax.f32 %v485, 0.0
      %v512 = vmax.f32 %v488, 0.0
      %v513 = vmax.f32 %v490, 0.0
      %v514 = vmax.f32 %v493, 0.0
      %v515 = vmax.f32 %v495, 0.0
      %v516 = vmax.f32 %v498, 0.0
      %v517 = vmax.f32 %v500, 0.0
      %v518 = vpack.c.bf16 %v503, %v502
      %v519 = vpack.c.bf16 %v505, %v504
      %v520 = vpack.c.bf16 %v507, %v506
      %v521 = vpack.c.bf16 %v509, %v508
      %v522 = vpack.c.bf16 %v511, %v510
      %v523 = vpack.c.bf16 %v513, %v512
      %v524 = vpack.c.bf16 %v515, %v514
      %v525 = vpack.c.bf16 %v517, %v516
      %v526 = vld [vmem:[#allocation8] sm:$0xf]
      %v527 = vld [vmem:[#allocation8 + $0x4] sm:$0xf]
      %v528 = vld [vmem:[#allocation8 + $0x8] sm:$0xf]
      %v529 = vld [vmem:[#allocation8 + $0xc] sm:$0xf]
      %v530 = vld [vmem:[#allocation8 + $0x10] sm:$0xf]
      %v531 = vld [vmem:[#allocation8 + $0x14] sm:$0xf]
      %v532 = vld [vmem:[#allocation8 + $0x18] sm:$0xf]
      %v533 = vld [vmem:[#allocation8 + $0x1c] sm:$0xf]
      %v534 = vld [vmem:[#allocation8 + $0x20] sm:$0xf]
      %v535 = vld [vmem:[#allocation8 + $0x24] sm:$0xf]
      %v536 = vld [vmem:[#allocation8 + $0x28] sm:$0xf]
      %v537 = vld [vmem:[#allocation8 + $0x2c] sm:$0xf]
      %v538 = vld [vmem:[#allocation8 + $0x30] sm:$0xf]
      %v539 = vld [vmem:[#allocation8 + $0x34] sm:$0xf]
      %v540 = vld [vmem:[#allocation8 + $0x38] sm:$0xf]
      %v541 = vld [vmem:[#allocation8 + $0x3c] sm:$0xf]
      %v542 = vld [vmem:[%s7] sm:$0x1]
      %v544 = vperm.slane %v542, 0
      %v562 = vunpack.c.l.b16 %v526
      %v563 = vunpack.c.l.b16 %v527
      %v564 = vunpack.c.l.b16 %v528
      %v565 = vunpack.c.l.b16 %v529
      %v566 = vunpack.c.l.b16 %v530
      %v567 = vunpack.c.l.b16 %v531
      %v568 = vunpack.c.l.b16 %v532
      %v569 = vunpack.c.l.b16 %v533
      %v570 = vunpack.c.l.b16 %v534
      %v571 = vunpack.c.l.b16 %v535
      %v572 = vunpack.c.l.b16 %v536
      %v573 = vunpack.c.l.b16 %v537
      %v574 = vunpack.c.l.b16 %v538
      %v575 = vunpack.c.l.b16 %v539
      %v576 = vunpack.c.l.b16 %v540
      %v577 = vunpack.c.l.b16 %v541
      %v578 = vpack.c.b16 %v563, %v562
      %v579 = vpack.c.b16 %v565, %v564
      %v580 = vpack.c.b16 %v567, %v566
      %v581 = vpack.c.b16 %v569, %v568
      %v582 = vpack.c.b16 %v571, %v570
      %v583 = vpack.c.b16 %v573, %v572
      %v584 = vpack.c.b16 %v575, %v574
      %v585 = vpack.c.b16 %v577, %v576
      %594 = vmatpush.bf16.msra.mxu0 %v585
      %595 = vmatpush.bf16.msra.mxu0 %v584
      %596 = vmatpush.bf16.msra.mxu0 %v583
      %597 = vmatpush.bf16.msra.mxu0 %v582
      %598 = vmatpush.bf16.msra.mxu0 %v581
      %599 = vmatpush.bf16.msra.mxu0 %v580
      %600 = vmatpush.bf16.msra.mxu0 %v579
      %601 = vmatpush.bf16.msra.mxu0 %v578
      %602 = vmatmul.bf16.gmra.mxu0 %v518
      %v603 = vpop.f32.mrf.mxu0
      %v604 = vadd.f32 %v544, %v603
      %v605 = vpop.f32.mrf.mxu0
      %v606 = vadd.f32 %v544, %v605
      %607 = vmatmul.bf16.gmra.mxu0 %v519
      %v608 = vpop.f32.mrf.mxu0
      %v609 = vadd.f32 %v544, %v608
      %v610 = vpop.f32.mrf.mxu0
      %v611 = vadd.f32 %v544, %v610
      %612 = vmatmul.bf16.gmra.mxu0 %v520
      %v613 = vpop.f32.mrf.mxu0
      %v614 = vadd.f32 %v544, %v613
      %v615 = vpop.f32.mrf.mxu0
      %v616 = vadd.f32 %v544, %v615
      %617 = vmatmul.bf16.gmra.mxu0 %v521
      %v618 = vpop.f32.mrf.mxu0
      %v619 = vadd.f32 %v544, %v618
      %v620 = vpop.f32.mrf.mxu0
      %v621 = vadd.f32 %v544, %v620
      %622 = vmatmul.bf16.gmra.mxu0 %v522
      %v623 = vpop.f32.mrf.mxu0
      %v624 = vadd.f32 %v544, %v623
      %v625 = vpop.f32.mrf.mxu0
      %v626 = vadd.f32 %v544, %v625
      %627 = vmatmul.bf16.gmra.mxu0 %v523
      %v628 = vpop.f32.mrf.mxu0
      %v629 = vadd.f32 %v544, %v628
      %v630 = vpop.f32.mrf.mxu0
      %v631 = vadd.f32 %v544, %v630
      %632 = vmatmul.bf16.gmra.mxu0 %v524
      %v633 = vpop.f32.mrf.mxu0
      %v634 = vadd.f32 %v544, %v633
      %v635 = vpop.f32.mrf.mxu0
      %v636 = vadd.f32 %v544, %v635
      %637 = vmatmul.bf16.gmra.mxu0 %v525
      %v638 = vpop.f32.mrf.mxu0
      %v639 = vadd.f32 %v544, %v638
      %v640 = vpop.f32.mrf.mxu0
      %v641 = vadd.f32 %v544, %v640
      %642 = vdwg.mxu0
      %v643 = vmax.f32 %v604, 0.0
      %v644 = vmax.f32 %v606, 0.0
      %v645 = vmax.f32 %v609, 0.0
      %v646 = vmax.f32 %v611, 0.0
      %v647 = vmax.f32 %v614, 0.0
      %v648 = vmax.f32 %v616, 0.0
      %v649 = vmax.f32 %v619, 0.0
      %v650 = vmax.f32 %v621, 0.0
      %v651 = vmax.f32 %v624, 0.0
      %v652 = vmax.f32 %v626, 0.0
      %v653 = vmax.f32 %v629, 0.0
      %v654 = vmax.f32 %v631, 0.0
      %v655 = vmax.f32 %v634, 0.0
      %v656 = vmax.f32 %v636, 0.0
      %v657 = vmax.f32 %v639, 0.0
      %v658 = vmax.f32 %v641, 0.0
      %v659 = vpack.c.bf16 %v643, %v643
      %v660 = vpack.c.bf16 %v644, %v644
      %v661 = vpack.c.bf16 %v645, %v645
      %v662 = vpack.c.bf16 %v646, %v646
      %v663 = vpack.c.bf16 %v647, %v647
      %v664 = vpack.c.bf16 %v648, %v648
      %v665 = vpack.c.bf16 %v649, %v649
      %v666 = vpack.c.bf16 %v650, %v650
      %v667 = vpack.c.bf16 %v651, %v651
      %v668 = vpack.c.bf16 %v652, %v652
      %v669 = vpack.c.bf16 %v653, %v653
      %v670 = vpack.c.bf16 %v654, %v654
      %v671 = vpack.c.bf16 %v655, %v655
      %v672 = vpack.c.bf16 %v656, %v656
      %v673 = vpack.c.bf16 %v657, %v657
      %v674 = vpack.c.bf16 %v658, %v658
      %675 = vst [vmem:[%s8] sm:$0xf] %v659
      %676 = vst [vmem:[%s8 + $0x4] sm:$0xf] %v660
      %677 = vst [vmem:[%s8 + $0x8] sm:$0xf] %v661
      %678 = vst [vmem:[%s8 + $0xc] sm:$0xf] %v662
      %679 = vst [vmem:[%s8 + $0x10] sm:$0xf] %v663
      %680 = vst [vmem:[%s8 + $0x14] sm:$0xf] %v664
      %681 = vst [vmem:[%s8 + $0x18] sm:$0xf] %v665
      %682 = vst [vmem:[%s8 + $0x1c] sm:$0xf] %v666
      %683 = vst [vmem:[%s8 + $0x20] sm:$0xf] %v667
      %684 = vst [vmem:[%s8 + $0x24] sm:$0xf] %v668
      %685 = vst [vmem:[%s8 + $0x28] sm:$0xf] %v669
      %686 = vst [vmem:[%s8 + $0x2c] sm:$0xf] %v670
      %687 = vst [vmem:[%s8 + $0x30] sm:$0xf] %v671
      %688 = vst [vmem:[%s8 + $0x34] sm:$0xf] %v672
      %689 = vst [vmem:[%s8 + $0x38] sm:$0xf] %v673
      %690 = vst [vmem:[%s8 + $0x3c] sm:$0xf] %v674
    $region45: #{infograph_forward.5} parent=1 // pred_fallthru
      _
    // Predicated region
    $region46: #{infograph_forward.5} parent=1 // pred_check
      _
    $region47: #{infograph_forward.5} parent=1 // pred_check_branch
      %692 = sbr.rel (0) target = $region49
    $region48: #{infograph_forward.5} parent=1 // pred_region
      _
    $region49: #{infograph_forward.5} parent=1 // pred_fallthru
      _
    // Predicated region
    $region50: #{infograph_forward.5} parent=1 // pred_check
      _
    $region51: #{infograph_forward.5} parent=1 // pred_check_branch
      %694 = sbr.rel (0) target = $region53
    $region52: #{infograph_forward.5} parent=1 // pred_region
      _
    $region53: #{infograph_forward.5} parent=1 // pred_fallthru
      _
    %695 = vsyncpa [#allocation7], 1
    %696 = vsyncpa [#allocation9], 1

// kernel: infograph_forward.4
$region0: #{infograph_forward.4}
  #allocation0 [shape = 'u32[]', space=smem, size = 0x4, offset = 0x4, fixed_abs, tag = 'smem constant byte address 0x4 - core index']
  #allocation1 [shape = 'u32[72,128]{1,0:T(1,128)}', space=vmem, size = 0x9000, scoped, tag = 'internal scratch']
  #allocation2 [shape = 'f32[128,128]{1,0:T(8,128)}', space=vmem, size = 0x10000, scoped, tag = 'scratch operand']
  #allocation3 [shape = 's32[1]{0}', space=sflag, size = 0x4, scoped, tag = 'scoped memory for infograph_forward.4']
  #allocation4 [shape = 's32[1]{0:T(128)S(6)}', space=smem, size = 0x200, scoped, tag = 'prefetched SMEM operand 0']
  #allocation5 [shape = 's32[1]{0:T(128)S(6)}', space=smem, size = 0x200, scoped, tag = 'prefetched SMEM operand 1']
  %s0 = inlined_call_operand.<no memory space> [shape: s32[1], index: 0, kind: input, shape index: {}]
  %s1 = inlined_call_operand.<no memory space> [shape: s32[1], index: 1, kind: input, shape index: {}]
  %s2 = inlined_call_operand.vmem [shape: bf16[128,128], index: 2, kind: input, shape index: {}]
  %s3 = inlined_call_operand.vmem [shape: bf16[128,128], index: 3, kind: input, shape index: {}]
  %s4 = inlined_call_operand.vmem [shape: bf16[128,128], index: 4, kind: input, shape index: {}]
  %s5 = inlined_call_operand.vmem [shape: f32[1,128], index: 5, kind: input, shape index: {}]
  %s6 = inlined_call_operand.vmem [shape: bf16[128,128], index: 6, kind: input, shape index: {}]
  %s7 = inlined_call_operand.vmem [shape: f32[1,128], index: 7, kind: input, shape index: {}]
  %s8 = inlined_call_operand.vmem [shape: bf16[128,128], index: 8, kind: output, shape index: {}]
  %s9 = sld [smem:[#allocation0]]
  $region46: #{infograph_forward.4} parent=0
    _
  %s11 = ssub.s32 1, %s9
  %s12 = scalar_select 0, %s11, %s9
  %13 = sst [smem:[#allocation4]] %s0
  %14 = sst [smem:[#allocation5]] %s1
  // Predicated region
  $region2: #{infograph_forward.4} parent=0 // pred_check
    _
  $region3: #{infograph_forward.4} parent=0 // pred_check_branch
    %16 = sbr.rel (0) target = $region5
  $region4: #{infograph_forward.4} parent=0 // pred_region
    %s17 = sadd.s32 0, 0
    %s18 = sld [smem:[#allocation4 + %s17]]
    %p19 = scmp.lt.s32.totalorder %s18, 0
    %s20 = scalar_select %p19, %s18, 0
    %s21 = smul.addr %s20, 4
    %s22 = scalar_lea.vmem %s2, %s21
    %s23 = sadd.s32 0, 0
    %s24 = sld [smem:[#allocation4 + %s23]]
  $region5: #{infograph_forward.4} parent=0 // pred_fallthru
    _
  // Predicated region
  $region6: #{infograph_forward.4} parent=0 // pred_check
    _
  $region7: #{infograph_forward.4} parent=0 // pred_check_branch
    %26 = sbr.rel (0) target = $region9
  $region8: #{infograph_forward.4} parent=0 // pred_region
    %s27 = sadd.s32 0, 0
    %s28 = sld [smem:[#allocation4 + %s27]]
    %s29 = smul.u32 16, %s28
    %p30 = scmp.lt.s32.totalorder %s29, 15
    %s31 = scalar_select %p30, %s29, 15
    %s32 = smul.addr %s31, 4
    %s33 = scalar_lea.vmem %s3, %s32
    %s34 = sadd.s32 0, 0
    %s35 = sld [smem:[#allocation4 + %s34]]
    %s36 = smul.u32 16, %s35
  $region9: #{infograph_forward.4} parent=0 // pred_fallthru
    _
  // Predicated region
  $region10: #{infograph_forward.4} parent=0 // pred_check
    _
  $region11: #{infograph_forward.4} parent=0 // pred_check_branch
    %38 = sbr.rel (0) target = $region13
  $region12: #{infograph_forward.4} parent=0 // pred_region
    _
  $region13: #{infograph_forward.4} parent=0 // pred_fallthru
    _
  // Predicated region
  $region14: #{infograph_forward.4} parent=0 // pred_check
    _
  $region15: #{infograph_forward.4} parent=0 // pred_check_branch
    %40 = sbr.rel (0) target = $region17
  $region16: #{infograph_forward.4} parent=0 // pred_region
    _
  $region17: #{infograph_forward.4} parent=0 // pred_fallthru
    _
  // Predicated region
  $region18: #{infograph_forward.4} parent=0 // pred_check
    _
  $region19: #{infograph_forward.4} parent=0 // pred_check_branch
    %42 = sbr.rel (0) target = $region21
  $region20: #{infograph_forward.4} parent=0 // pred_region
    _
  $region21: #{infograph_forward.4} parent=0 // pred_fallthru
    _
  // Predicated region
  $region22: #{infograph_forward.4} parent=0 // pred_check
    _
  $region23: #{infograph_forward.4} parent=0 // pred_check_branch
    %44 = sbr.rel (0) target = $region25
  $region24: #{infograph_forward.4} parent=0 // pred_region
    _
  $region25: #{infograph_forward.4} parent=0 // pred_fallthru
    _
  %s45 = sadd.s32 0, 0
  %s46 = sld [smem:[#allocation4 + %s45]]
  %p47 = scmp.lt.s32.totalorder %s46, 0
  %s48 = scalar_select %p47, %s46, 0
  %s49 = smul.addr %s48, 4
  %s50 = scalar_lea.vmem %s2, %s49
  %s51 = sadd.s32 0, 0
  %s52 = sld [smem:[#allocation4 + %s51]]
  %s53 = smul.u32 16, %s52
  %p54 = scmp.lt.s32.totalorder %s53, 15
  %s55 = scalar_select %p54, %s53, 15
  %s56 = smul.addr %s55, 4
  %s57 = scalar_lea.vmem %s3, %s56
  %s58 = sadd.s32 0, 0
  %s59 = sld [smem:[#allocation4 + %s58]]
  %p60 = scmp.lt.s32.totalorder %s59, 0
  %s61 = scalar_select %p60, %s59, 0
  %s62 = smul.addr %s61, 4
  %s63 = scalar_lea.vmem %s2, %s62
  %s64 = sadd.s32 0, 0
  %s65 = sld [smem:[#allocation4 + %s64]]
  %s66 = sadd.s32 0, 0
  %s67 = sld [smem:[#allocation4 + %s66]]
  %s68 = smul.u32 16, %s67
  %p69 = scmp.lt.s32.totalorder %s68, 15
  %s70 = scalar_select %p69, %s68, 15
  %s71 = smul.addr %s70, 4
  %s72 = scalar_lea.vmem %s3, %s71
  %s73 = sadd.s32 0, 0
  %s74 = sld [smem:[#allocation4 + %s73]]
  %s75 = smul.u32 16, %s74
  %p76 = scmp.eq.s32.totalorder 0, 0
  // Predicated region
  $region26: #{infograph_forward.4} parent=0 // pred_check
    %p77 = pneg %p76
  $region27: #{infograph_forward.4} parent=0 // pred_check_branch
    %79 = sbr.rel (%p77) target = $region29
  $region28: #{infograph_forward.4} parent=0 // pred_region
    %80 = vst [vmem:[#allocation2] sm:$0xff] 0.0
    %81 = vst [vmem:[#allocation2 + $0x8] sm:$0xff] 0.0
    %82 = vst [vmem:[#allocation2 + $0x10] sm:$0xff] 0.0
    %83 = vst [vmem:[#allocation2 + $0x18] sm:$0xff] 0.0
    %84 = vst [vmem:[#allocation2 + $0x20] sm:$0xff] 0.0
    %85 = vst [vmem:[#allocation2 + $0x28] sm:$0xff] 0.0
    %86 = vst [vmem:[#allocation2 + $0x30] sm:$0xff] 0.0
    %87 = vst [vmem:[#allocation2 + $0x38] sm:$0xff] 0.0
    %88 = vst [vmem:[#allocation2 + $0x40] sm:$0xff] 0.0
    %89 = vst [vmem:[#allocation2 + $0x48] sm:$0xff] 0.0
    %90 = vst [vmem:[#allocation2 + $0x50] sm:$0xff] 0.0
    %91 = vst [vmem:[#allocation2 + $0x58] sm:$0xff] 0.0
    %92 = vst [vmem:[#allocation2 + $0x60] sm:$0xff] 0.0
    %93 = vst [vmem:[#allocation2 + $0x68] sm:$0xff] 0.0
    %94 = vst [vmem:[#allocation2 + $0x70] sm:$0xff] 0.0
    %95 = vst [vmem:[#allocation2 + $0x78] sm:$0xff] 0.0
  $region29: #{infograph_forward.4} parent=0 // pred_fallthru
    _
  %s96 = sld [smem:[#allocation5]]
  %p97 = scmp.lt.s32.totalorder 0, %s96
  // Predicated region
  $region30: #{infograph_forward.4} parent=0 // pred_check
    %p98 = pneg %p97
  $region31: #{infograph_forward.4} parent=0 // pred_check_branch
    %100 = sbr.rel (%p98) target = $region33
  $region32: #{infograph_forward.4} parent=0 // pred_region
    %v101 = vld [vmem:[#allocation2] sm:$0xff]
    %v102 = vld [vmem:[#allocation2 + $0x8] sm:$0xff]
    %v103 = vld [vmem:[#allocation2 + $0x10] sm:$0xff]
    %v104 = vld [vmem:[#allocation2 + $0x18] sm:$0xff]
    %v105 = vld [vmem:[#allocation2 + $0x20] sm:$0xff]
    %v106 = vld [vmem:[#allocation2 + $0x28] sm:$0xff]
    %v107 = vld [vmem:[#allocation2 + $0x30] sm:$0xff]
    %v108 = vld [vmem:[#allocation2 + $0x38] sm:$0xff]
    %v109 = vld [vmem:[#allocation2 + $0x40] sm:$0xff]
    %v110 = vld [vmem:[#allocation2 + $0x48] sm:$0xff]
    %v111 = vld [vmem:[#allocation2 + $0x50] sm:$0xff]
    %v112 = vld [vmem:[#allocation2 + $0x58] sm:$0xff]
    %v113 = vld [vmem:[#allocation2 + $0x60] sm:$0xff]
    %v114 = vld [vmem:[#allocation2 + $0x68] sm:$0xff]
    %v115 = vld [vmem:[#allocation2 + $0x70] sm:$0xff]
    %v116 = vld [vmem:[#allocation2 + $0x78] sm:$0xff]
    %v117 = vld [vmem:[%s63] sm:$0xf]
    %v118 = vld [vmem:[%s63 + $0x4] sm:$0xf]
    %v119 = vld [vmem:[%s63 + $0x8] sm:$0xf]
    %v120 = vld [vmem:[%s63 + $0xc] sm:$0xf]
    %v121 = vld [vmem:[%s63 + $0x10] sm:$0xf]
    %v122 = vld [vmem:[%s63 + $0x14] sm:$0xf]
    %v123 = vld [vmem:[%s63 + $0x18] sm:$0xf]
    %v124 = vld [vmem:[%s63 + $0x1c] sm:$0xf]
    %v125 = vld [vmem:[%s63 + $0x20] sm:$0xf]
    %v126 = vld [vmem:[%s63 + $0x24] sm:$0xf]
    %v127 = vld [vmem:[%s63 + $0x28] sm:$0xf]
    %v128 = vld [vmem:[%s63 + $0x2c] sm:$0xf]
    %v129 = vld [vmem:[%s63 + $0x30] sm:$0xf]
    %v130 = vld [vmem:[%s63 + $0x34] sm:$0xf]
    %v131 = vld [vmem:[%s63 + $0x38] sm:$0xf]
    %v132 = vld [vmem:[%s63 + $0x3c] sm:$0xf]
    %v133 = vld [vmem:[%s72] sm:$0xf]
    %v134 = vld [vmem:[%s72 + $0x4] sm:$0xf]
    %v135 = vld [vmem:[%s72 + $0x8] sm:$0xf]
    %v136 = vld [vmem:[%s72 + $0xc] sm:$0xf]
    %v137 = vld [vmem:[%s72 + $0x10] sm:$0xf]
    %v138 = vld [vmem:[%s72 + $0x14] sm:$0xf]
    %v139 = vld [vmem:[%s72 + $0x18] sm:$0xf]
    %v140 = vld [vmem:[%s72 + $0x1c] sm:$0xf]
    %v141 = vld [vmem:[%s72 + $0x20] sm:$0xf]
    %v142 = vld [vmem:[%s72 + $0x24] sm:$0xf]
    %v143 = vld [vmem:[%s72 + $0x28] sm:$0xf]
    %v144 = vld [vmem:[%s72 + $0x2c] sm:$0xf]
    %v145 = vld [vmem:[%s72 + $0x30] sm:$0xf]
    %v146 = vld [vmem:[%s72 + $0x34] sm:$0xf]
    %v147 = vld [vmem:[%s72 + $0x38] sm:$0xf]
    %v148 = vld [vmem:[%s72 + $0x3c] sm:$0xf]
    %v165 = vunpack.c.l.b16 %v117
    %v166 = vunpack.c.l.b16 %v118
    %v167 = vunpack.c.l.b16 %v119
    %v168 = vunpack.c.l.b16 %v120
    %v169 = vunpack.c.l.b16 %v121
    %v170 = vunpack.c.l.b16 %v122
    %v171 = vunpack.c.l.b16 %v123
    %v172 = vunpack.c.l.b16 %v124
    %v173 = vunpack.c.l.b16 %v125
    %v174 = vunpack.c.l.b16 %v126
    %v175 = vunpack.c.l.b16 %v127
    %v176 = vunpack.c.l.b16 %v128
    %v177 = vunpack.c.l.b16 %v129
    %v178 = vunpack.c.l.b16 %v130
    %v179 = vunpack.c.l.b16 %v131
    %v180 = vunpack.c.l.b16 %v132
    %v181 = vpack.c.b16 %v166, %v165
    %v182 = vpack.c.b16 %v168, %v167
    %v183 = vpack.c.b16 %v170, %v169
    %v184 = vpack.c.b16 %v172, %v171
    %v185 = vpack.c.b16 %v174, %v173
    %v186 = vpack.c.b16 %v176, %v175
    %v187 = vpack.c.b16 %v178, %v177
    %v188 = vpack.c.b16 %v180, %v179
    %v213 = vunpack.c.l.b16 %v133
    %v214 = vunpack.c.l.b16 %v134
    %v215 = vunpack.c.l.b16 %v135
    %v216 = vunpack.c.l.b16 %v136
    %v217 = vunpack.c.l.b16 %v137
    %v218 = vunpack.c.l.b16 %v138
    %v219 = vunpack.c.l.b16 %v139
    %v220 = vunpack.c.l.b16 %v140
    %v221 = vunpack.c.l.b16 %v141
    %v222 = vunpack.c.l.b16 %v142
    %v223 = vunpack.c.l.b16 %v143
    %v224 = vunpack.c.l.b16 %v144
    %v225 = vunpack.c.l.b16 %v145
    %v226 = vunpack.c.l.b16 %v146
    %v227 = vunpack.c.l.b16 %v147
    %v228 = vunpack.c.l.b16 %v148
    %v229 = vpack.c.b16 %v214, %v213
    %v230 = vpack.c.b16 %v216, %v215
    %v231 = vpack.c.b16 %v218, %v217
    %v232 = vpack.c.b16 %v220, %v219
    %v233 = vpack.c.b16 %v222, %v221
    %v234 = vpack.c.b16 %v224, %v223
    %v235 = vpack.c.b16 %v226, %v225
    %v236 = vpack.c.b16 %v228, %v227
    %245 = vmatpush.bf16.msra.mxu0 %v236
    %246 = vmatpush.bf16.msra.mxu0 %v235
    %247 = vmatpush.bf16.msra.mxu0 %v234
    %248 = vmatpush.bf16.msra.mxu0 %v233
    %249 = vmatpush.bf16.msra.mxu0 %v232
    %250 = vmatpush.bf16.msra.mxu0 %v231
    %251 = vmatpush.bf16.msra.mxu0 %v230
    %252 = vmatpush.bf16.msra.mxu0 %v229
    %253 = vmatmul.bf16.gmra.mxu0 %v181
    %v254 = vpop.f32.mrf.mxu0
    %v255 = vadd.f32 0.0, %v254
    %v256 = vpop.f32.mrf.mxu0
    %v257 = vadd.f32 0.0, %v256
    %258 = vmatmul.bf16.gmra.mxu0 %v182
    %v259 = vpop.f32.mrf.mxu0
    %v260 = vadd.f32 0.0, %v259
    %v261 = vpop.f32.mrf.mxu0
    %v262 = vadd.f32 0.0, %v261
    %263 = vmatmul.bf16.gmra.mxu0 %v183
    %v264 = vpop.f32.mrf.mxu0
    %v265 = vadd.f32 0.0, %v264
    %v266 = vpop.f32.mrf.mxu0
    %v267 = vadd.f32 0.0, %v266
    %268 = vmatmul.bf16.gmra.mxu0 %v184
    %v269 = vpop.f32.mrf.mxu0
    %v270 = vadd.f32 0.0, %v269
    %v271 = vpop.f32.mrf.mxu0
    %v272 = vadd.f32 0.0, %v271
    %273 = vmatmul.bf16.gmra.mxu0 %v185
    %v274 = vpop.f32.mrf.mxu0
    %v275 = vadd.f32 0.0, %v274
    %v276 = vpop.f32.mrf.mxu0
    %v277 = vadd.f32 0.0, %v276
    %278 = vmatmul.bf16.gmra.mxu0 %v186
    %v279 = vpop.f32.mrf.mxu0
    %v280 = vadd.f32 0.0, %v279
    %v281 = vpop.f32.mrf.mxu0
    %v282 = vadd.f32 0.0, %v281
    %283 = vmatmul.bf16.gmra.mxu0 %v187
    %v284 = vpop.f32.mrf.mxu0
    %v285 = vadd.f32 0.0, %v284
    %v286 = vpop.f32.mrf.mxu0
    %v287 = vadd.f32 0.0, %v286
    %288 = vmatmul.bf16.gmra.mxu0 %v188
    %v289 = vpop.f32.mrf.mxu0
    %v290 = vadd.f32 0.0, %v289
    %v291 = vpop.f32.mrf.mxu0
    %v292 = vadd.f32 0.0, %v291
    %293 = vdwg.mxu0
    %v294 = vadd.f32 %v101, %v255
    %v295 = vadd.f32 %v102, %v257
    %v296 = vadd.f32 %v103, %v260
    %v297 = vadd.f32 %v104, %v262
    %v298 = vadd.f32 %v105, %v265
    %v299 = vadd.f32 %v106, %v267
    %v300 = vadd.f32 %v107, %v270
    %v301 = vadd.f32 %v108, %v272
    %v302 = vadd.f32 %v109, %v275
    %v303 = vadd.f32 %v110, %v277
    %v304 = vadd.f32 %v111, %v280
    %v305 = vadd.f32 %v112, %v282
    %v306 = vadd.f32 %v113, %v285
    %v307 = vadd.f32 %v114, %v287
    %v308 = vadd.f32 %v115, %v290
    %v309 = vadd.f32 %v116, %v292
    %310 = vst [vmem:[#allocation2] sm:$0xff] %v294
    %311 = vst [vmem:[#allocation2 + $0x8] sm:$0xff] %v295
    %312 = vst [vmem:[#allocation2 + $0x10] sm:$0xff] %v296
    %313 = vst [vmem:[#allocation2 + $0x18] sm:$0xff] %v297
    %314 = vst [vmem:[#allocation2 + $0x20] sm:$0xff] %v298
    %315 = vst [vmem:[#allocation2 + $0x28] sm:$0xff] %v299
    %316 = vst [vmem:[#allocation2 + $0x30] sm:$0xff] %v300
    %317 = vst [vmem:[#allocation2 + $0x38] sm:$0xff] %v301
    %318 = vst [vmem:[#allocation2 + $0x40] sm:$0xff] %v302
    %319 = vst [vmem:[#allocation2 + $0x48] sm:$0xff] %v303
    %320 = vst [vmem:[#allocation2 + $0x50] sm:$0xff] %v304
    %321 = vst [vmem:[#allocation2 + $0x58] sm:$0xff] %v305
    %322 = vst [vmem:[#allocation2 + $0x60] sm:$0xff] %v306
    %323 = vst [vmem:[#allocation2 + $0x68] sm:$0xff] %v307
    %324 = vst [vmem:[#allocation2 + $0x70] sm:$0xff] %v308
    %325 = vst [vmem:[#allocation2 + $0x78] sm:$0xff] %v309
  $region33: #{infograph_forward.4} parent=0 // pred_fallthru
    _
  // Predicated region
  $region34: #{infograph_forward.4} parent=0 // pred_check
    %p326 = pneg %p76
  $region35: #{infograph_forward.4} parent=0 // pred_check_branch
    %328 = sbr.rel (%p326) target = $region37
  $region36: #{infograph_forward.4} parent=0 // pred_region
    %v329 = vld [vmem:[#allocation2] sm:$0xff]
    %v330 = vld [vmem:[#allocation2 + $0x8] sm:$0xff]
    %v331 = vld [vmem:[#allocation2 + $0x10] sm:$0xff]
    %v332 = vld [vmem:[#allocation2 + $0x18] sm:$0xff]
    %v333 = vld [vmem:[#allocation2 + $0x20] sm:$0xff]
    %v334 = vld [vmem:[#allocation2 + $0x28] sm:$0xff]
    %v335 = vld [vmem:[#allocation2 + $0x30] sm:$0xff]
    %v336 = vld [vmem:[#allocation2 + $0x38] sm:$0xff]
    %v337 = vld [vmem:[#allocation2 + $0x40] sm:$0xff]
    %v338 = vld [vmem:[#allocation2 + $0x48] sm:$0xff]
    %v339 = vld [vmem:[#allocation2 + $0x50] sm:$0xff]
    %v340 = vld [vmem:[#allocation2 + $0x58] sm:$0xff]
    %v341 = vld [vmem:[#allocation2 + $0x60] sm:$0xff]
    %v342 = vld [vmem:[#allocation2 + $0x68] sm:$0xff]
    %v343 = vld [vmem:[#allocation2 + $0x70] sm:$0xff]
    %v344 = vld [vmem:[#allocation2 + $0x78] sm:$0xff]
    %v345 = vpack.c.bf16 %v330, %v329
    %v346 = vpack.c.bf16 %v332, %v331
    %v347 = vpack.c.bf16 %v334, %v333
    %v348 = vpack.c.bf16 %v336, %v335
    %v349 = vpack.c.bf16 %v338, %v337
    %v350 = vpack.c.bf16 %v340, %v339
    %v351 = vpack.c.bf16 %v342, %v341
    %v352 = vpack.c.bf16 %v344, %v343
    %v353 = vld [vmem:[%s4] sm:$0xf]
    %v354 = vld [vmem:[%s4 + $0x4] sm:$0xf]
    %v355 = vld [vmem:[%s4 + $0x8] sm:$0xf]
    %v356 = vld [vmem:[%s4 + $0xc] sm:$0xf]
    %v357 = vld [vmem:[%s4 + $0x10] sm:$0xf]
    %v358 = vld [vmem:[%s4 + $0x14] sm:$0xf]
    %v359 = vld [vmem:[%s4 + $0x18] sm:$0xf]
    %v360 = vld [vmem:[%s4 + $0x1c] sm:$0xf]
    %v361 = vld [vmem:[%s4 + $0x20] sm:$0xf]
    %v362 = vld [vmem:[%s4 + $0x24] sm:$0xf]
    %v363 = vld [vmem:[%s4 + $0x28] sm:$0xf]
    %v364 = vld [vmem:[%s4 + $0x2c] sm:$0xf]
    %v365 = vld [vmem:[%s4 + $0x30] sm:$0xf]
    %v366 = vld [vmem:[%s4 + $0x34] sm:$0xf]
    %v367 = vld [vmem:[%s4 + $0x38] sm:$0xf]
    %v368 = vld [vmem:[%s4 + $0x3c] sm:$0xf]
    %v369 = vld [vmem:[%s5] sm:$0x1]
    %v371 = vperm.slane %v369, 0
    %v389 = vunpack.c.l.b16 %v353
    %v390 = vunpack.c.l.b16 %v354
    %v391 = vunpack.c.l.b16 %v355
    %v392 = vunpack.c.l.b16 %v356
    %v393 = vunpack.c.l.b16 %v357
    %v394 = vunpack.c.l.b16 %v358
    %v395 = vunpack.c.l.b16 %v359
    %v396 = vunpack.c.l.b16 %v360
    %v397 = vunpack.c.l.b16 %v361
    %v398 = vunpack.c.l.b16 %v362
    %v399 = vunpack.c.l.b16 %v363
    %v400 = vunpack.c.l.b16 %v364
    %v401 = vunpack.c.l.b16 %v365
    %v402 = vunpack.c.l.b16 %v366
    %v403 = vunpack.c.l.b16 %v367
    %v404 = vunpack.c.l.b16 %v368
    %v405 = vpack.c.b16 %v390, %v389
    %v406 = vpack.c.b16 %v392, %v391
    %v407 = vpack.c.b16 %v394, %v393
    %v408 = vpack.c.b16 %v396, %v395
    %v409 = vpack.c.b16 %v398, %v397
    %v410 = vpack.c.b16 %v400, %v399
    %v411 = vpack.c.b16 %v402, %v401
    %v412 = vpack.c.b16 %v404, %v403
    %421 = vmatpush.bf16.msra.mxu0 %v412
    %422 = vmatpush.bf16.msra.mxu0 %v411
    %423 = vmatpush.bf16.msra.mxu0 %v410
    %424 = vmatpush.bf16.msra.mxu0 %v409
    %425 = vmatpush.bf16.msra.mxu0 %v408
    %426 = vmatpush.bf16.msra.mxu0 %v407
    %427 = vmatpush.bf16.msra.mxu0 %v406
    %428 = vmatpush.bf16.msra.mxu0 %v405
    %429 = vmatmul.bf16.gmra.mxu0 %v345
    %v430 = vpop.f32.mrf.mxu0
    %v431 = vadd.f32 %v371, %v430
    %v432 = vpop.f32.mrf.mxu0
    %v433 = vadd.f32 %v371, %v432
    %434 = vmatmul.bf16.gmra.mxu0 %v346
    %v435 = vpop.f32.mrf.mxu0
    %v436 = vadd.f32 %v371, %v435
    %v437 = vpop.f32.mrf.mxu0
    %v438 = vadd.f32 %v371, %v437
    %439 = vmatmul.bf16.gmra.mxu0 %v347
    %v440 = vpop.f32.mrf.mxu0
    %v441 = vadd.f32 %v371, %v440
    %v442 = vpop.f32.mrf.mxu0
    %v443 = vadd.f32 %v371, %v442
    %444 = vmatmul.bf16.gmra.mxu0 %v348
    %v445 = vpop.f32.mrf.mxu0
    %v446 = vadd.f32 %v371, %v445
    %v447 = vpop.f32.mrf.mxu0
    %v448 = vadd.f32 %v371, %v447
    %449 = vmatmul.bf16.gmra.mxu0 %v349
    %v450 = vpop.f32.mrf.mxu0
    %v451 = vadd.f32 %v371, %v450
    %v452 = vpop.f32.mrf.mxu0
    %v453 = vadd.f32 %v371, %v452
    %454 = vmatmul.bf16.gmra.mxu0 %v350
    %v455 = vpop.f32.mrf.mxu0
    %v456 = vadd.f32 %v371, %v455
    %v457 = vpop.f32.mrf.mxu0
    %v458 = vadd.f32 %v371, %v457
    %459 = vmatmul.bf16.gmra.mxu0 %v351
    %v460 = vpop.f32.mrf.mxu0
    %v461 = vadd.f32 %v371, %v460
    %v462 = vpop.f32.mrf.mxu0
    %v463 = vadd.f32 %v371, %v462
    %464 = vmatmul.bf16.gmra.mxu0 %v352
    %v465 = vpop.f32.mrf.mxu0
    %v466 = vadd.f32 %v371, %v465
    %v467 = vpop.f32.mrf.mxu0
    %v468 = vadd.f32 %v371, %v467
    %469 = vdwg.mxu0
    %v470 = vmax.f32 %v431, 0.0
    %v471 = vmax.f32 %v433, 0.0
    %v472 = vmax.f32 %v436, 0.0
    %v473 = vmax.f32 %v438, 0.0
    %v474 = vmax.f32 %v441, 0.0
    %v475 = vmax.f32 %v443, 0.0
    %v476 = vmax.f32 %v446, 0.0
    %v477 = vmax.f32 %v448, 0.0
    %v478 = vmax.f32 %v451, 0.0
    %v479 = vmax.f32 %v453, 0.0
    %v480 = vmax.f32 %v456, 0.0
    %v481 = vmax.f32 %v458, 0.0
    %v482 = vmax.f32 %v461, 0.0
    %v483 = vmax.f32 %v463, 0.0
    %v484 = vmax.f32 %v466, 0.0
    %v485 = vmax.f32 %v468, 0.0
    %v486 = vpack.c.bf16 %v471, %v470
    %v487 = vpack.c.bf16 %v473, %v472
    %v488 = vpack.c.bf16 %v475, %v474
    %v489 = vpack.c.bf16 %v477, %v476
    %v490 = vpack.c.bf16 %v479, %v478
    %v491 = vpack.c.bf16 %v481, %v480
    %v492 = vpack.c.bf16 %v483, %v482
    %v493 = vpack.c.bf16 %v485, %v484
    %v494 = vld [vmem:[%s6] sm:$0xf]
    %v495 = vld [vmem:[%s6 + $0x4] sm:$0xf]
    %v496 = vld [vmem:[%s6 + $0x8] sm:$0xf]
    %v497 = vld [vmem:[%s6 + $0xc] sm:$0xf]
    %v498 = vld [vmem:[%s6 + $0x10] sm:$0xf]
    %v499 = vld [vmem:[%s6 + $0x14] sm:$0xf]
    %v500 = vld [vmem:[%s6 + $0x18] sm:$0xf]
    %v501 = vld [vmem:[%s6 + $0x1c] sm:$0xf]
    %v502 = vld [vmem:[%s6 + $0x20] sm:$0xf]
    %v503 = vld [vmem:[%s6 + $0x24] sm:$0xf]
    %v504 = vld [vmem:[%s6 + $0x28] sm:$0xf]
    %v505 = vld [vmem:[%s6 + $0x2c] sm:$0xf]
    %v506 = vld [vmem:[%s6 + $0x30] sm:$0xf]
    %v507 = vld [vmem:[%s6 + $0x34] sm:$0xf]
    %v508 = vld [vmem:[%s6 + $0x38] sm:$0xf]
    %v509 = vld [vmem:[%s6 + $0x3c] sm:$0xf]
    %v510 = vld [vmem:[%s7] sm:$0x1]
    %v512 = vperm.slane %v510, 0
    %v530 = vunpack.c.l.b16 %v494
    %v531 = vunpack.c.l.b16 %v495
    %v532 = vunpack.c.l.b16 %v496
    %v533 = vunpack.c.l.b16 %v497
    %v534 = vunpack.c.l.b16 %v498
    %v535 = vunpack.c.l.b16 %v499
    %v536 = vunpack.c.l.b16 %v500
    %v537 = vunpack.c.l.b16 %v501
    %v538 = vunpack.c.l.b16 %v502
    %v539 = vunpack.c.l.b16 %v503
    %v540 = vunpack.c.l.b16 %v504
    %v541 = vunpack.c.l.b16 %v505
    %v542 = vunpack.c.l.b16 %v506
    %v543 = vunpack.c.l.b16 %v507
    %v544 = vunpack.c.l.b16 %v508
    %v545 = vunpack.c.l.b16 %v509
    %v546 = vpack.c.b16 %v531, %v530
    %v547 = vpack.c.b16 %v533, %v532
    %v548 = vpack.c.b16 %v535, %v534
    %v549 = vpack.c.b16 %v537, %v536
    %v550 = vpack.c.b16 %v539, %v538
    %v551 = vpack.c.b16 %v541, %v540
    %v552 = vpack.c.b16 %v543, %v542
    %v553 = vpack.c.b16 %v545, %v544
    %562 = vmatpush.bf16.msra.mxu0 %v553
    %563 = vmatpush.bf16.msra.mxu0 %v552
    %564 = vmatpush.bf16.msra.mxu0 %v551
    %565 = vmatpush.bf16.msra.mxu0 %v550
    %566 = vmatpush.bf16.msra.mxu0 %v549
    %567 = vmatpush.bf16.msra.mxu0 %v548
    %568 = vmatpush.bf16.msra.mxu0 %v547
    %569 = vmatpush.bf16.msra.mxu0 %v546
    %570 = vmatmul.bf16.gmra.mxu0 %v486
    %v571 = vpop.f32.mrf.mxu0
    %v572 = vadd.f32 %v512, %v571
    %v573 = vpop.f32.mrf.mxu0
    %v574 = vadd.f32 %v512, %v573
    %575 = vmatmul.bf16.gmra.mxu0 %v487
    %v576 = vpop.f32.mrf.mxu0
    %v577 = vadd.f32 %v512, %v576
    %v578 = vpop.f32.mrf.mxu0
    %v579 = vadd.f32 %v512, %v578
    %580 = vmatmul.bf16.gmra.mxu0 %v488
    %v581 = vpop.f32.mrf.mxu0
    %v582 = vadd.f32 %v512, %v581
    %v583 = vpop.f32.mrf.mxu0
    %v584 = vadd.f32 %v512, %v583
    %585 = vmatmul.bf16.gmra.mxu0 %v489
    %v586 = vpop.f32.mrf.mxu0
    %v587 = vadd.f32 %v512, %v586
    %v588 = vpop.f32.mrf.mxu0
    %v589 = vadd.f32 %v512, %v588
    %590 = vmatmul.bf16.gmra.mxu0 %v490
    %v591 = vpop.f32.mrf.mxu0
    %v592 = vadd.f32 %v512, %v591
    %v593 = vpop.f32.mrf.mxu0
    %v594 = vadd.f32 %v512, %v593
    %595 = vmatmul.bf16.gmra.mxu0 %v491
    %v596 = vpop.f32.mrf.mxu0
    %v597 = vadd.f32 %v512, %v596
    %v598 = vpop.f32.mrf.mxu0
    %v599 = vadd.f32 %v512, %v598
    %600 = vmatmul.bf16.gmra.mxu0 %v492
    %v601 = vpop.f32.mrf.mxu0
    %v602 = vadd.f32 %v512, %v601
    %v603 = vpop.f32.mrf.mxu0
    %v604 = vadd.f32 %v512, %v603
    %605 = vmatmul.bf16.gmra.mxu0 %v493
    %v606 = vpop.f32.mrf.mxu0
    %v607 = vadd.f32 %v512, %v606
    %v608 = vpop.f32.mrf.mxu0
    %v609 = vadd.f32 %v512, %v608
    %610 = vdwg.mxu0
    %v611 = vmax.f32 %v572, 0.0
    %v612 = vmax.f32 %v574, 0.0
    %v613 = vmax.f32 %v577, 0.0
    %v614 = vmax.f32 %v579, 0.0
    %v615 = vmax.f32 %v582, 0.0
    %v616 = vmax.f32 %v584, 0.0
    %v617 = vmax.f32 %v587, 0.0
    %v618 = vmax.f32 %v589, 0.0
    %v619 = vmax.f32 %v592, 0.0
    %v620 = vmax.f32 %v594, 0.0
    %v621 = vmax.f32 %v597, 0.0
    %v622 = vmax.f32 %v599, 0.0
    %v623 = vmax.f32 %v602, 0.0
    %v624 = vmax.f32 %v604, 0.0
    %v625 = vmax.f32 %v607, 0.0
    %v626 = vmax.f32 %v609, 0.0
    %v627 = vpack.c.bf16 %v611, %v611
    %v628 = vpack.c.bf16 %v612, %v612
    %v629 = vpack.c.bf16 %v613, %v613
    %v630 = vpack.c.bf16 %v614, %v614
    %v631 = vpack.c.bf16 %v615, %v615
    %v632 = vpack.c.bf16 %v616, %v616
    %v633 = vpack.c.bf16 %v617, %v617
    %v634 = vpack.c.bf16 %v618, %v618
    %v635 = vpack.c.bf16 %v619, %v619
    %v636 = vpack.c.bf16 %v620, %v620
    %v637 = vpack.c.bf16 %v621, %v621
    %v638 = vpack.c.bf16 %v622, %v622
    %v639 = vpack.c.bf16 %v623, %v623
    %v640 = vpack.c.bf16 %v624, %v624
    %v641 = vpack.c.bf16 %v625, %v625
    %v642 = vpack.c.bf16 %v626, %v626
    %643 = vst [vmem:[%s8] sm:$0xf] %v627
    %644 = vst [vmem:[%s8 + $0x4] sm:$0xf] %v628
    %645 = vst [vmem:[%s8 + $0x8] sm:$0xf] %v629
    %646 = vst [vmem:[%s8 + $0xc] sm:$0xf] %v630
    %647 = vst [vmem:[%s8 + $0x10] sm:$0xf] %v631
    %648 = vst [vmem:[%s8 + $0x14] sm:$0xf] %v632
    %649 = vst [vmem:[%s8 + $0x18] sm:$0xf] %v633
    %650 = vst [vmem:[%s8 + $0x1c] sm:$0xf] %v634
    %651 = vst [vmem:[%s8 + $0x20] sm:$0xf] %v635
    %652 = vst [vmem:[%s8 + $0x24] sm:$0xf] %v636
    %653 = vst [vmem:[%s8 + $0x28] sm:$0xf] %v637
    %654 = vst [vmem:[%s8 + $0x2c] sm:$0xf] %v638
    %655 = vst [vmem:[%s8 + $0x30] sm:$0xf] %v639
    %656 = vst [vmem:[%s8 + $0x34] sm:$0xf] %v640
    %657 = vst [vmem:[%s8 + $0x38] sm:$0xf] %v641
    %658 = vst [vmem:[%s8 + $0x3c] sm:$0xf] %v642
  $region37: #{infograph_forward.4} parent=0 // pred_fallthru
    _
  // Predicated region
  $region38: #{infograph_forward.4} parent=0 // pred_check
    _
  $region39: #{infograph_forward.4} parent=0 // pred_check_branch
    %660 = sbr.rel (0) target = $region41
  $region40: #{infograph_forward.4} parent=0 // pred_region
    _
  $region41: #{infograph_forward.4} parent=0 // pred_fallthru
    _
  // Predicated region
  $region42: #{infograph_forward.4} parent=0 // pred_check
    _
  $region43: #{infograph_forward.4} parent=0 // pred_check_branch
    %662 = sbr.rel (0) target = $region45
  $region44: #{infograph_forward.4} parent=0 // pred_region
    _
  $region45: #{infograph_forward.4} parent=0 // pred_fallthru
    _

// kernel: infograph_forward.6
$region0: #{infograph_forward.6}
  #allocation0 [shape = 'u32[]', space=smem, size = 0x4, offset = 0x4, fixed_abs, tag = 'smem constant byte address 0x4 - core index']
  #allocation1 [shape = 'u32[72,128]{1,0:T(1,128)}', space=vmem, size = 0x9000, scoped, tag = 'internal scratch']
  %s0 = inlined_call_operand.vmem [shape: bf16[128,128], index: 0, kind: input, shape index: {}]
  %s1 = inlined_call_operand.vmem [shape: bf16[128,128], index: 1, kind: input, shape index: {}]
  %s2 = inlined_call_operand.hbm [shape: bf16[256,128], index: 2, kind: input, shape index: {}]
  %s3 = inlined_call_operand.vmem [shape: f32[1,128], index: 3, kind: input, shape index: {}]
  %s4 = inlined_call_operand.hbm [shape: bf16[128,128], index: 4, kind: input, shape index: {}]
  %s5 = inlined_call_operand.vmem [shape: f32[1,128], index: 5, kind: input, shape index: {}]
  %s6 = inlined_call_operand.hbm [shape: bf16[128,128], index: 6, kind: input, shape index: {}]
  %s7 = inlined_call_operand.vmem [shape: f32[1,128], index: 7, kind: input, shape index: {}]
  %s8 = inlined_call_operand.hbm [shape: bf16[256,128], index: 8, kind: input, shape index: {}]
  %s9 = inlined_call_operand.vmem [shape: f32[1,128], index: 9, kind: input, shape index: {}]
  %s10 = inlined_call_operand.vmem [shape: f32[128,128], index: 10, kind: output, shape index: {}]
  %s11 = sld [smem:[#allocation0]]
  $region66: #{infograph_forward.6} parent=0
    _
  %s13 = ssub.s32 1, %s11
  %s14 = scalar_select 0, %s13, %s11
  $region1: #{infograph_forward.6} parent=0
    #allocation2 [shape = 'u8[65536]{0}', space=vmem, size = 0x10000, scoped, tag = 'input window, operand 2, single buffered']
    #allocation3 [shape = 's32[1]{0}', space=sflag, size = 0x4, scoped, tag = 'scoped memory for infograph_forward.6']
    #allocation4 [shape = 'u8[32768]{0}', space=vmem, size = 0x8000, scoped, tag = 'input window, operand 4, single buffered']
    #allocation5 [shape = 's32[1]{0}', space=sflag, size = 0x4, scoped, tag = 'scoped memory for infograph_forward.6']
    #allocation6 [shape = 'u8[32768]{0}', space=vmem, size = 0x8000, scoped, tag = 'input window, operand 6, single buffered']
    #allocation7 [shape = 'u8[65536]{0}', space=vmem, size = 0x10000, scoped, tag = 'input window, operand 8, single buffered']
    #allocation8 [shape = 's32[1]{0}', space=sflag, size = 0x4, scoped, tag = 'scoped memory for infograph_forward.6']
    %15 = vsyncpa [#allocation3], 0
    %16 = vsyncpa [#allocation5], 0
    %17 = vsyncpa [#allocation8], 0
    // Predicated region
    $region2: #{infograph_forward.6} parent=1 // pred_check
      _
    $region3: #{infograph_forward.6} parent=1 // pred_check_branch
      %19 = sbr.rel (0) target = $region5
    $region4: #{infograph_forward.6} parent=1 // pred_region
      _
    $region5: #{infograph_forward.6} parent=1 // pred_fallthru
      _
    // Predicated region
    $region6: #{infograph_forward.6} parent=1 // pred_check
      _
    $region7: #{infograph_forward.6} parent=1 // pred_check_branch
      %21 = sbr.rel (0) target = $region9
    $region8: #{infograph_forward.6} parent=1 // pred_region
      _
    $region9: #{infograph_forward.6} parent=1 // pred_fallthru
      _
    // Predicated region
    $region10: #{infograph_forward.6} parent=1 // pred_check
      _
    $region11: #{infograph_forward.6} parent=1 // pred_check_branch
      %23 = sbr.rel (0) target = $region13
    $region12: #{infograph_forward.6} parent=1 // pred_region
      %25 = vsyncadd [#allocation3], 0
      %s26 = sshll.u32 %s2, 4
      %s27 = int_to_ptr.hbm [resolvable:$true] %s26
      %s28 = sshll.u32 [#allocation2], 4
      %s29 = int_to_ptr.vmem [resolvable:$true] %s28
      %34 = dma.hbm_to_vmem [thread:$0]  %s27, 2048, %s29, [#allocation3], 64, 64, 4
    $region13: #{infograph_forward.6} parent=1 // pred_fallthru
      _
    // Predicated region
    $region14: #{infograph_forward.6} parent=1 // pred_check
      _
    $region15: #{infograph_forward.6} parent=1 // pred_check_branch
      %36 = sbr.rel (0) target = $region17
    $region16: #{infograph_forward.6} parent=1 // pred_region
      _
    $region17: #{infograph_forward.6} parent=1 // pred_fallthru
      _
    // Predicated region
    $region18: #{infograph_forward.6} parent=1 // pred_check
      _
    $region19: #{infograph_forward.6} parent=1 // pred_check_branch
      %38 = sbr.rel (0) target = $region21
    $region20: #{infograph_forward.6} parent=1 // pred_region
      %40 = vsyncadd [#allocation5], 0
      %s41 = sshll.u32 %s4, 4
      %s42 = int_to_ptr.hbm [resolvable:$true] %s41
      %s43 = sshll.u32 [#allocation4], 4
      %s44 = int_to_ptr.vmem [resolvable:$true] %s43
      %49 = dma.hbm_to_vmem [thread:$0]  %s42, 1024, %s44, [#allocation5], 64, 64, 4
    $region21: #{infograph_forward.6} parent=1 // pred_fallthru
      _
    // Predicated region
    $region22: #{infograph_forward.6} parent=1 // pred_check
      _
    $region23: #{infograph_forward.6} parent=1 // pred_check_branch
      %51 = sbr.rel (0) target = $region25
    $region24: #{infograph_forward.6} parent=1 // pred_region
      _
    $region25: #{infograph_forward.6} parent=1 // pred_fallthru
      _
    // Predicated region
    $region26: #{infograph_forward.6} parent=1 // pred_check
      _
    $region27: #{infograph_forward.6} parent=1 // pred_check_branch
      %53 = sbr.rel (0) target = $region29
    $region28: #{infograph_forward.6} parent=1 // pred_region
      %55 = vsyncadd [#allocation5], 0
      %s56 = sshll.u32 %s6, 4
      %s57 = int_to_ptr.hbm [resolvable:$true] %s56
      %s58 = sshll.u32 [#allocation6], 4
      %s59 = int_to_ptr.vmem [resolvable:$true] %s58
      %64 = dma.hbm_to_vmem [thread:$0]  %s57, 1024, %s59, [#allocation5], 64, 64, 4
    $region29: #{infograph_forward.6} parent=1 // pred_fallthru
      _
    // Predicated region
    $region30: #{infograph_forward.6} parent=1 // pred_check
      _
    $region31: #{infograph_forward.6} parent=1 // pred_check_branch
      %66 = sbr.rel (0) target = $region33
    $region32: #{infograph_forward.6} parent=1 // pred_region
      _
    $region33: #{infograph_forward.6} parent=1 // pred_fallthru
      _
    // Predicated region
    $region34: #{infograph_forward.6} parent=1 // pred_check
      _
    $region35: #{infograph_forward.6} parent=1 // pred_check_branch
      %68 = sbr.rel (0) target = $region37
    $region36: #{infograph_forward.6} parent=1 // pred_region
      %70 = vsyncadd [#allocation8], 0
      %s71 = sshll.u32 %s8, 4
      %s72 = int_to_ptr.hbm [resolvable:$true] %s71
      %s73 = sshll.u32 [#allocation7], 4
      %s74 = int_to_ptr.vmem [resolvable:$true] %s73
      %79 = dma.hbm_to_vmem [thread:$0]  %s72, 2048, %s74, [#allocation8], 64, 64, 4
    $region37: #{infograph_forward.6} parent=1 // pred_fallthru
      _
    // Predicated region
    $region38: #{infograph_forward.6} parent=1 // pred_check
      _
    $region39: #{infograph_forward.6} parent=1 // pred_check_branch
      %81 = sbr.rel (0) target = $region41
    $region40: #{infograph_forward.6} parent=1 // pred_region
      _
    $region41: #{infograph_forward.6} parent=1 // pred_fallthru
      _
    // Predicated region
    $region42: #{infograph_forward.6} parent=1 // pred_check
      _
    $region43: #{infograph_forward.6} parent=1 // pred_check_branch
      %83 = sbr.rel (0) target = $region45
    $region44: #{infograph_forward.6} parent=1 // pred_region
      %85 = dma.done [#allocation3], 2048
    $region45: #{infograph_forward.6} parent=1 // pred_fallthru
      _
    // Predicated region
    $region46: #{infograph_forward.6} parent=1 // pred_check
      _
    $region47: #{infograph_forward.6} parent=1 // pred_check_branch
      %87 = sbr.rel (0) target = $region49
    $region48: #{infograph_forward.6} parent=1 // pred_region
      %89 = dma.done [#allocation5], 1024
    $region49: #{infograph_forward.6} parent=1 // pred_fallthru
      _
    // Predicated region
    $region50: #{infograph_forward.6} parent=1 // pred_check
      _
    $region51: #{infograph_forward.6} parent=1 // pred_check_branch
      %91 = sbr.rel (0) target = $region53
    $region52: #{infograph_forward.6} parent=1 // pred_region
      %93 = dma.done [#allocation5], 1024
    $region53: #{infograph_forward.6} parent=1 // pred_fallthru
      _
    // Predicated region
    $region54: #{infograph_forward.6} parent=1 // pred_check
      _
    $region55: #{infograph_forward.6} parent=1 // pred_check_branch
      %95 = sbr.rel (0) target = $region57
    $region56: #{infograph_forward.6} parent=1 // pred_region
      %97 = dma.done [#allocation8], 2048
    $region57: #{infograph_forward.6} parent=1 // pred_fallthru
      _
    %v98 = vld [vmem:[%s0] sm:$0xf]
    %v99 = vld [vmem:[%s0 + $0x4] sm:$0xf]
    %v100 = vld [vmem:[%s0 + $0x8] sm:$0xf]
    %v101 = vld [vmem:[%s0 + $0xc] sm:$0xf]
    %v102 = vld [vmem:[%s0 + $0x10] sm:$0xf]
    %v103 = vld [vmem:[%s0 + $0x14] sm:$0xf]
    %v104 = vld [vmem:[%s0 + $0x18] sm:$0xf]
    %v105 = vld [vmem:[%s0 + $0x1c] sm:$0xf]
    %v106 = vld [vmem:[%s0 + $0x20] sm:$0xf]
    %v107 = vld [vmem:[%s0 + $0x24] sm:$0xf]
    %v108 = vld [vmem:[%s0 + $0x28] sm:$0xf]
    %v109 = vld [vmem:[%s0 + $0x2c] sm:$0xf]
    %v110 = vld [vmem:[%s0 + $0x30] sm:$0xf]
    %v111 = vld [vmem:[%s0 + $0x34] sm:$0xf]
    %v112 = vld [vmem:[%s0 + $0x38] sm:$0xf]
    %v113 = vld [vmem:[%s0 + $0x3c] sm:$0xf]
    %v114 = vld [vmem:[%s1] sm:$0xf]
    %v115 = vld [vmem:[%s1 + $0x4] sm:$0xf]
    %v116 = vld [vmem:[%s1 + $0x8] sm:$0xf]
    %v117 = vld [vmem:[%s1 + $0xc] sm:$0xf]
    %v118 = vld [vmem:[%s1 + $0x10] sm:$0xf]
    %v119 = vld [vmem:[%s1 + $0x14] sm:$0xf]
    %v120 = vld [vmem:[%s1 + $0x18] sm:$0xf]
    %v121 = vld [vmem:[%s1 + $0x1c] sm:$0xf]
    %v122 = vld [vmem:[%s1 + $0x20] sm:$0xf]
    %v123 = vld [vmem:[%s1 + $0x24] sm:$0xf]
    %v124 = vld [vmem:[%s1 + $0x28] sm:$0xf]
    %v125 = vld [vmem:[%s1 + $0x2c] sm:$0xf]
    %v126 = vld [vmem:[%s1 + $0x30] sm:$0xf]
    %v127 = vld [vmem:[%s1 + $0x34] sm:$0xf]
    %v128 = vld [vmem:[%s1 + $0x38] sm:$0xf]
    %v129 = vld [vmem:[%s1 + $0x3c] sm:$0xf]
    %v130 = vld [vmem:[#allocation2] sm:$0xf]
    %v131 = vld [vmem:[#allocation2 + $0x4] sm:$0xf]
    %v132 = vld [vmem:[#allocation2 + $0x8] sm:$0xf]
    %v133 = vld [vmem:[#allocation2 + $0xc] sm:$0xf]
    %v134 = vld [vmem:[#allocation2 + $0x10] sm:$0xf]
    %v135 = vld [vmem:[#allocation2 + $0x14] sm:$0xf]
    %v136 = vld [vmem:[#allocation2 + $0x18] sm:$0xf]
    %v137 = vld [vmem:[#allocation2 + $0x1c] sm:$0xf]
    %v138 = vld [vmem:[#allocation2 + $0x20] sm:$0xf]
    %v139 = vld [vmem:[#allocation2 + $0x24] sm:$0xf]
    %v140 = vld [vmem:[#allocation2 + $0x28] sm:$0xf]
    %v141 = vld [vmem:[#allocation2 + $0x2c] sm:$0xf]
    %v142 = vld [vmem:[#allocation2 + $0x30] sm:$0xf]
    %v143 = vld [vmem:[#allocation2 + $0x34] sm:$0xf]
    %v144 = vld [vmem:[#allocation2 + $0x38] sm:$0xf]
    %v145 = vld [vmem:[#allocation2 + $0x3c] sm:$0xf]
    %v146 = vld [vmem:[#allocation7] sm:$0xf]
    %v147 = vld [vmem:[#allocation7 + $0x4] sm:$0xf]
    %v148 = vld [vmem:[#allocation7 + $0x8] sm:$0xf]
    %v149 = vld [vmem:[#allocation7 + $0xc] sm:$0xf]
    %v150 = vld [vmem:[#allocation7 + $0x10] sm:$0xf]
    %v151 = vld [vmem:[#allocation7 + $0x14] sm:$0xf]
    %v152 = vld [vmem:[#allocation7 + $0x18] sm:$0xf]
    %v153 = vld [vmem:[#allocation7 + $0x1c] sm:$0xf]
    %v154 = vld [vmem:[#allocation7 + $0x20] sm:$0xf]
    %v155 = vld [vmem:[#allocation7 + $0x24] sm:$0xf]
    %v156 = vld [vmem:[#allocation7 + $0x28] sm:$0xf]
    %v157 = vld [vmem:[#allocation7 + $0x2c] sm:$0xf]
    %v158 = vld [vmem:[#allocation7 + $0x30] sm:$0xf]
    %v159 = vld [vmem:[#allocation7 + $0x34] sm:$0xf]
    %v160 = vld [vmem:[#allocation7 + $0x38] sm:$0xf]
    %v161 = vld [vmem:[#allocation7 + $0x3c] sm:$0xf]
    %v162 = vld [vmem:[#allocation2 + $0x40] sm:$0xf]
    %v163 = vld [vmem:[#allocation2 + $0x44] sm:$0xf]
    %v164 = vld [vmem:[#allocation2 + $0x48] sm:$0xf]
    %v165 = vld [vmem:[#allocation2 + $0x4c] sm:$0xf]
    %v166 = vld [vmem:[#allocation2 + $0x50] sm:$0xf]
    %v167 = vld [vmem:[#allocation2 + $0x54] sm:$0xf]
    %v168 = vld [vmem:[#allocation2 + $0x58] sm:$0xf]
    %v169 = vld [vmem:[#allocation2 + $0x5c] sm:$0xf]
    %v170 = vld [vmem:[#allocation2 + $0x60] sm:$0xf]
    %v171 = vld [vmem:[#allocation2 + $0x64] sm:$0xf]
    %v172 = vld [vmem:[#allocation2 + $0x68] sm:$0xf]
    %v173 = vld [vmem:[#allocation2 + $0x6c] sm:$0xf]
    %v174 = vld [vmem:[#allocation2 + $0x70] sm:$0xf]
    %v175 = vld [vmem:[#allocation2 + $0x74] sm:$0xf]
    %v176 = vld [vmem:[#allocation2 + $0x78] sm:$0xf]
    %v177 = vld [vmem:[#allocation2 + $0x7c] sm:$0xf]
    %v194 = vunpack.c.l.b16 %v114
    %v195 = vunpack.c.l.b16 %v115
    %v196 = vunpack.c.l.b16 %v116
    %v197 = vunpack.c.l.b16 %v117
    %v198 = vunpack.c.l.b16 %v118
    %v199 = vunpack.c.l.b16 %v119
    %v200 = vunpack.c.l.b16 %v120
    %v201 = vunpack.c.l.b16 %v121
    %v202 = vunpack.c.l.b16 %v122
    %v203 = vunpack.c.l.b16 %v123
    %v204 = vunpack.c.l.b16 %v124
    %v205 = vunpack.c.l.b16 %v125
    %v206 = vunpack.c.l.b16 %v126
    %v207 = vunpack.c.l.b16 %v127
    %v208 = vunpack.c.l.b16 %v128
    %v209 = vunpack.c.l.b16 %v129
    %v210 = vpack.c.b16 %v195, %v194
    %v211 = vpack.c.b16 %v197, %v196
    %v212 = vpack.c.b16 %v199, %v198
    %v213 = vpack.c.b16 %v201, %v200
    %v214 = vpack.c.b16 %v203, %v202
    %v215 = vpack.c.b16 %v205, %v204
    %v216 = vpack.c.b16 %v207, %v206
    %v217 = vpack.c.b16 %v209, %v208
    %v242 = vunpack.c.l.b16 %v162
    %v243 = vunpack.c.l.b16 %v163
    %v244 = vunpack.c.l.b16 %v164
    %v245 = vunpack.c.l.b16 %v165
    %v246 = vunpack.c.l.b16 %v166
    %v247 = vunpack.c.l.b16 %v167
    %v248 = vunpack.c.l.b16 %v168
    %v249 = vunpack.c.l.b16 %v169
    %v250 = vunpack.c.l.b16 %v170
    %v251 = vunpack.c.l.b16 %v171
    %v252 = vunpack.c.l.b16 %v172
    %v253 = vunpack.c.l.b16 %v173
    %v254 = vunpack.c.l.b16 %v174
    %v255 = vunpack.c.l.b16 %v175
    %v256 = vunpack.c.l.b16 %v176
    %v257 = vunpack.c.l.b16 %v177
    %v258 = vpack.c.b16 %v243, %v242
    %v259 = vpack.c.b16 %v245, %v244
    %v260 = vpack.c.b16 %v247, %v246
    %v261 = vpack.c.b16 %v249, %v248
    %v262 = vpack.c.b16 %v251, %v250
    %v263 = vpack.c.b16 %v253, %v252
    %v264 = vpack.c.b16 %v255, %v254
    %v265 = vpack.c.b16 %v257, %v256
    %274 = vmatpush.bf16.msra.mxu0 %v265
    %275 = vmatpush.bf16.msra.mxu0 %v264
    %276 = vmatpush.bf16.msra.mxu0 %v263
    %277 = vmatpush.bf16.msra.mxu0 %v262
    %278 = vmatpush.bf16.msra.mxu0 %v261
    %279 = vmatpush.bf16.msra.mxu0 %v260
    %280 = vmatpush.bf16.msra.mxu0 %v259
    %281 = vmatpush.bf16.msra.mxu0 %v258
    %282 = vmatmul.bf16.gmra.mxu0 %v210
    %v283 = vpop.f32.mrf.mxu0
    %v284 = vadd.f32 0.0, %v283
    %v285 = vpop.f32.mrf.mxu0
    %v286 = vadd.f32 0.0, %v285
    %287 = vmatmul.bf16.gmra.mxu0 %v211
    %v288 = vpop.f32.mrf.mxu0
    %v289 = vadd.f32 0.0, %v288
    %v290 = vpop.f32.mrf.mxu0
    %v291 = vadd.f32 0.0, %v290
    %292 = vmatmul.bf16.gmra.mxu0 %v212
    %v293 = vpop.f32.mrf.mxu0
    %v294 = vadd.f32 0.0, %v293
    %v295 = vpop.f32.mrf.mxu0
    %v296 = vadd.f32 0.0, %v295
    %297 = vmatmul.bf16.gmra.mxu0 %v213
    %v298 = vpop.f32.mrf.mxu0
    %v299 = vadd.f32 0.0, %v298
    %v300 = vpop.f32.mrf.mxu0
    %v301 = vadd.f32 0.0, %v300
    %302 = vmatmul.bf16.gmra.mxu0 %v214
    %v303 = vpop.f32.mrf.mxu0
    %v304 = vadd.f32 0.0, %v303
    %v305 = vpop.f32.mrf.mxu0
    %v306 = vadd.f32 0.0, %v305
    %307 = vmatmul.bf16.gmra.mxu0 %v215
    %v308 = vpop.f32.mrf.mxu0
    %v309 = vadd.f32 0.0, %v308
    %v310 = vpop.f32.mrf.mxu0
    %v311 = vadd.f32 0.0, %v310
    %312 = vmatmul.bf16.gmra.mxu0 %v216
    %v313 = vpop.f32.mrf.mxu0
    %v314 = vadd.f32 0.0, %v313
    %v315 = vpop.f32.mrf.mxu0
    %v316 = vadd.f32 0.0, %v315
    %317 = vmatmul.bf16.gmra.mxu0 %v217
    %v318 = vpop.f32.mrf.mxu0
    %v319 = vadd.f32 0.0, %v318
    %v320 = vpop.f32.mrf.mxu0
    %v321 = vadd.f32 0.0, %v320
    %322 = vdwg.mxu0
    %v323 = vld [vmem:[#allocation7 + $0x40] sm:$0xf]
    %v324 = vld [vmem:[#allocation7 + $0x44] sm:$0xf]
    %v325 = vld [vmem:[#allocation7 + $0x48] sm:$0xf]
    %v326 = vld [vmem:[#allocation7 + $0x4c] sm:$0xf]
    %v327 = vld [vmem:[#allocation7 + $0x50] sm:$0xf]
    %v328 = vld [vmem:[#allocation7 + $0x54] sm:$0xf]
    %v329 = vld [vmem:[#allocation7 + $0x58] sm:$0xf]
    %v330 = vld [vmem:[#allocation7 + $0x5c] sm:$0xf]
    %v331 = vld [vmem:[#allocation7 + $0x60] sm:$0xf]
    %v332 = vld [vmem:[#allocation7 + $0x64] sm:$0xf]
    %v333 = vld [vmem:[#allocation7 + $0x68] sm:$0xf]
    %v334 = vld [vmem:[#allocation7 + $0x6c] sm:$0xf]
    %v335 = vld [vmem:[#allocation7 + $0x70] sm:$0xf]
    %v336 = vld [vmem:[#allocation7 + $0x74] sm:$0xf]
    %v337 = vld [vmem:[#allocation7 + $0x78] sm:$0xf]
    %v338 = vld [vmem:[#allocation7 + $0x7c] sm:$0xf]
    %v355 = vunpack.c.l.b16 %v323
    %v356 = vunpack.c.l.b16 %v324
    %v357 = vunpack.c.l.b16 %v325
    %v358 = vunpack.c.l.b16 %v326
    %v359 = vunpack.c.l.b16 %v327
    %v360 = vunpack.c.l.b16 %v328
    %v361 = vunpack.c.l.b16 %v329
    %v362 = vunpack.c.l.b16 %v330
    %v363 = vunpack.c.l.b16 %v331
    %v364 = vunpack.c.l.b16 %v332
    %v365 = vunpack.c.l.b16 %v333
    %v366 = vunpack.c.l.b16 %v334
    %v367 = vunpack.c.l.b16 %v335
    %v368 = vunpack.c.l.b16 %v336
    %v369 = vunpack.c.l.b16 %v337
    %v370 = vunpack.c.l.b16 %v338
    %v371 = vpack.c.b16 %v356, %v355
    %v372 = vpack.c.b16 %v358, %v357
    %v373 = vpack.c.b16 %v360, %v359
    %v374 = vpack.c.b16 %v362, %v361
    %v375 = vpack.c.b16 %v364, %v363
    %v376 = vpack.c.b16 %v366, %v365
    %v377 = vpack.c.b16 %v368, %v367
    %v378 = vpack.c.b16 %v370, %v369
    %387 = vmatpush.bf16.msra.mxu0 %v378
    %388 = vmatpush.bf16.msra.mxu0 %v377
    %389 = vmatpush.bf16.msra.mxu0 %v376
    %390 = vmatpush.bf16.msra.mxu0 %v375
    %391 = vmatpush.bf16.msra.mxu0 %v374
    %392 = vmatpush.bf16.msra.mxu0 %v373
    %393 = vmatpush.bf16.msra.mxu0 %v372
    %394 = vmatpush.bf16.msra.mxu0 %v371
    %395 = vmatmul.bf16.gmra.mxu0 %v210
    %v396 = vpop.f32.mrf.mxu0
    %v397 = vadd.f32 0.0, %v396
    %v398 = vpop.f32.mrf.mxu0
    %v399 = vadd.f32 0.0, %v398
    %400 = vmatmul.bf16.gmra.mxu0 %v211
    %v401 = vpop.f32.mrf.mxu0
    %v402 = vadd.f32 0.0, %v401
    %v403 = vpop.f32.mrf.mxu0
    %v404 = vadd.f32 0.0, %v403
    %405 = vmatmul.bf16.gmra.mxu0 %v212
    %v406 = vpop.f32.mrf.mxu0
    %v407 = vadd.f32 0.0, %v406
    %v408 = vpop.f32.mrf.mxu0
    %v409 = vadd.f32 0.0, %v408
    %410 = vmatmul.bf16.gmra.mxu0 %v213
    %v411 = vpop.f32.mrf.mxu0
    %v412 = vadd.f32 0.0, %v411
    %v413 = vpop.f32.mrf.mxu0
    %v414 = vadd.f32 0.0, %v413
    %415 = vmatmul.bf16.gmra.mxu0 %v214
    %v416 = vpop.f32.mrf.mxu0
    %v417 = vadd.f32 0.0, %v416
    %v418 = vpop.f32.mrf.mxu0
    %v419 = vadd.f32 0.0, %v418
    %420 = vmatmul.bf16.gmra.mxu0 %v215
    %v421 = vpop.f32.mrf.mxu0
    %v422 = vadd.f32 0.0, %v421
    %v423 = vpop.f32.mrf.mxu0
    %v424 = vadd.f32 0.0, %v423
    %425 = vmatmul.bf16.gmra.mxu0 %v216
    %v426 = vpop.f32.mrf.mxu0
    %v427 = vadd.f32 0.0, %v426
    %v428 = vpop.f32.mrf.mxu0
    %v429 = vadd.f32 0.0, %v428
    %430 = vmatmul.bf16.gmra.mxu0 %v217
    %v431 = vpop.f32.mrf.mxu0
    %v432 = vadd.f32 0.0, %v431
    %v433 = vpop.f32.mrf.mxu0
    %v434 = vadd.f32 0.0, %v433
    %435 = vdwg.mxu0
    %v452 = vunpack.c.l.b16 %v98
    %v453 = vunpack.c.l.b16 %v99
    %v454 = vunpack.c.l.b16 %v100
    %v455 = vunpack.c.l.b16 %v101
    %v456 = vunpack.c.l.b16 %v102
    %v457 = vunpack.c.l.b16 %v103
    %v458 = vunpack.c.l.b16 %v104
    %v459 = vunpack.c.l.b16 %v105
    %v460 = vunpack.c.l.b16 %v106
    %v461 = vunpack.c.l.b16 %v107
    %v462 = vunpack.c.l.b16 %v108
    %v463 = vunpack.c.l.b16 %v109
    %v464 = vunpack.c.l.b16 %v110
    %v465 = vunpack.c.l.b16 %v111
    %v466 = vunpack.c.l.b16 %v112
    %v467 = vunpack.c.l.b16 %v113
    %v468 = vpack.c.b16 %v453, %v452
    %v469 = vpack.c.b16 %v455, %v454
    %v470 = vpack.c.b16 %v457, %v456
    %v471 = vpack.c.b16 %v459, %v458
    %v472 = vpack.c.b16 %v461, %v460
    %v473 = vpack.c.b16 %v463, %v462
    %v474 = vpack.c.b16 %v465, %v464
    %v475 = vpack.c.b16 %v467, %v466
    %v500 = vunpack.c.l.b16 %v130
    %v501 = vunpack.c.l.b16 %v131
    %v502 = vunpack.c.l.b16 %v132
    %v503 = vunpack.c.l.b16 %v133
    %v504 = vunpack.c.l.b16 %v134
    %v505 = vunpack.c.l.b16 %v135
    %v506 = vunpack.c.l.b16 %v136
    %v507 = vunpack.c.l.b16 %v137
    %v508 = vunpack.c.l.b16 %v138
    %v509 = vunpack.c.l.b16 %v139
    %v510 = vunpack.c.l.b16 %v140
    %v511 = vunpack.c.l.b16 %v141
    %v512 = vunpack.c.l.b16 %v142
    %v513 = vunpack.c.l.b16 %v143
    %v514 = vunpack.c.l.b16 %v144
    %v515 = vunpack.c.l.b16 %v145
    %v516 = vpack.c.b16 %v501, %v500
    %v517 = vpack.c.b16 %v503, %v502
    %v518 = vpack.c.b16 %v505, %v504
    %v519 = vpack.c.b16 %v507, %v506
    %v520 = vpack.c.b16 %v509, %v508
    %v521 = vpack.c.b16 %v511, %v510
    %v522 = vpack.c.b16 %v513, %v512
    %v523 = vpack.c.b16 %v515, %v514
    %532 = vmatpush.bf16.msra.mxu0 %v523
    %533 = vmatpush.bf16.msra.mxu0 %v522
    %534 = vmatpush.bf16.msra.mxu0 %v521
    %535 = vmatpush.bf16.msra.mxu0 %v520
    %536 = vmatpush.bf16.msra.mxu0 %v519
    %537 = vmatpush.bf16.msra.mxu0 %v518
    %538 = vmatpush.bf16.msra.mxu0 %v517
    %539 = vmatpush.bf16.msra.mxu0 %v516
    %540 = vmatmul.bf16.gmra.mxu0 %v468
    %v541 = vpop.f32.mrf.mxu0
    %v542 = vadd.f32 %v284, %v541
    %v543 = vpop.f32.mrf.mxu0
    %v544 = vadd.f32 %v286, %v543
    %545 = vmatmul.bf16.gmra.mxu0 %v469
    %v546 = vpop.f32.mrf.mxu0
    %v547 = vadd.f32 %v289, %v546
    %v548 = vpop.f32.mrf.mxu0
    %v549 = vadd.f32 %v291, %v548
    %550 = vmatmul.bf16.gmra.mxu0 %v470
    %v551 = vpop.f32.mrf.mxu0
    %v552 = vadd.f32 %v294, %v551
    %v553 = vpop.f32.mrf.mxu0
    %v554 = vadd.f32 %v296, %v553
    %555 = vmatmul.bf16.gmra.mxu0 %v471
    %v556 = vpop.f32.mrf.mxu0
    %v557 = vadd.f32 %v299, %v556
    %v558 = vpop.f32.mrf.mxu0
    %v559 = vadd.f32 %v301, %v558
    %560 = vmatmul.bf16.gmra.mxu0 %v472
    %v561 = vpop.f32.mrf.mxu0
    %v562 = vadd.f32 %v304, %v561
    %v563 = vpop.f32.mrf.mxu0
    %v564 = vadd.f32 %v306, %v563
    %565 = vmatmul.bf16.gmra.mxu0 %v473
    %v566 = vpop.f32.mrf.mxu0
    %v567 = vadd.f32 %v309, %v566
    %v568 = vpop.f32.mrf.mxu0
    %v569 = vadd.f32 %v311, %v568
    %570 = vmatmul.bf16.gmra.mxu0 %v474
    %v571 = vpop.f32.mrf.mxu0
    %v572 = vadd.f32 %v314, %v571
    %v573 = vpop.f32.mrf.mxu0
    %v574 = vadd.f32 %v316, %v573
    %575 = vmatmul.bf16.gmra.mxu0 %v475
    %v576 = vpop.f32.mrf.mxu0
    %v577 = vadd.f32 %v319, %v576
    %v578 = vpop.f32.mrf.mxu0
    %v579 = vadd.f32 %v321, %v578
    %580 = vdwg.mxu0
    %v597 = vunpack.c.l.b16 %v146
    %v598 = vunpack.c.l.b16 %v147
    %v599 = vunpack.c.l.b16 %v148
    %v600 = vunpack.c.l.b16 %v149
    %v601 = vunpack.c.l.b16 %v150
    %v602 = vunpack.c.l.b16 %v151
    %v603 = vunpack.c.l.b16 %v152
    %v604 = vunpack.c.l.b16 %v153
    %v605 = vunpack.c.l.b16 %v154
    %v606 = vunpack.c.l.b16 %v155
    %v607 = vunpack.c.l.b16 %v156
    %v608 = vunpack.c.l.b16 %v157
    %v609 = vunpack.c.l.b16 %v158
    %v610 = vunpack.c.l.b16 %v159
    %v611 = vunpack.c.l.b16 %v160
    %v612 = vunpack.c.l.b16 %v161
    %v613 = vpack.c.b16 %v598, %v597
    %v614 = vpack.c.b16 %v600, %v599
    %v615 = vpack.c.b16 %v602, %v601
    %v616 = vpack.c.b16 %v604, %v603
    %v617 = vpack.c.b16 %v606, %v605
    %v618 = vpack.c.b16 %v608, %v607
    %v619 = vpack.c.b16 %v610, %v609
    %v620 = vpack.c.b16 %v612, %v611
    %629 = vmatpush.bf16.msra.mxu0 %v620
    %630 = vmatpush.bf16.msra.mxu0 %v619
    %631 = vmatpush.bf16.msra.mxu0 %v618
    %632 = vmatpush.bf16.msra.mxu0 %v617
    %633 = vmatpush.bf16.msra.mxu0 %v616
    %634 = vmatpush.bf16.msra.mxu0 %v615
    %635 = vmatpush.bf16.msra.mxu0 %v614
    %636 = vmatpush.bf16.msra.mxu0 %v613
    %637 = vmatmul.bf16.gmra.mxu0 %v468
    %v638 = vpop.f32.mrf.mxu0
    %v639 = vadd.f32 %v397, %v638
    %v640 = vpop.f32.mrf.mxu0
    %v641 = vadd.f32 %v399, %v640
    %642 = vmatmul.bf16.gmra.mxu0 %v469
    %v643 = vpop.f32.mrf.mxu0
    %v644 = vadd.f32 %v402, %v643
    %v645 = vpop.f32.mrf.mxu0
    %v646 = vadd.f32 %v404, %v645
    %647 = vmatmul.bf16.gmra.mxu0 %v470
    %v648 = vpop.f32.mrf.mxu0
    %v649 = vadd.f32 %v407, %v648
    %v650 = vpop.f32.mrf.mxu0
    %v651 = vadd.f32 %v409, %v650
    %652 = vmatmul.bf16.gmra.mxu0 %v471
    %v653 = vpop.f32.mrf.mxu0
    %v654 = vadd.f32 %v412, %v653
    %v655 = vpop.f32.mrf.mxu0
    %v656 = vadd.f32 %v414, %v655
    %657 = vmatmul.bf16.gmra.mxu0 %v472
    %v658 = vpop.f32.mrf.mxu0
    %v659 = vadd.f32 %v417, %v658
    %v660 = vpop.f32.mrf.mxu0
    %v661 = vadd.f32 %v419, %v660
    %662 = vmatmul.bf16.gmra.mxu0 %v473
    %v663 = vpop.f32.mrf.mxu0
    %v664 = vadd.f32 %v422, %v663
    %v665 = vpop.f32.mrf.mxu0
    %v666 = vadd.f32 %v424, %v665
    %667 = vmatmul.bf16.gmra.mxu0 %v474
    %v668 = vpop.f32.mrf.mxu0
    %v669 = vadd.f32 %v427, %v668
    %v670 = vpop.f32.mrf.mxu0
    %v671 = vadd.f32 %v429, %v670
    %672 = vmatmul.bf16.gmra.mxu0 %v475
    %v673 = vpop.f32.mrf.mxu0
    %v674 = vadd.f32 %v432, %v673
    %v675 = vpop.f32.mrf.mxu0
    %v676 = vadd.f32 %v434, %v675
    %677 = vdwg.mxu0
    %v678 = vld [vmem:[%s3] sm:$0x1]
    %v680 = vperm.slane %v678, 0
    %v682 = vadd.f32 %v542, %v680
    %v683 = vadd.f32 %v544, %v680
    %v684 = vadd.f32 %v547, %v680
    %v685 = vadd.f32 %v549, %v680
    %v686 = vadd.f32 %v552, %v680
    %v687 = vadd.f32 %v554, %v680
    %v688 = vadd.f32 %v557, %v680
    %v689 = vadd.f32 %v559, %v680
    %v690 = vadd.f32 %v562, %v680
    %v691 = vadd.f32 %v564, %v680
    %v692 = vadd.f32 %v567, %v680
    %v693 = vadd.f32 %v569, %v680
    %v694 = vadd.f32 %v572, %v680
    %v695 = vadd.f32 %v574, %v680
    %v696 = vadd.f32 %v577, %v680
    %v697 = vadd.f32 %v579, %v680
    %v698 = vmax.f32 %v682, 0.0
    %v699 = vmax.f32 %v683, 0.0
    %v700 = vmax.f32 %v684, 0.0
    %v701 = vmax.f32 %v685, 0.0
    %v702 = vmax.f32 %v686, 0.0
    %v703 = vmax.f32 %v687, 0.0
    %v704 = vmax.f32 %v688, 0.0
    %v705 = vmax.f32 %v689, 0.0
    %v706 = vmax.f32 %v690, 0.0
    %v707 = vmax.f32 %v691, 0.0
    %v708 = vmax.f32 %v692, 0.0
    %v709 = vmax.f32 %v693, 0.0
    %v710 = vmax.f32 %v694, 0.0
    %v711 = vmax.f32 %v695, 0.0
    %v712 = vmax.f32 %v696, 0.0
    %v713 = vmax.f32 %v697, 0.0
    %v714 = vpack.c.bf16 %v699, %v698
    %v715 = vpack.c.bf16 %v701, %v700
    %v716 = vpack.c.bf16 %v703, %v702
    %v717 = vpack.c.bf16 %v705, %v704
    %v718 = vpack.c.bf16 %v707, %v706
    %v719 = vpack.c.bf16 %v709, %v708
    %v720 = vpack.c.bf16 %v711, %v710
    %v721 = vpack.c.bf16 %v713, %v712
    %v722 = vld [vmem:[#allocation4] sm:$0xf]
    %v723 = vld [vmem:[#allocation4 + $0x4] sm:$0xf]
    %v724 = vld [vmem:[#allocation4 + $0x8] sm:$0xf]
    %v725 = vld [vmem:[#allocation4 + $0xc] sm:$0xf]
    %v726 = vld [vmem:[#allocation4 + $0x10] sm:$0xf]
    %v727 = vld [vmem:[#allocation4 + $0x14] sm:$0xf]
    %v728 = vld [vmem:[#allocation4 + $0x18] sm:$0xf]
    %v729 = vld [vmem:[#allocation4 + $0x1c] sm:$0xf]
    %v730 = vld [vmem:[#allocation4 + $0x20] sm:$0xf]
    %v731 = vld [vmem:[#allocation4 + $0x24] sm:$0xf]
    %v732 = vld [vmem:[#allocation4 + $0x28] sm:$0xf]
    %v733 = vld [vmem:[#allocation4 + $0x2c] sm:$0xf]
    %v734 = vld [vmem:[#allocation4 + $0x30] sm:$0xf]
    %v735 = vld [vmem:[#allocation4 + $0x34] sm:$0xf]
    %v736 = vld [vmem:[#allocation4 + $0x38] sm:$0xf]
    %v737 = vld [vmem:[#allocation4 + $0x3c] sm:$0xf]
    %v738 = vld [vmem:[%s5] sm:$0x1]
    %v740 = vperm.slane %v738, 0
    %v758 = vunpack.c.l.b16 %v722
    %v759 = vunpack.c.l.b16 %v723
    %v760 = vunpack.c.l.b16 %v724
    %v761 = vunpack.c.l.b16 %v725
    %v762 = vunpack.c.l.b16 %v726
    %v763 = vunpack.c.l.b16 %v727
    %v764 = vunpack.c.l.b16 %v728
    %v765 = vunpack.c.l.b16 %v729
    %v766 = vunpack.c.l.b16 %v730
    %v767 = vunpack.c.l.b16 %v731
    %v768 = vunpack.c.l.b16 %v732
    %v769 = vunpack.c.l.b16 %v733
    %v770 = vunpack.c.l.b16 %v734
    %v771 = vunpack.c.l.b16 %v735
    %v772 = vunpack.c.l.b16 %v736
    %v773 = vunpack.c.l.b16 %v737
    %v774 = vpack.c.b16 %v759, %v758
    %v775 = vpack.c.b16 %v761, %v760
    %v776 = vpack.c.b16 %v763, %v762
    %v777 = vpack.c.b16 %v765, %v764
    %v778 = vpack.c.b16 %v767, %v766
    %v779 = vpack.c.b16 %v769, %v768
    %v780 = vpack.c.b16 %v771, %v770
    %v781 = vpack.c.b16 %v773, %v772
    %790 = vmatpush.bf16.msra.mxu0 %v781
    %791 = vmatpush.bf16.msra.mxu0 %v780
    %792 = vmatpush.bf16.msra.mxu0 %v779
    %793 = vmatpush.bf16.msra.mxu0 %v778
    %794 = vmatpush.bf16.msra.mxu0 %v777
    %795 = vmatpush.bf16.msra.mxu0 %v776
    %796 = vmatpush.bf16.msra.mxu0 %v775
    %797 = vmatpush.bf16.msra.mxu0 %v774
    %798 = vmatmul.bf16.gmra.mxu0 %v714
    %v799 = vpop.f32.mrf.mxu0
    %v800 = vadd.f32 %v740, %v799
    %v801 = vpop.f32.mrf.mxu0
    %v802 = vadd.f32 %v740, %v801
    %803 = vmatmul.bf16.gmra.mxu0 %v715
    %v804 = vpop.f32.mrf.mxu0
    %v805 = vadd.f32 %v740, %v804
    %v806 = vpop.f32.mrf.mxu0
    %v807 = vadd.f32 %v740, %v806
    %808 = vmatmul.bf16.gmra.mxu0 %v716
    %v809 = vpop.f32.mrf.mxu0
    %v810 = vadd.f32 %v740, %v809
    %v811 = vpop.f32.mrf.mxu0
    %v812 = vadd.f32 %v740, %v811
    %813 = vmatmul.bf16.gmra.mxu0 %v717
    %v814 = vpop.f32.mrf.mxu0
    %v815 = vadd.f32 %v740, %v814
    %v816 = vpop.f32.mrf.mxu0
    %v817 = vadd.f32 %v740, %v816
    %818 = vmatmul.bf16.gmra.mxu0 %v718
    %v819 = vpop.f32.mrf.mxu0
    %v820 = vadd.f32 %v740, %v819
    %v821 = vpop.f32.mrf.mxu0
    %v822 = vadd.f32 %v740, %v821
    %823 = vmatmul.bf16.gmra.mxu0 %v719
    %v824 = vpop.f32.mrf.mxu0
    %v825 = vadd.f32 %v740, %v824
    %v826 = vpop.f32.mrf.mxu0
    %v827 = vadd.f32 %v740, %v826
    %828 = vmatmul.bf16.gmra.mxu0 %v720
    %v829 = vpop.f32.mrf.mxu0
    %v830 = vadd.f32 %v740, %v829
    %v831 = vpop.f32.mrf.mxu0
    %v832 = vadd.f32 %v740, %v831
    %833 = vmatmul.bf16.gmra.mxu0 %v721
    %v834 = vpop.f32.mrf.mxu0
    %v835 = vadd.f32 %v740, %v834
    %v836 = vpop.f32.mrf.mxu0
    %v837 = vadd.f32 %v740, %v836
    %838 = vdwg.mxu0
    %v839 = vmax.f32 %v800, 0.0
    %v840 = vmax.f32 %v802, 0.0
    %v841 = vmax.f32 %v805, 0.0
    %v842 = vmax.f32 %v807, 0.0
    %v843 = vmax.f32 %v810, 0.0
    %v844 = vmax.f32 %v812, 0.0
    %v845 = vmax.f32 %v815, 0.0
    %v846 = vmax.f32 %v817, 0.0
    %v847 = vmax.f32 %v820, 0.0
    %v848 = vmax.f32 %v822, 0.0
    %v849 = vmax.f32 %v825, 0.0
    %v850 = vmax.f32 %v827, 0.0
    %v851 = vmax.f32 %v830, 0.0
    %v852 = vmax.f32 %v832, 0.0
    %v853 = vmax.f32 %v835, 0.0
    %v854 = vmax.f32 %v837, 0.0
    %v855 = vpack.c.bf16 %v840, %v839
    %v856 = vpack.c.bf16 %v842, %v841
    %v857 = vpack.c.bf16 %v844, %v843
    %v858 = vpack.c.bf16 %v846, %v845
    %v859 = vpack.c.bf16 %v848, %v847
    %v860 = vpack.c.bf16 %v850, %v849
    %v861 = vpack.c.bf16 %v852, %v851
    %v862 = vpack.c.bf16 %v854, %v853
    %v863 = vld [vmem:[#allocation6] sm:$0xf]
    %v864 = vld [vmem:[#allocation6 + $0x4] sm:$0xf]
    %v865 = vld [vmem:[#allocation6 + $0x8] sm:$0xf]
    %v866 = vld [vmem:[#allocation6 + $0xc] sm:$0xf]
    %v867 = vld [vmem:[#allocation6 + $0x10] sm:$0xf]
    %v868 = vld [vmem:[#allocation6 + $0x14] sm:$0xf]
    %v869 = vld [vmem:[#allocation6 + $0x18] sm:$0xf]
    %v870 = vld [vmem:[#allocation6 + $0x1c] sm:$0xf]
    %v871 = vld [vmem:[#allocation6 + $0x20] sm:$0xf]
    %v872 = vld [vmem:[#allocation6 + $0x24] sm:$0xf]
    %v873 = vld [vmem:[#allocation6 + $0x28] sm:$0xf]
    %v874 = vld [vmem:[#allocation6 + $0x2c] sm:$0xf]
    %v875 = vld [vmem:[#allocation6 + $0x30] sm:$0xf]
    %v876 = vld [vmem:[#allocation6 + $0x34] sm:$0xf]
    %v877 = vld [vmem:[#allocation6 + $0x38] sm:$0xf]
    %v878 = vld [vmem:[#allocation6 + $0x3c] sm:$0xf]
    %v879 = vld [vmem:[%s7] sm:$0x1]
    %v881 = vperm.slane %v879, 0
    %v899 = vunpack.c.l.b16 %v863
    %v900 = vunpack.c.l.b16 %v864
    %v901 = vunpack.c.l.b16 %v865
    %v902 = vunpack.c.l.b16 %v866
    %v903 = vunpack.c.l.b16 %v867
    %v904 = vunpack.c.l.b16 %v868
    %v905 = vunpack.c.l.b16 %v869
    %v906 = vunpack.c.l.b16 %v870
    %v907 = vunpack.c.l.b16 %v871
    %v908 = vunpack.c.l.b16 %v872
    %v909 = vunpack.c.l.b16 %v873
    %v910 = vunpack.c.l.b16 %v874
    %v911 = vunpack.c.l.b16 %v875
    %v912 = vunpack.c.l.b16 %v876
    %v913 = vunpack.c.l.b16 %v877
    %v914 = vunpack.c.l.b16 %v878
    %v915 = vpack.c.b16 %v900, %v899
    %v916 = vpack.c.b16 %v902, %v901
    %v917 = vpack.c.b16 %v904, %v903
    %v918 = vpack.c.b16 %v906, %v905
    %v919 = vpack.c.b16 %v908, %v907
    %v920 = vpack.c.b16 %v910, %v909
    %v921 = vpack.c.b16 %v912, %v911
    %v922 = vpack.c.b16 %v914, %v913
    %931 = vmatpush.bf16.msra.mxu0 %v922
    %932 = vmatpush.bf16.msra.mxu0 %v921
    %933 = vmatpush.bf16.msra.mxu0 %v920
    %934 = vmatpush.bf16.msra.mxu0 %v919
    %935 = vmatpush.bf16.msra.mxu0 %v918
    %936 = vmatpush.bf16.msra.mxu0 %v917
    %937 = vmatpush.bf16.msra.mxu0 %v916
    %938 = vmatpush.bf16.msra.mxu0 %v915
    %939 = vmatmul.bf16.gmra.mxu0 %v855
    %v940 = vpop.f32.mrf.mxu0
    %v941 = vadd.f32 %v881, %v940
    %v942 = vpop.f32.mrf.mxu0
    %v943 = vadd.f32 %v881, %v942
    %944 = vmatmul.bf16.gmra.mxu0 %v856
    %v945 = vpop.f32.mrf.mxu0
    %v946 = vadd.f32 %v881, %v945
    %v947 = vpop.f32.mrf.mxu0
    %v948 = vadd.f32 %v881, %v947
    %949 = vmatmul.bf16.gmra.mxu0 %v857
    %v950 = vpop.f32.mrf.mxu0
    %v951 = vadd.f32 %v881, %v950
    %v952 = vpop.f32.mrf.mxu0
    %v953 = vadd.f32 %v881, %v952
    %954 = vmatmul.bf16.gmra.mxu0 %v858
    %v955 = vpop.f32.mrf.mxu0
    %v956 = vadd.f32 %v881, %v955
    %v957 = vpop.f32.mrf.mxu0
    %v958 = vadd.f32 %v881, %v957
    %959 = vmatmul.bf16.gmra.mxu0 %v859
    %v960 = vpop.f32.mrf.mxu0
    %v961 = vadd.f32 %v881, %v960
    %v962 = vpop.f32.mrf.mxu0
    %v963 = vadd.f32 %v881, %v962
    %964 = vmatmul.bf16.gmra.mxu0 %v860
    %v965 = vpop.f32.mrf.mxu0
    %v966 = vadd.f32 %v881, %v965
    %v967 = vpop.f32.mrf.mxu0
    %v968 = vadd.f32 %v881, %v967
    %969 = vmatmul.bf16.gmra.mxu0 %v861
    %v970 = vpop.f32.mrf.mxu0
    %v971 = vadd.f32 %v881, %v970
    %v972 = vpop.f32.mrf.mxu0
    %v973 = vadd.f32 %v881, %v972
    %974 = vmatmul.bf16.gmra.mxu0 %v862
    %v975 = vpop.f32.mrf.mxu0
    %v976 = vadd.f32 %v881, %v975
    %v977 = vpop.f32.mrf.mxu0
    %v978 = vadd.f32 %v881, %v977
    %979 = vdwg.mxu0
    %v980 = vmax.f32 %v941, 0.0
    %v981 = vmax.f32 %v943, 0.0
    %v982 = vmax.f32 %v946, 0.0
    %v983 = vmax.f32 %v948, 0.0
    %v984 = vmax.f32 %v951, 0.0
    %v985 = vmax.f32 %v953, 0.0
    %v986 = vmax.f32 %v956, 0.0
    %v987 = vmax.f32 %v958, 0.0
    %v988 = vmax.f32 %v961, 0.0
    %v989 = vmax.f32 %v963, 0.0
    %v990 = vmax.f32 %v966, 0.0
    %v991 = vmax.f32 %v968, 0.0
    %v992 = vmax.f32 %v971, 0.0
    %v993 = vmax.f32 %v973, 0.0
    %v994 = vmax.f32 %v976, 0.0
    %v995 = vmax.f32 %v978, 0.0
    %v996 = vadd.f32 %v980, %v639
    %v997 = vadd.f32 %v981, %v641
    %v998 = vadd.f32 %v982, %v644
    %v999 = vadd.f32 %v983, %v646
    %v1000 = vadd.f32 %v984, %v649
    %v1001 = vadd.f32 %v985, %v651
    %v1002 = vadd.f32 %v986, %v654
    %v1003 = vadd.f32 %v987, %v656
    %v1004 = vadd.f32 %v988, %v659
    %v1005 = vadd.f32 %v989, %v661
    %v1006 = vadd.f32 %v990, %v664
    %v1007 = vadd.f32 %v991, %v666
    %v1008 = vadd.f32 %v992, %v669
    %v1009 = vadd.f32 %v993, %v671
    %v1010 = vadd.f32 %v994, %v674
    %v1011 = vadd.f32 %v995, %v676
    %v1012 = vld [vmem:[%s9] sm:$0x1]
    %v1014 = vperm.slane %v1012, 0
    %v1016 = vadd.f32 %v996, %v1014
    %v1017 = vadd.f32 %v997, %v1014
    %v1018 = vadd.f32 %v998, %v1014
    %v1019 = vadd.f32 %v999, %v1014
    %v1020 = vadd.f32 %v1000, %v1014
    %v1021 = vadd.f32 %v1001, %v1014
    %v1022 = vadd.f32 %v1002, %v1014
    %v1023 = vadd.f32 %v1003, %v1014
    %v1024 = vadd.f32 %v1004, %v1014
    %v1025 = vadd.f32 %v1005, %v1014
    %v1026 = vadd.f32 %v1006, %v1014
    %v1027 = vadd.f32 %v1007, %v1014
    %v1028 = vadd.f32 %v1008, %v1014
    %v1029 = vadd.f32 %v1009, %v1014
    %v1030 = vadd.f32 %v1010, %v1014
    %v1031 = vadd.f32 %v1011, %v1014
    %1032 = vst [vmem:[%s10] sm:$0xff] %v1016
    %1033 = vst [vmem:[%s10 + $0x8] sm:$0xff] %v1017
    %1034 = vst [vmem:[%s10 + $0x10] sm:$0xff] %v1018
    %1035 = vst [vmem:[%s10 + $0x18] sm:$0xff] %v1019
    %1036 = vst [vmem:[%s10 + $0x20] sm:$0xff] %v1020
    %1037 = vst [vmem:[%s10 + $0x28] sm:$0xff] %v1021
    %1038 = vst [vmem:[%s10 + $0x30] sm:$0xff] %v1022
    %1039 = vst [vmem:[%s10 + $0x38] sm:$0xff] %v1023
    %1040 = vst [vmem:[%s10 + $0x40] sm:$0xff] %v1024
    %1041 = vst [vmem:[%s10 + $0x48] sm:$0xff] %v1025
    %1042 = vst [vmem:[%s10 + $0x50] sm:$0xff] %v1026
    %1043 = vst [vmem:[%s10 + $0x58] sm:$0xff] %v1027
    %1044 = vst [vmem:[%s10 + $0x60] sm:$0xff] %v1028
    %1045 = vst [vmem:[%s10 + $0x68] sm:$0xff] %v1029
    %1046 = vst [vmem:[%s10 + $0x70] sm:$0xff] %v1030
    %1047 = vst [vmem:[%s10 + $0x78] sm:$0xff] %v1031
    // Predicated region
    $region58: #{infograph_forward.6} parent=1 // pred_check
      _
    $region59: #{infograph_forward.6} parent=1 // pred_check_branch
      %1049 = sbr.rel (0) target = $region61
    $region60: #{infograph_forward.6} parent=1 // pred_region
      _
    $region61: #{infograph_forward.6} parent=1 // pred_fallthru
      _
    // Predicated region
    $region62: #{infograph_forward.6} parent=1 // pred_check
      _
    $region63: #{infograph_forward.6} parent=1 // pred_check_branch
      %1051 = sbr.rel (0) target = $region65
    $region64: #{infograph_forward.6} parent=1 // pred_region
      _
    $region65: #{infograph_forward.6} parent=1 // pred_fallthru
      _
    %1052 = vsyncpa [#allocation3], 1
    %1053 = vsyncpa [#allocation5], 1
    %1054 = vsyncpa [#allocation8], 1

</llo_original>
